<compile_context>
chip_gen: v6e
topology: v6e:2x2x1
jax: 0.10.0
libtpu: 0.0.40
codegen_flags: <defaults>
</compile_context>

<pallas_src>
import jax
import jax.numpy as jnp
from jax.experimental import pallas as pl
from jax.experimental.pallas import tpu as pltpu


def _discriminator_kernel(x_ref, w1_ref, b1_ref, w2_ref, b2_ref,
                          w3_ref, b3_ref, out_ref, acc_ref):
    """One (batch-tile, K-tile) grid step.

    x_ref:  (tile_b, tile_k) f32   activation slice (cast to bf16 in-kernel)
    w1_ref: (tile_k, 512)    bf16
    b1_ref: (1, 512) f32   w2_ref: (512, 256) bf16   b2_ref: (1, 256) f32
    w3_ref: (1, 256) f32 (final layer as a row)      b3_ref: (1, 1) f32
    out_ref: (1, tile_b) f32   lane-dense validity for this batch tile
    acc_ref: (tile_b, 512) f32 scratch accumulator for the first matmul
    """
    k = pl.program_id(1)

    @pl.when(k == 0)
    def _():
        acc_ref[...] = jnp.zeros_like(acc_ref)

    # Linear(D, 512): bf16 MXU matmul, f32 accumulation over K tiles.
    x = x_ref[...].astype(jnp.bfloat16)
    acc_ref[...] += jnp.dot(x, w1_ref[...], preferred_element_type=jnp.float32)

    @pl.when(k == pl.num_programs(1) - 1)
    def _():
        # + bias, LeakyReLU(0.2)
        h1 = acc_ref[...] + b1_ref[...]
        h1 = jnp.maximum(h1, 0.2 * h1)
        # Linear(512, 256) + LeakyReLU(0.2)
        h2 = jnp.dot(h1.astype(jnp.bfloat16), w2_ref[...],
                     preferred_element_type=jnp.float32) + b2_ref[...]
        h2 = jnp.maximum(h2, 0.2 * h2)
        # Linear(256, 1) + Sigmoid, lane-dense:
        # (1, 256) contracted with (tile_b, 256) on the feature dim -> (1, tile_b)
        logits = jax.lax.dot_general(
            w3_ref[...], h2, (((1,), (1,)), ((), ())),
            preferred_element_type=jnp.float32) + b3_ref[...]
        out_ref[...] = jax.nn.sigmoid(logits).astype(out_ref.dtype)


def _pick_tiles(B, D):
    # Batch tile: big enough to amortize the ~0.35 us/step grid overhead,
    # but always >= 2 steps when B >= 256 so both v7x TensorCores get work.
    if B >= 1024:
        tile_b = 512
    elif B >= 512:
        tile_b = 256
    elif B >= 256:
        tile_b = 128
    else:
        tile_b = max(16, ((B + 15) // 16) * 16)   # bf16: 16 sublanes / vreg
    # K tile: keep the whole reduction dim resident unless w1 would dominate
    # VMEM (large flattened images); then tile D and accumulate in scratch.
    if D <= 4096 or D % 512 != 0:
        tile_k = D
    elif D % 2048 == 0:
        tile_k = 2048
    elif D % 1024 == 0:
        tile_k = 1024
    else:
        tile_k = 512
    return tile_b, tile_k


def _call_pallas(x, params, tile_b, tile_k, single_buffer_weights):
    B_pad, D = x.shape
    w1, b1, w2, b2, w3, b3 = params
    num_b = B_pad // tile_b
    num_k = D // tile_k

    # Constant-index (resident) blocks don't need double buffering.
    resident = dict(pipeline_mode=pl.Buffered(1)) if single_buffer_weights else {}

    if num_k == 1:
        w1_spec = pl.BlockSpec((tile_k, 512), lambda i, k: (k, 0), **resident)
    else:
        w1_spec = pl.BlockSpec((tile_k, 512), lambda i, k: (k, 0))  # pipelined over K

    flops = 2 * B_pad * (D * 512 + 512 * 256 + 256)
    bytes_accessed = (x.size * 4                      # f32 activations
                      + w1.size * 2 + w2.size * 2     # bf16 weights
                      + (w3.size + b1.size + b2.size + b3.size) * 4
                      + B_pad * 4)                    # output
    cost = pl.CostEstimate(flops=flops, transcendentals=B_pad,
                           bytes_accessed=bytes_accessed)

    return pl.pallas_call(
        _discriminator_kernel,
        out_shape=jax.ShapeDtypeStruct((num_b, tile_b), jnp.float32),
        grid=(num_b, num_k),
        in_specs=[
            pl.BlockSpec((tile_b, tile_k), lambda i, k: (i, k)),   # x (pipelined)
            w1_spec,
            pl.BlockSpec((1, 512), lambda i, k: (0, 0), **resident),
            pl.BlockSpec((512, 256), lambda i, k: (0, 0), **resident),
            pl.BlockSpec((1, 256), lambda i, k: (0, 0), **resident),
            pl.BlockSpec((1, 256), lambda i, k: (0, 0), **resident),  # w3 row
            pl.BlockSpec((1, 1), lambda i, k: (0, 0), **resident),
        ],
        out_specs=pl.BlockSpec((1, tile_b), lambda i, k: (i, 0)),   # lane-dense
        scratch_shapes=[pltpu.VMEM((tile_b, 512), jnp.float32)],
        compiler_params=pltpu.CompilerParams(
            dimension_semantics=("parallel", "arbitrary")),
        cost_estimate=cost,
    )(x, w1, b1, w2, b2, w3, b3)


def simple_discriminator_forward(img, params):
    """img: (B, C, H, W) float32. Returns (B, 1) validity in [0, 1]."""
    B = img.shape[0]
    x = img.reshape(B, -1)                 # same semantics as torch .view(B, -1)
    D = x.shape[1]

    tile_b, tile_k = _pick_tiles(B, D)
    B_pad = ((B + tile_b - 1) // tile_b) * tile_b
    if B_pad != B:
        x = jnp.pad(x, ((0, B_pad - B), (0, 0)))

    try:
        out = _call_pallas(x, params, tile_b, tile_k, single_buffer_weights=True)
    except Exception:
        # pl.Buffered(1) not supported on this jax/libtpu: use default buffering.
        out = _call_pallas(x, params, tile_b, tile_k, single_buffer_weights=False)

    # (num_tiles, tile_b) lane-dense slab -> (B, 1) column.
    return out.reshape(-1)[:B].reshape(B, 1)


def init_params(key, in_features):
    """Deterministic init mimicking PyTorch Linear default U[-1/sqrt(fan_in), +].

    Matmul weights (w1, w2) are stored in bf16 (MXU-native); the final-layer
    row w3 and all biases stay f32.
    """
    dims = [(in_features, 512), (512, 256), (256, 1)]
    params = []
    for i, (fan_in, fan_out) in enumerate(dims):
        kw, kb = jax.random.split(jax.random.fold_in(key, i))
        bound = 1.0 / jnp.sqrt(float(fan_in))
        w = jax.random.uniform(kw, (fan_in, fan_out), jnp.float32, -bound, bound)
        b = jax.random.uniform(kb, (1, fan_out), jnp.float32, -bound, bound)
        params.append((w, b))
    (w1, b1), (w2, b2), (w3, b3) = params
    return (w1.astype(jnp.bfloat16), b1,
            w2.astype(jnp.bfloat16), b2,
            w3.T,                      # (1, 256) f32 row for the lane-dense layer
            b3)


def reference_forward(img, params):
    """Pure-JAX f32 reference for the correctness check."""
    x = img.reshape(img.shape[0], -1).astype(jnp.float32)
    w1, b1, w2, b2, w3, b3 = params
    h1 = x @ w1.astype(jnp.float32) + b1
    h1 = jnp.maximum(h1, 0.2 * h1)
    h2 = h1 @ w2.astype(jnp.float32) + b2
    h2 = jnp.maximum(h2, 0.2 * h2)
    logits = h2 @ w3.T + b3
    return jax.nn.sigmoid(logits)


if __name__ == "__main__":
    key = jax.random.PRNGKey(0)
    B, C, H, W = 2, 4, 16, 16          # args.channels=4, args.img_size=16
    k_img, k_par = jax.random.split(key)
    img = jax.random.normal(k_img, (B, C, H, W), jnp.float32)
    params = init_params(k_par, C * H * W)

    out = jax.block_until_ready(simple_discriminator_forward(img, params))
    ref = reference_forward(img, params)
    assert out.shape == (B, 1)
    # bf16 matmuls (f32 accumulation) vs f32 reference: loosened tolerance.
    assert jnp.allclose(out, ref, atol=2e-2, rtol=2e-2), (out, ref)

    # Exercise the multi-tile + padded-batch path (tile_b=128, B_pad=384).
    B2 = 300
    img2 = jax.random.normal(jax.random.fold_in(key, 7), (B2, C, H, W), jnp.float32)
    out2 = jax.block_until_ready(simple_discriminator_forward(img2, params))
    ref2 = reference_forward(img2, params)
    assert out2.shape == (B2, 1)
    assert jnp.allclose(out2, ref2, atol=2e-2, rtol=2e-2)

    print("KERNEL_OK")
</pallas_src>

<mosaic_0001>
module attributes {stable_mosaic.version = 11 : i64} {
  func.func @_discriminator_kernel(%arg0: i32, %arg1: i32, %arg2: memref<16x1024xf32, #tpu.memory_space<vmem>>, %arg3: memref<1024x512xbf16, #tpu.memory_space<vmem>>, %arg4: memref<1x512xf32, #tpu.memory_space<vmem>>, %arg5: memref<512x256xbf16, #tpu.memory_space<vmem>>, %arg6: memref<1x256xf32, #tpu.memory_space<vmem>>, %arg7: memref<1x256xf32, #tpu.memory_space<vmem>>, %arg8: memref<1x1xf32, #tpu.memory_space<vmem>>, %arg9: memref<1x16xf32, #tpu.memory_space<vmem>>, %arg10: memref<16x512xf32, #tpu.memory_space<vmem>>) attributes {dimension_semantics = [#tpu.dimension_semantics<parallel>, #tpu.dimension_semantics<arbitrary>], iteration_bounds = array<i64: 1, 1>, scalar_prefetch = 0 : i64, scratch_operands = 1 : i64, tpu.core_type = #tpu.core_type<tc>, window_params = [{transform_indices = @transform_0, window_bounds = array<i64: 16, 1024>}, {pipeline_mode = #tpu.pipeline_mode<synchronous>, transform_indices = @transform_1, window_bounds = array<i64: 1024, 512>}, {pipeline_mode = #tpu.pipeline_mode<synchronous>, transform_indices = @transform_2, window_bounds = array<i64: 1, 512>}, {pipeline_mode = #tpu.pipeline_mode<synchronous>, transform_indices = @transform_3, window_bounds = array<i64: 512, 256>}, {pipeline_mode = #tpu.pipeline_mode<synchronous>, transform_indices = @transform_4, window_bounds = array<i64: 1, 256>}, {pipeline_mode = #tpu.pipeline_mode<synchronous>, transform_indices = @transform_5, window_bounds = array<i64: 1, 256>}, {pipeline_mode = #tpu.pipeline_mode<synchronous>, transform_indices = @transform_6, window_bounds = array<i64: 1, 1>}, {transform_indices = @transform_7, window_bounds = array<i64: 1, 16>}]} {
    %c0_i32 = arith.constant 0 : i32
    %0 = arith.cmpi eq, %arg1, %c0_i32 : i32
    %1 = arith.extui %0 : i1 to i32
    %c0_i32_0 = arith.constant 0 : i32
    %2 = arith.cmpi ne, %1, %c0_i32_0 : i32
    scf.if %2 {
      %cst_10 = arith.constant 0.000000e+00 : f32
      %13 = vector.broadcast %cst_10 : f32 to vector<16x512xf32>
      %c0_11 = arith.constant 0 : index
      %c0_12 = arith.constant 0 : index
      %14 = vector.load %arg10[%c0_11, %c0_12] : memref<16x512xf32, #tpu.memory_space<vmem>>, vector<16x512xf32>
      tpu.vector_store %arg10[%c0_11, %c0_12], %13 {strides = array<i32>} : memref<16x512xf32, #tpu.memory_space<vmem>>, vector<16x512xf32>,
    } else {
    }
    %c0 = arith.constant 0 : index
    %c0_1 = arith.constant 0 : index
    %3 = vector.load %arg2[%c0, %c0_1] : memref<16x1024xf32, #tpu.memory_space<vmem>>, vector<16x1024xf32>
    %4 = arith.truncf %3 : vector<16x1024xf32> to vector<16x1024xbf16>
    %c0_2 = arith.constant 0 : index
    %c0_3 = arith.constant 0 : index
    %5 = vector.load %arg10[%c0_2, %c0_3] : memref<16x512xf32, #tpu.memory_space<vmem>>, vector<16x512xf32>
    %c0_4 = arith.constant 0 : index
    %c0_5 = arith.constant 0 : index
    %6 = vector.load %arg3[%c0_4, %c0_5] : memref<1024x512xbf16, #tpu.memory_space<vmem>>, vector<1024x512xbf16>
    %cst = arith.constant dense<0.000000e+00> : vector<16x512xf32>
    %7 = tpu.matmul %4, %6, %cst {dimension_numbers = #tpu.dot_dimension_numbers<[1], [0], [0], [1], [0, 0, 1, 1], [], []>} : vector<16x1024xbf16>, vector<1024x512xbf16>, vector<16x512xf32> -> vector<16x512xf32>
    %8 = arith.addf %5, %7 : vector<16x512xf32>
    %c0_6 = arith.constant 0 : index
    %c0_7 = arith.constant 0 : index
    %9 = vector.load %arg10[%c0_6, %c0_7] : memref<16x512xf32, #tpu.memory_space<vmem>>, vector<16x512xf32>
    tpu.vector_store %arg10[%c0_6, %c0_7], %8 {strides = array<i32>} : memref<16x512xf32, #tpu.memory_space<vmem>>, vector<16x512xf32>,
    %c0_i32_8 = arith.constant 0 : i32
    %10 = arith.cmpi eq, %arg1, %c0_i32_8 : i32
    %11 = arith.extui %10 : i1 to i32
    %c0_i32_9 = arith.constant 0 : i32
    %12 = arith.cmpi ne, %11, %c0_i32_9 : i32
    scf.if %12 {
      %c0_10 = arith.constant 0 : index
      %c0_11 = arith.constant 0 : index
      %13 = vector.load %arg10[%c0_10, %c0_11] : memref<16x512xf32, #tpu.memory_space<vmem>>, vector<16x512xf32>
      %c0_12 = arith.constant 0 : index
      %c0_13 = arith.constant 0 : index
      %14 = vector.load %arg4[%c0_12, %c0_13] : memref<1x512xf32, #tpu.memory_space<vmem>>, vector<1x512xf32>
      %15 = vector.broadcast %14 : vector<1x512xf32> to vector<16x512xf32>
      %16 = arith.addf %13, %15 : vector<16x512xf32>
      %cst_14 = arith.constant 2.000000e-01 : f32
      %17 = vector.broadcast %cst_14 : f32 to vector<16x512xf32>
      %18 = arith.mulf %17, %16 : vector<16x512xf32>
      %19 = arith.maximumf %16, %18 : vector<16x512xf32>
      %20 = arith.truncf %19 : vector<16x512xf32> to vector<16x512xbf16>
      %c0_15 = arith.constant 0 : index
      %c0_16 = arith.constant 0 : index
      %21 = vector.load %arg5[%c0_15, %c0_16] : memref<512x256xbf16, #tpu.memory_space<vmem>>, vector<512x256xbf16>
      %cst_17 = arith.constant dense<0.000000e+00> : vector<16x256xf32>
      %22 = tpu.matmul %20, %21, %cst_17 {dimension_numbers = #tpu.dot_dimension_numbers<[1], [0], [0], [1], [0, 0, 1, 1], [], []>} : vector<16x512xbf16>, vector<512x256xbf16>, vector<16x256xf32> -> vector<16x256xf32>
      %c0_18 = arith.constant 0 : index
      %c0_19 = arith.constant 0 : index
      %23 = vector.load %arg6[%c0_18, %c0_19] : memref<1x256xf32, #tpu.memory_space<vmem>>, vector<1x256xf32>
      %24 = vector.broadcast %23 : vector<1x256xf32> to vector<16x256xf32>
      %25 = arith.addf %22, %24 : vector<16x256xf32>
      %cst_20 = arith.constant 2.000000e-01 : f32
      %26 = vector.broadcast %cst_20 : f32 to vector<16x256xf32>
      %27 = arith.mulf %26, %25 : vector<16x256xf32>
      %28 = arith.maximumf %25, %27 : vector<16x256xf32>
      %c0_21 = arith.constant 0 : index
      %c0_22 = arith.constant 0 : index
      %29 = vector.load %arg7[%c0_21, %c0_22] : memref<1x256xf32, #tpu.memory_space<vmem>>, vector<1x256xf32>
      %cst_23 = arith.constant dense<0.000000e+00> : vector<1x16xf32>
      %30 = tpu.matmul %29, %28, %cst_23 {dimension_numbers = #tpu.dot_dimension_numbers<[1], [1], [0], [0], [0, 0, 1, 0], [], []>} : vector<1x256xf32>, vector<16x256xf32>, vector<1x16xf32> -> vector<1x16xf32>
      %c0_24 = arith.constant 0 : index
      %c0_25 = arith.constant 0 : index
      %31 = vector.load %arg8[%c0_24, %c0_25] : memref<1x1xf32, #tpu.memory_space<vmem>>, vector<1x1xf32>
      %32 = vector.broadcast %31 : vector<1x1xf32> to vector<1x16xf32>
      %33 = arith.addf %30, %32 : vector<1x16xf32>
      %34 = arith.negf %33 : vector<1x16xf32>
      %35 = math.exp %34 : vector<1x16xf32>
      %cst_26 = arith.constant 1.000000e+00 : f32
      %36 = vector.broadcast %cst_26 : f32 to vector<1x16xf32>
      %37 = arith.addf %36, %35 : vector<1x16xf32>
      %38 = arith.divf %36, %37 : vector<1x16xf32>
      %c0_27 = arith.constant 0 : index
      %c0_28 = arith.constant 0 : index
      %39 = vector.load %arg9[%c0_27, %c0_28] : memref<1x16xf32, #tpu.memory_space<vmem>>, vector<1x16xf32>
      tpu.vector_store %arg9[%c0_27, %c0_28], %38 {strides = array<i32>} : memref<1x16xf32, #tpu.memory_space<vmem>>, vector<1x16xf32>,
    } else {
    }
    return
  }
  func.func @transform_0(%arg0: i32, %arg1: i32) -> (i32, i32) {
    %c0_i32 = arith.constant 0 : i32
    return %arg0, %arg1 : i32, i32
  }
  func.func @transform_1(%arg0: i32, %arg1: i32) -> (i32, i32) {
    %c0_i32 = arith.constant 0 : i32
    %c0_i32_0 = arith.constant 0 : i32
    return %arg1, %c0_i32 : i32, i32
  }
  func.func @transform_2(%arg0: i32, %arg1: i32) -> (i32, i32) {
    %c0_i32 = arith.constant 0 : i32
    %c0_i32_0 = arith.constant 0 : i32
    %c0_i32_1 = arith.constant 0 : i32
    return %c0_i32, %c0_i32_0 : i32, i32
  }
  func.func @transform_3(%arg0: i32, %arg1: i32) -> (i32, i32) {
    %c0_i32 = arith.constant 0 : i32
    %c0_i32_0 = arith.constant 0 : i32
    %c0_i32_1 = arith.constant 0 : i32
    return %c0_i32, %c0_i32_0 : i32, i32
  }
  func.func @transform_4(%arg0: i32, %arg1: i32) -> (i32, i32) {
    %c0_i32 = arith.constant 0 : i32
    %c0_i32_0 = arith.constant 0 : i32
    %c0_i32_1 = arith.constant 0 : i32
    return %c0_i32, %c0_i32_0 : i32, i32
  }
  func.func @transform_5(%arg0: i32, %arg1: i32) -> (i32, i32) {
    %c0_i32 = arith.constant 0 : i32
    %c0_i32_0 = arith.constant 0 : i32
    %c0_i32_1 = arith.constant 0 : i32
    return %c0_i32, %c0_i32_0 : i32, i32
  }
  func.func @transform_6(%arg0: i32, %arg1: i32) -> (i32, i32) {
    %c0_i32 = arith.constant 0 : i32
    %c0_i32_0 = arith.constant 0 : i32
    %c0_i32_1 = arith.constant 0 : i32
    return %c0_i32, %c0_i32_0 : i32, i32
  }
  func.func @transform_7(%arg0: i32, %arg1: i32) -> (i32, i32) {
    %c0_i32 = arith.constant 0 : i32
    %c0_i32_0 = arith.constant 0 : i32
    return %arg0, %c0_i32 : i32, i32
  }
}

module attributes {stable_mosaic.version = 11 : i64} {
  func.func @_discriminator_kernel(%arg0: i32, %arg1: i32, %arg2: memref<16x1024xf32, #tpu.memory_space<vmem>>, %arg3: memref<1024x512xbf16, #tpu.memory_space<vmem>>, %arg4: memref<1x512xf32, #tpu.memory_space<vmem>>, %arg5: memref<512x256xbf16, #tpu.memory_space<vmem>>, %arg6: memref<1x256xf32, #tpu.memory_space<vmem>>, %arg7: memref<1x256xf32, #tpu.memory_space<vmem>>, %arg8: memref<1x1xf32, #tpu.memory_space<vmem>>, %arg9: memref<1x16xf32, #tpu.memory_space<vmem>>, %arg10: memref<16x512xf32, #tpu.memory_space<vmem>>) attributes {dimension_semantics = [#tpu.dimension_semantics<parallel>, #tpu.dimension_semantics<arbitrary>], iteration_bounds = array<i64: 1, 1>, scalar_prefetch = 0 : i64, scratch_operands = 1 : i64, tpu.core_type = #tpu.core_type<tc>, window_params = [{transform_indices = @transform_0, window_bounds = array<i64: 16, 1024>}, {transform_indices = @transform_1, window_bounds = array<i64: 1024, 512>}, {pipeline_mode = #tpu.pipeline_mode<synchronous>, transform_indices = @transform_2, window_bounds = array<i64: 1, 512>}, {pipeline_mode = #tpu.pipeline_mode<synchronous>, transform_indices = @transform_3, window_bounds = array<i64: 512, 256>}, {pipeline_mode = #tpu.pipeline_mode<synchronous>, transform_indices = @transform_4, window_bounds = array<i64: 1, 256>}, {pipeline_mode = #tpu.pipeline_mode<synchronous>, transform_indices = @transform_5, window_bounds = array<i64: 1, 256>}, {pipeline_mode = #tpu.pipeline_mode<synchronous>, transform_indices = @transform_6, window_bounds = array<i64: 1, 1>}, {transform_indices = @transform_7, window_bounds = array<i64: 1, 16>}]} {
    %c0_i32 = arith.constant 0 : i32
    %0 = arith.cmpi eq, %arg1, %c0_i32 : i32
    %1 = arith.extui %0 : i1 to i32
    %c0_i32_0 = arith.constant 0 : i32
    %2 = arith.cmpi ne, %1, %c0_i32_0 : i32
    scf.if %2 {
      %cst_10 = arith.constant 0.000000e+00 : f32
      %13 = vector.broadcast %cst_10 : f32 to vector<16x512xf32>
      %c0_11 = arith.constant 0 : index
      %c0_12 = arith.constant 0 : index
      %14 = vector.load %arg10[%c0_11, %c0_12] : memref<16x512xf32, #tpu.memory_space<vmem>>, vector<16x512xf32>
      tpu.vector_store %arg10[%c0_11, %c0_12], %13 {strides = array<i32>} : memref<16x512xf32, #tpu.memory_space<vmem>>, vector<16x512xf32>,
    } else {
    }
    %c0 = arith.constant 0 : index
    %c0_1 = arith.constant 0 : index
    %3 = vector.load %arg2[%c0, %c0_1] : memref<16x1024xf32, #tpu.memory_space<vmem>>, vector<16x1024xf32>
    %4 = arith.truncf %3 : vector<16x1024xf32> to vector<16x1024xbf16>
    %c0_2 = arith.constant 0 : index
    %c0_3 = arith.constant 0 : index
    %5 = vector.load %arg10[%c0_2, %c0_3] : memref<16x512xf32, #tpu.memory_space<vmem>>, vector<16x512xf32>
    %c0_4 = arith.constant 0 : index
    %c0_5 = arith.constant 0 : index
    %6 = vector.load %arg3[%c0_4, %c0_5] : memref<1024x512xbf16, #tpu.memory_space<vmem>>, vector<1024x512xbf16>
    %cst = arith.constant dense<0.000000e+00> : vector<16x512xf32>
    %7 = tpu.matmul %4, %6, %cst {dimension_numbers = #tpu.dot_dimension_numbers<[1], [0], [0], [1], [0, 0, 1, 1], [], []>} : vector<16x1024xbf16>, vector<1024x512xbf16>, vector<16x512xf32> -> vector<16x512xf32>
    %8 = arith.addf %5, %7 : vector<16x512xf32>
    %c0_6 = arith.constant 0 : index
    %c0_7 = arith.constant 0 : index
    %9 = vector.load %arg10[%c0_6, %c0_7] : memref<16x512xf32, #tpu.memory_space<vmem>>, vector<16x512xf32>
    tpu.vector_store %arg10[%c0_6, %c0_7], %8 {strides = array<i32>} : memref<16x512xf32, #tpu.memory_space<vmem>>, vector<16x512xf32>,
    %c0_i32_8 = arith.constant 0 : i32
    %10 = arith.cmpi eq, %arg1, %c0_i32_8 : i32
    %11 = arith.extui %10 : i1 to i32
    %c0_i32_9 = arith.constant 0 : i32
    %12 = arith.cmpi ne, %11, %c0_i32_9 : i32
    scf.if %12 {
      %c0_10 = arith.constant 0 : index
      %c0_11 = arith.constant 0 : index
      %13 = vector.load %arg10[%c0_10, %c0_11] : memref<16x512xf32, #tpu.memory_space<vmem>>, vector<16x512xf32>
      %c0_12 = arith.constant 0 : index
      %c0_13 = arith.constant 0 : index
      %14 = vector.load %arg4[%c0_12, %c0_13] : memref<1x512xf32, #tpu.memory_space<vmem>>, vector<1x512xf32>
      %15 = vector.broadcast %14 : vector<1x512xf32> to vector<16x512xf32>
      %16 = arith.addf %13, %15 : vector<16x512xf32>
      %cst_14 = arith.constant 2.000000e-01 : f32
      %17 = vector.broadcast %cst_14 : f32 to vector<16x512xf32>
      %18 = arith.mulf %17, %16 : vector<16x512xf32>
      %19 = arith.maximumf %16, %18 : vector<16x512xf32>
      %20 = arith.truncf %19 : vector<16x512xf32> to vector<16x512xbf16>
      %c0_15 = arith.constant 0 : index
      %c0_16 = arith.constant 0 : index
      %21 = vector.load %arg5[%c0_15, %c0_16] : memref<512x256xbf16, #tpu.memory_space<vmem>>, vector<512x256xbf16>
      %cst_17 = arith.constant dense<0.000000e+00> : vector<16x256xf32>
      %22 = tpu.matmul %20, %21, %cst_17 {dimension_numbers = #tpu.dot_dimension_numbers<[1], [0], [0], [1], [0, 0, 1, 1], [], []>} : vector<16x512xbf16>, vector<512x256xbf16>, vector<16x256xf32> -> vector<16x256xf32>
      %c0_18 = arith.constant 0 : index
      %c0_19 = arith.constant 0 : index
      %23 = vector.load %arg6[%c0_18, %c0_19] : memref<1x256xf32, #tpu.memory_space<vmem>>, vector<1x256xf32>
      %24 = vector.broadcast %23 : vector<1x256xf32> to vector<16x256xf32>
      %25 = arith.addf %22, %24 : vector<16x256xf32>
      %cst_20 = arith.constant 2.000000e-01 : f32
      %26 = vector.broadcast %cst_20 : f32 to vector<16x256xf32>
      %27 = arith.mulf %26, %25 : vector<16x256xf32>
      %28 = arith.maximumf %25, %27 : vector<16x256xf32>
      %c0_21 = arith.constant 0 : index
      %c0_22 = arith.constant 0 : index
      %29 = vector.load %arg7[%c0_21, %c0_22] : memref<1x256xf32, #tpu.memory_space<vmem>>, vector<1x256xf32>
      %cst_23 = arith.constant dense<0.000000e+00> : vector<1x16xf32>
      %30 = tpu.matmul %29, %28, %cst_23 {dimension_numbers = #tpu.dot_dimension_numbers<[1], [1], [0], [0], [0, 0, 1, 0], [], []>} : vector<1x256xf32>, vector<16x256xf32>, vector<1x16xf32> -> vector<1x16xf32>
      %c0_24 = arith.constant 0 : index
      %c0_25 = arith.constant 0 : index
      %31 = vector.load %arg8[%c0_24, %c0_25] : memref<1x1xf32, #tpu.memory_space<vmem>>, vector<1x1xf32>
      %32 = vector.broadcast %31 : vector<1x1xf32> to vector<1x16xf32>
      %33 = arith.addf %30, %32 : vector<1x16xf32>
      %34 = arith.negf %33 : vector<1x16xf32>
      %35 = math.exp %34 : vector<1x16xf32>
      %cst_26 = arith.constant 1.000000e+00 : f32
      %36 = vector.broadcast %cst_26 : f32 to vector<1x16xf32>
      %37 = arith.addf %36, %35 : vector<1x16xf32>
      %38 = arith.divf %36, %37 : vector<1x16xf32>
      %c0_27 = arith.constant 0 : index
      %c0_28 = arith.constant 0 : index
      %39 = vector.load %arg9[%c0_27, %c0_28] : memref<1x16xf32, #tpu.memory_space<vmem>>, vector<1x16xf32>
      tpu.vector_store %arg9[%c0_27, %c0_28], %38 {strides = array<i32>} : memref<1x16xf32, #tpu.memory_space<vmem>>, vector<1x16xf32>,
    } else {
    }
    return
  }
  func.func @transform_0(%arg0: i32, %arg1: i32) -> (i32, i32) {
    %c0_i32 = arith.constant 0 : i32
    return %arg0, %arg1 : i32, i32
  }
  func.func @transform_1(%arg0: i32, %arg1: i32) -> (i32, i32) {
    %c0_i32 = arith.constant 0 : i32
    %c0_i32_0 = arith.constant 0 : i32
    return %arg1, %c0_i32 : i32, i32
  }
  func.func @transform_2(%arg0: i32, %arg1: i32) -> (i32, i32) {
    %c0_i32 = arith.constant 0 : i32
    %c0_i32_0 = arith.constant 0 : i32
    %c0_i32_1 = arith.constant 0 : i32
    return %c0_i32, %c0_i32_0 : i32, i32
  }
  func.func @transform_3(%arg0: i32, %arg1: i32) -> (i32, i32) {
    %c0_i32 = arith.constant 0 : i32
    %c0_i32_0 = arith.constant 0 : i32
    %c0_i32_1 = arith.constant 0 : i32
    return %c0_i32, %c0_i32_0 : i32, i32
  }
  func.func @transform_4(%arg0: i32, %arg1: i32) -> (i32, i32) {
    %c0_i32 = arith.constant 0 : i32
    %c0_i32_0 = arith.constant 0 : i32
    %c0_i32_1 = arith.constant 0 : i32
    return %c0_i32, %c0_i32_0 : i32, i32
  }
  func.func @transform_5(%arg0: i32, %arg1: i32) -> (i32, i32) {
    %c0_i32 = arith.constant 0 : i32
    %c0_i32_0 = arith.constant 0 : i32
    %c0_i32_1 = arith.constant 0 : i32
    return %c0_i32, %c0_i32_0 : i32, i32
  }
  func.func @transform_6(%arg0: i32, %arg1: i32) -> (i32, i32) {
    %c0_i32 = arith.constant 0 : i32
    %c0_i32_0 = arith.constant 0 : i32
    %c0_i32_1 = arith.constant 0 : i32
    return %c0_i32, %c0_i32_0 : i32, i32
  }
  func.func @transform_7(%arg0: i32, %arg1: i32) -> (i32, i32) {
    %c0_i32 = arith.constant 0 : i32
    %c0_i32_0 = arith.constant 0 : i32
    return %arg0, %c0_i32 : i32, i32
  }
}

</mosaic_0001>

<llo_original>
// kernel: tpu_custom_call.1
$region0: #{tpu_custom_call.1}
  #allocation0 [shape = 'u32[]', space=smem, size = 0x4, offset = 0x4, fixed_abs, tag = 'smem constant byte address 0x4 - core index']
  #allocation1 [shape = 'u32[144,128]{1,0:T(1,128)}', space=vmem, size = 0x12000, scoped, tag = 'internal scratch']
  #allocation2 [shape = 'f32[16,512]{1,0:T(8,128)}', space=vmem, size = 0x8000, scoped, tag = 'scratch operand']
  #allocation3 [shape = 'f32[1,1]{1,0:T(1,128)S(1)}', space=vmem, size = 0x200, scoped, tag = 'scoped memory for tpu_custom_call.1']
  %s0 = inlined_call_operand.hbm [shape: f32[16,1024], index: 0, kind: input, shape index: {}]
  %s1 = inlined_call_operand.hbm [shape: bf16[1024,512], index: 1, kind: input, shape index: {}]
  %s2 = inlined_call_operand.vmem [shape: f32[1,512], index: 2, kind: input, shape index: {}]
  %s3 = inlined_call_operand.hbm [shape: bf16[512,256], index: 3, kind: input, shape index: {}]
  %s4 = inlined_call_operand.vmem [shape: f32[1,256], index: 4, kind: input, shape index: {}]
  %s5 = inlined_call_operand.vmem [shape: f32[1,256], index: 5, kind: input, shape index: {}]
  %s6 = inlined_call_operand.<no memory space> [shape: f32[1,1], index: 6, kind: input, shape index: {}]
  %s7 = inlined_call_operand.hbm [shape: f32[1,16], index: 7, kind: output, shape index: {}]
  %s8 = sld [smem:[#allocation0]]
  $region58: #{tpu_custom_call.1} parent=0
    _
  %s10 = ssub.s32 1, %s8
  %s11 = scalar_select 0, %s10, %s8
  %v12 = vstv %s6
  %13 = vst [vmem:[#allocation3] sm:$0x1] %v12
  $region1: #{tpu_custom_call.1} parent=0
    #allocation4 [shape = 'u8[65536]{0}', space=vmem, size = 0x10000, scoped, tag = 'input window, operand 0, single buffered']
    #allocation5 [shape = 's32[1]{0}', space=sflag, size = 0x4, scoped, tag = 'scoped memory for tpu_custom_call.1']
    #allocation6 [shape = 's32[1]{0}', space=sflag, size = 0x4, scoped, tag = 'scoped memory for tpu_custom_call.1']
    #allocation7 [shape = 'u8[1048576]{0}', space=vmem, size = 0x100000, scoped, tag = 'input window, operand 1, single buffered']
    #allocation8 [shape = 's32[1]{0}', space=sflag, size = 0x4, scoped, tag = 'scoped memory for tpu_custom_call.1']
    #allocation9 [shape = 'u8[262144]{0}', space=vmem, size = 0x40000, scoped, tag = 'input window, operand 3, single buffered']
    #allocation10 [shape = 'u8[512]{0}', space=vmem, size = 0x400, scoped, tag = 'output window, operand 0, single buffered']
    %14 = vsyncpa [#allocation5], 0
    %15 = vsyncpa [#allocation8], 0
    %16 = vsyncpa [#allocation6], 0
    // Predicated region
    $region2: #{tpu_custom_call.1} parent=1 // pred_check
      _
    $region3: #{tpu_custom_call.1} parent=1 // pred_check_branch
      %18 = sbr.rel (0) target = $region5
    $region4: #{tpu_custom_call.1} parent=1 // pred_region
      %s20 = ssub.s32 2048, 2048
      %21 = vsyncadd [#allocation5], %s20
      %s22 = sshll.u32 [#allocation4], 4
      %s23 = int_to_ptr.vmem [resolvable:$true] %s22
      %28 = dma.hbm_to_vmem [thread:$0]  %s0, 2048, %s23, [#allocation5], 1024, 1024, 64
    $region5: #{tpu_custom_call.1} parent=1 // pred_fallthru
      _
    // Predicated region
    $region6: #{tpu_custom_call.1} parent=1 // pred_check
      _
    $region7: #{tpu_custom_call.1} parent=1 // pred_check_branch
      %30 = sbr.rel (0) target = $region9
    $region8: #{tpu_custom_call.1} parent=1 // pred_region
      %s32 = ssub.s32 32768, 32768
      %33 = vsyncadd [#allocation8], %s32
      %s34 = sshll.u32 [#allocation7], 4
      %s35 = int_to_ptr.vmem [resolvable:$true] %s34
      %40 = dma.hbm_to_vmem [thread:$0]  %s1, 32768, %s35, [#allocation8], 256, 256, 16
    $region9: #{tpu_custom_call.1} parent=1 // pred_fallthru
      _
    // Predicated region
    $region10: #{tpu_custom_call.1} parent=1 // pred_check
      _
    $region11: #{tpu_custom_call.1} parent=1 // pred_check_branch
      %42 = sbr.rel (0) target = $region13
    $region12: #{tpu_custom_call.1} parent=1 // pred_region
      _
    $region13: #{tpu_custom_call.1} parent=1 // pred_fallthru
      _
    // Predicated region
    $region14: #{tpu_custom_call.1} parent=1 // pred_check
      _
    $region15: #{tpu_custom_call.1} parent=1 // pred_check_branch
      %44 = sbr.rel (0) target = $region17
    $region16: #{tpu_custom_call.1} parent=1 // pred_region
      %s46 = ssub.s32 8192, 8192
      %47 = vsyncadd [#allocation8], %s46
      %s48 = sshll.u32 [#allocation9], 4
      %s49 = int_to_ptr.vmem [resolvable:$true] %s48
      %54 = dma.hbm_to_vmem [thread:$0]  %s3, 8192, %s49, [#allocation8], 128, 128, 8
    $region17: #{tpu_custom_call.1} parent=1 // pred_fallthru
      _
    // Predicated region
    $region18: #{tpu_custom_call.1} parent=1 // pred_check
      _
    $region19: #{tpu_custom_call.1} parent=1 // pred_check_branch
      %56 = sbr.rel (0) target = $region21
    $region20: #{tpu_custom_call.1} parent=1 // pred_region
      _
    $region21: #{tpu_custom_call.1} parent=1 // pred_fallthru
      _
    // Predicated region
    $region22: #{tpu_custom_call.1} parent=1 // pred_check
      _
    $region23: #{tpu_custom_call.1} parent=1 // pred_check_branch
      %58 = sbr.rel (0) target = $region25
    $region24: #{tpu_custom_call.1} parent=1 // pred_region
      _
    $region25: #{tpu_custom_call.1} parent=1 // pred_fallthru
      _
    // Predicated region
    $region26: #{tpu_custom_call.1} parent=1 // pred_check
      _
    $region27: #{tpu_custom_call.1} parent=1 // pred_check_branch
      %60 = sbr.rel (0) target = $region29
    $region28: #{tpu_custom_call.1} parent=1 // pred_region
      _
    $region29: #{tpu_custom_call.1} parent=1 // pred_fallthru
      _
    // Predicated region
    $region30: #{tpu_custom_call.1} parent=1 // pred_check
      _
    $region31: #{tpu_custom_call.1} parent=1 // pred_check_branch
      %62 = sbr.rel (0) target = $region33
    $region32: #{tpu_custom_call.1} parent=1 // pred_region
      %63 = dma.done [#allocation5], 2048
    $region33: #{tpu_custom_call.1} parent=1 // pred_fallthru
      _
    // Predicated region
    $region34: #{tpu_custom_call.1} parent=1 // pred_check
      _
    $region35: #{tpu_custom_call.1} parent=1 // pred_check_branch
      %65 = sbr.rel (0) target = $region37
    $region36: #{tpu_custom_call.1} parent=1 // pred_region
      %66 = dma.done [#allocation8], 32768
    $region37: #{tpu_custom_call.1} parent=1 // pred_fallthru
      _
    // Predicated region
    $region38: #{tpu_custom_call.1} parent=1 // pred_check
      _
    $region39: #{tpu_custom_call.1} parent=1 // pred_check_branch
      %68 = sbr.rel (0) target = $region41
    $region40: #{tpu_custom_call.1} parent=1 // pred_region
      %69 = dma.done [#allocation8], 8192
    $region41: #{tpu_custom_call.1} parent=1 // pred_fallthru
      _
    %p70 = scmp.eq.s32.totalorder 0, 0
    // Predicated region
    $region42: #{tpu_custom_call.1} parent=1 // pred_check
      %p71 = pneg %p70
    $region43: #{tpu_custom_call.1} parent=1 // pred_check_branch
      %73 = sbr.rel (%p71) target = $region45
    $region44: #{tpu_custom_call.1} parent=1 // pred_region
      %74 = vst [vmem:[#allocation2] sm:$0xff] 0.0
      %75 = vst [vmem:[#allocation2 + $0x8] sm:$0xff] 0.0
      %76 = vst [vmem:[#allocation2 + $0x10] sm:$0xff] 0.0
      %77 = vst [vmem:[#allocation2 + $0x18] sm:$0xff] 0.0
      %78 = vst [vmem:[#allocation2 + $0x20] sm:$0xff] 0.0
      %79 = vst [vmem:[#allocation2 + $0x28] sm:$0xff] 0.0
      %80 = vst [vmem:[#allocation2 + $0x30] sm:$0xff] 0.0
      %81 = vst [vmem:[#allocation2 + $0x38] sm:$0xff] 0.0
    $region45: #{tpu_custom_call.1} parent=1 // pred_fallthru
      _
    %v82 = vld [vmem:[#allocation4] sm:$0xff]
    %v83 = vld [vmem:[#allocation4 + $0x8] sm:$0xff]
    %v84 = vld [vmem:[#allocation4 + $0x10] sm:$0xff]
    %v85 = vld [vmem:[#allocation4 + $0x18] sm:$0xff]
    %v86 = vld [vmem:[#allocation4 + $0x20] sm:$0xff]
    %v87 = vld [vmem:[#allocation4 + $0x28] sm:$0xff]
    %v88 = vld [vmem:[#allocation4 + $0x30] sm:$0xff]
    %v89 = vld [vmem:[#allocation4 + $0x38] sm:$0xff]
    %v90 = vld [vmem:[#allocation4 + $0x40] sm:$0xff]
    %v91 = vld [vmem:[#allocation4 + $0x48] sm:$0xff]
    %v92 = vld [vmem:[#allocation4 + $0x50] sm:$0xff]
    %v93 = vld [vmem:[#allocation4 + $0x58] sm:$0xff]
    %v94 = vld [vmem:[#allocation4 + $0x60] sm:$0xff]
    %v95 = vld [vmem:[#allocation4 + $0x68] sm:$0xff]
    %v96 = vld [vmem:[#allocation4 + $0x70] sm:$0xff]
    %v97 = vld [vmem:[#allocation4 + $0x78] sm:$0xff]
    %v98 = vpack.c.bf16 %v90, %v82
    %v99 = vpack.c.bf16 %v91, %v83
    %v100 = vpack.c.bf16 %v92, %v84
    %v101 = vpack.c.bf16 %v93, %v85
    %v102 = vpack.c.bf16 %v94, %v86
    %v103 = vpack.c.bf16 %v95, %v87
    %v104 = vpack.c.bf16 %v96, %v88
    %v105 = vpack.c.bf16 %v97, %v89
    %v106 = vld [vmem:[#allocation2] sm:$0xff]
    %v107 = vld [vmem:[#allocation2 + $0x8] sm:$0xff]
    %v108 = vld [vmem:[#allocation2 + $0x10] sm:$0xff]
    %v109 = vld [vmem:[#allocation2 + $0x18] sm:$0xff]
    %v110 = vld [vmem:[#allocation2 + $0x20] sm:$0xff]
    %v111 = vld [vmem:[#allocation2 + $0x28] sm:$0xff]
    %v112 = vld [vmem:[#allocation2 + $0x30] sm:$0xff]
    %v113 = vld [vmem:[#allocation2 + $0x38] sm:$0xff]
    %v114 = vld [vmem:[#allocation7] sm:$0xff]
    %v115 = vld [vmem:[#allocation7 + $0x8] sm:$0xff]
    %v116 = vld [vmem:[#allocation7 + $0x10] sm:$0xff]
    %v117 = vld [vmem:[#allocation7 + $0x18] sm:$0xff]
    %v118 = vld [vmem:[#allocation7 + $0x20] sm:$0xff]
    %v119 = vld [vmem:[#allocation7 + $0x28] sm:$0xff]
    %v120 = vld [vmem:[#allocation7 + $0x30] sm:$0xff]
    %v121 = vld [vmem:[#allocation7 + $0x38] sm:$0xff]
    %v122 = vld [vmem:[#allocation7 + $0x40] sm:$0xff]
    %v123 = vld [vmem:[#allocation7 + $0x48] sm:$0xff]
    %v124 = vld [vmem:[#allocation7 + $0x50] sm:$0xff]
    %v125 = vld [vmem:[#allocation7 + $0x58] sm:$0xff]
    %v126 = vld [vmem:[#allocation7 + $0x60] sm:$0xff]
    %v127 = vld [vmem:[#allocation7 + $0x68] sm:$0xff]
    %v128 = vld [vmem:[#allocation7 + $0x70] sm:$0xff]
    %v129 = vld [vmem:[#allocation7 + $0x78] sm:$0xff]
    %v130 = vld [vmem:[#allocation7 + $0x80] sm:$0xff]
    %v131 = vld [vmem:[#allocation7 + $0x88] sm:$0xff]
    %v132 = vld [vmem:[#allocation7 + $0x90] sm:$0xff]
    %v133 = vld [vmem:[#allocation7 + $0x98] sm:$0xff]
    %v134 = vld [vmem:[#allocation7 + $0xa0] sm:$0xff]
    %v135 = vld [vmem:[#allocation7 + $0xa8] sm:$0xff]
    %v136 = vld [vmem:[#allocation7 + $0xb0] sm:$0xff]
    %v137 = vld [vmem:[#allocation7 + $0xb8] sm:$0xff]
    %v138 = vld [vmem:[#allocation7 + $0xc0] sm:$0xff]
    %v139 = vld [vmem:[#allocation7 + $0xc8] sm:$0xff]
    %v140 = vld [vmem:[#allocation7 + $0xd0] sm:$0xff]
    %v141 = vld [vmem:[#allocation7 + $0xd8] sm:$0xff]
    %v142 = vld [vmem:[#allocation7 + $0xe0] sm:$0xff]
    %v143 = vld [vmem:[#allocation7 + $0xe8] sm:$0xff]
    %v144 = vld [vmem:[#allocation7 + $0xf0] sm:$0xff]
    %v145 = vld [vmem:[#allocation7 + $0xf8] sm:$0xff]
    %v146 = vld [vmem:[#allocation7 + $0x100] sm:$0xff]
    %v147 = vld [vmem:[#allocation7 + $0x108] sm:$0xff]
    %v148 = vld [vmem:[#allocation7 + $0x110] sm:$0xff]
    %v149 = vld [vmem:[#allocation7 + $0x118] sm:$0xff]
    %v150 = vld [vmem:[#allocation7 + $0x120] sm:$0xff]
    %v151 = vld [vmem:[#allocation7 + $0x128] sm:$0xff]
    %v152 = vld [vmem:[#allocation7 + $0x130] sm:$0xff]
    %v153 = vld [vmem:[#allocation7 + $0x138] sm:$0xff]
    %v154 = vld [vmem:[#allocation7 + $0x140] sm:$0xff]
    %v155 = vld [vmem:[#allocation7 + $0x148] sm:$0xff]
    %v156 = vld [vmem:[#allocation7 + $0x150] sm:$0xff]
    %v157 = vld [vmem:[#allocation7 + $0x158] sm:$0xff]
    %v158 = vld [vmem:[#allocation7 + $0x160] sm:$0xff]
    %v159 = vld [vmem:[#allocation7 + $0x168] sm:$0xff]
    %v160 = vld [vmem:[#allocation7 + $0x170] sm:$0xff]
    %v161 = vld [vmem:[#allocation7 + $0x178] sm:$0xff]
    %v162 = vld [vmem:[#allocation7 + $0x180] sm:$0xff]
    %v163 = vld [vmem:[#allocation7 + $0x188] sm:$0xff]
    %v164 = vld [vmem:[#allocation7 + $0x190] sm:$0xff]
    %v165 = vld [vmem:[#allocation7 + $0x198] sm:$0xff]
    %v166 = vld [vmem:[#allocation7 + $0x1a0] sm:$0xff]
    %v167 = vld [vmem:[#allocation7 + $0x1a8] sm:$0xff]
    %v168 = vld [vmem:[#allocation7 + $0x1b0] sm:$0xff]
    %v169 = vld [vmem:[#allocation7 + $0x1b8] sm:$0xff]
    %v170 = vld [vmem:[#allocation7 + $0x1c0] sm:$0xff]
    %v171 = vld [vmem:[#allocation7 + $0x1c8] sm:$0xff]
    %v172 = vld [vmem:[#allocation7 + $0x1d0] sm:$0xff]
    %v173 = vld [vmem:[#allocation7 + $0x1d8] sm:$0xff]
    %v174 = vld [vmem:[#allocation7 + $0x1e0] sm:$0xff]
    %v175 = vld [vmem:[#allocation7 + $0x1e8] sm:$0xff]
    %v176 = vld [vmem:[#allocation7 + $0x1f0] sm:$0xff]
    %v177 = vld [vmem:[#allocation7 + $0x1f8] sm:$0xff]
    %v178 = vld [vmem:[#allocation7 + $0x200] sm:$0xff]
    %v179 = vld [vmem:[#allocation7 + $0x208] sm:$0xff]
    %v180 = vld [vmem:[#allocation7 + $0x210] sm:$0xff]
    %v181 = vld [vmem:[#allocation7 + $0x218] sm:$0xff]
    %v182 = vld [vmem:[#allocation7 + $0x220] sm:$0xff]
    %v183 = vld [vmem:[#allocation7 + $0x228] sm:$0xff]
    %v184 = vld [vmem:[#allocation7 + $0x230] sm:$0xff]
    %v185 = vld [vmem:[#allocation7 + $0x238] sm:$0xff]
    %v186 = vld [vmem:[#allocation7 + $0x240] sm:$0xff]
    %v187 = vld [vmem:[#allocation7 + $0x248] sm:$0xff]
    %v188 = vld [vmem:[#allocation7 + $0x250] sm:$0xff]
    %v189 = vld [vmem:[#allocation7 + $0x258] sm:$0xff]
    %v190 = vld [vmem:[#allocation7 + $0x260] sm:$0xff]
    %v191 = vld [vmem:[#allocation7 + $0x268] sm:$0xff]
    %v192 = vld [vmem:[#allocation7 + $0x270] sm:$0xff]
    %v193 = vld [vmem:[#allocation7 + $0x278] sm:$0xff]
    %v194 = vld [vmem:[#allocation7 + $0x280] sm:$0xff]
    %v195 = vld [vmem:[#allocation7 + $0x288] sm:$0xff]
    %v196 = vld [vmem:[#allocation7 + $0x290] sm:$0xff]
    %v197 = vld [vmem:[#allocation7 + $0x298] sm:$0xff]
    %v198 = vld [vmem:[#allocation7 + $0x2a0] sm:$0xff]
    %v199 = vld [vmem:[#allocation7 + $0x2a8] sm:$0xff]
    %v200 = vld [vmem:[#allocation7 + $0x2b0] sm:$0xff]
    %v201 = vld [vmem:[#allocation7 + $0x2b8] sm:$0xff]
    %v202 = vld [vmem:[#allocation7 + $0x2c0] sm:$0xff]
    %v203 = vld [vmem:[#allocation7 + $0x2c8] sm:$0xff]
    %v204 = vld [vmem:[#allocation7 + $0x2d0] sm:$0xff]
    %v205 = vld [vmem:[#allocation7 + $0x2d8] sm:$0xff]
    %v206 = vld [vmem:[#allocation7 + $0x2e0] sm:$0xff]
    %v207 = vld [vmem:[#allocation7 + $0x2e8] sm:$0xff]
    %v208 = vld [vmem:[#allocation7 + $0x2f0] sm:$0xff]
    %v209 = vld [vmem:[#allocation7 + $0x2f8] sm:$0xff]
    %v210 = vld [vmem:[#allocation7 + $0x300] sm:$0xff]
    %v211 = vld [vmem:[#allocation7 + $0x308] sm:$0xff]
    %v212 = vld [vmem:[#allocation7 + $0x310] sm:$0xff]
    %v213 = vld [vmem:[#allocation7 + $0x318] sm:$0xff]
    %v214 = vld [vmem:[#allocation7 + $0x320] sm:$0xff]
    %v215 = vld [vmem:[#allocation7 + $0x328] sm:$0xff]
    %v216 = vld [vmem:[#allocation7 + $0x330] sm:$0xff]
    %v217 = vld [vmem:[#allocation7 + $0x338] sm:$0xff]
    %v218 = vld [vmem:[#allocation7 + $0x340] sm:$0xff]
    %v219 = vld [vmem:[#allocation7 + $0x348] sm:$0xff]
    %v220 = vld [vmem:[#allocation7 + $0x350] sm:$0xff]
    %v221 = vld [vmem:[#allocation7 + $0x358] sm:$0xff]
    %v222 = vld [vmem:[#allocation7 + $0x360] sm:$0xff]
    %v223 = vld [vmem:[#allocation7 + $0x368] sm:$0xff]
    %v224 = vld [vmem:[#allocation7 + $0x370] sm:$0xff]
    %v225 = vld [vmem:[#allocation7 + $0x378] sm:$0xff]
    %v226 = vld [vmem:[#allocation7 + $0x380] sm:$0xff]
    %v227 = vld [vmem:[#allocation7 + $0x388] sm:$0xff]
    %v228 = vld [vmem:[#allocation7 + $0x390] sm:$0xff]
    %v229 = vld [vmem:[#allocation7 + $0x398] sm:$0xff]
    %v230 = vld [vmem:[#allocation7 + $0x3a0] sm:$0xff]
    %v231 = vld [vmem:[#allocation7 + $0x3a8] sm:$0xff]
    %v232 = vld [vmem:[#allocation7 + $0x3b0] sm:$0xff]
    %v233 = vld [vmem:[#allocation7 + $0x3b8] sm:$0xff]
    %v234 = vld [vmem:[#allocation7 + $0x3c0] sm:$0xff]
    %v235 = vld [vmem:[#allocation7 + $0x3c8] sm:$0xff]
    %v236 = vld [vmem:[#allocation7 + $0x3d0] sm:$0xff]
    %v237 = vld [vmem:[#allocation7 + $0x3d8] sm:$0xff]
    %v238 = vld [vmem:[#allocation7 + $0x3e0] sm:$0xff]
    %v239 = vld [vmem:[#allocation7 + $0x3e8] sm:$0xff]
    %v240 = vld [vmem:[#allocation7 + $0x3f0] sm:$0xff]
    %v241 = vld [vmem:[#allocation7 + $0x3f8] sm:$0xff]
    %v242 = vld [vmem:[#allocation7 + $0x400] sm:$0xff]
    %v243 = vld [vmem:[#allocation7 + $0x408] sm:$0xff]
    %v244 = vld [vmem:[#allocation7 + $0x410] sm:$0xff]
    %v245 = vld [vmem:[#allocation7 + $0x418] sm:$0xff]
    %v246 = vld [vmem:[#allocation7 + $0x420] sm:$0xff]
    %v247 = vld [vmem:[#allocation7 + $0x428] sm:$0xff]
    %v248 = vld [vmem:[#allocation7 + $0x430] sm:$0xff]
    %v249 = vld [vmem:[#allocation7 + $0x438] sm:$0xff]
    %v250 = vld [vmem:[#allocation7 + $0x440] sm:$0xff]
    %v251 = vld [vmem:[#allocation7 + $0x448] sm:$0xff]
    %v252 = vld [vmem:[#allocation7 + $0x450] sm:$0xff]
    %v253 = vld [vmem:[#allocation7 + $0x458] sm:$0xff]
    %v254 = vld [vmem:[#allocation7 + $0x460] sm:$0xff]
    %v255 = vld [vmem:[#allocation7 + $0x468] sm:$0xff]
    %v256 = vld [vmem:[#allocation7 + $0x470] sm:$0xff]
    %v257 = vld [vmem:[#allocation7 + $0x478] sm:$0xff]
    %v258 = vld [vmem:[#allocation7 + $0x480] sm:$0xff]
    %v259 = vld [vmem:[#allocation7 + $0x488] sm:$0xff]
    %v260 = vld [vmem:[#allocation7 + $0x490] sm:$0xff]
    %v261 = vld [vmem:[#allocation7 + $0x498] sm:$0xff]
    %v262 = vld [vmem:[#allocation7 + $0x4a0] sm:$0xff]
    %v263 = vld [vmem:[#allocation7 + $0x4a8] sm:$0xff]
    %v264 = vld [vmem:[#allocation7 + $0x4b0] sm:$0xff]
    %v265 = vld [vmem:[#allocation7 + $0x4b8] sm:$0xff]
    %v266 = vld [vmem:[#allocation7 + $0x4c0] sm:$0xff]
    %v267 = vld [vmem:[#allocation7 + $0x4c8] sm:$0xff]
    %v268 = vld [vmem:[#allocation7 + $0x4d0] sm:$0xff]
    %v269 = vld [vmem:[#allocation7 + $0x4d8] sm:$0xff]
    %v270 = vld [vmem:[#allocation7 + $0x4e0] sm:$0xff]
    %v271 = vld [vmem:[#allocation7 + $0x4e8] sm:$0xff]
    %v272 = vld [vmem:[#allocation7 + $0x4f0] sm:$0xff]
    %v273 = vld [vmem:[#allocation7 + $0x4f8] sm:$0xff]
    %v274 = vld [vmem:[#allocation7 + $0x500] sm:$0xff]
    %v275 = vld [vmem:[#allocation7 + $0x508] sm:$0xff]
    %v276 = vld [vmem:[#allocation7 + $0x510] sm:$0xff]
    %v277 = vld [vmem:[#allocation7 + $0x518] sm:$0xff]
    %v278 = vld [vmem:[#allocation7 + $0x520] sm:$0xff]
    %v279 = vld [vmem:[#allocation7 + $0x528] sm:$0xff]
    %v280 = vld [vmem:[#allocation7 + $0x530] sm:$0xff]
    %v281 = vld [vmem:[#allocation7 + $0x538] sm:$0xff]
    %v282 = vld [vmem:[#allocation7 + $0x540] sm:$0xff]
    %v283 = vld [vmem:[#allocation7 + $0x548] sm:$0xff]
    %v284 = vld [vmem:[#allocation7 + $0x550] sm:$0xff]
    %v285 = vld [vmem:[#allocation7 + $0x558] sm:$0xff]
    %v286 = vld [vmem:[#allocation7 + $0x560] sm:$0xff]
    %v287 = vld [vmem:[#allocation7 + $0x568] sm:$0xff]
    %v288 = vld [vmem:[#allocation7 + $0x570] sm:$0xff]
    %v289 = vld [vmem:[#allocation7 + $0x578] sm:$0xff]
    %v290 = vld [vmem:[#allocation7 + $0x580] sm:$0xff]
    %v291 = vld [vmem:[#allocation7 + $0x588] sm:$0xff]
    %v292 = vld [vmem:[#allocation7 + $0x590] sm:$0xff]
    %v293 = vld [vmem:[#allocation7 + $0x598] sm:$0xff]
    %v294 = vld [vmem:[#allocation7 + $0x5a0] sm:$0xff]
    %v295 = vld [vmem:[#allocation7 + $0x5a8] sm:$0xff]
    %v296 = vld [vmem:[#allocation7 + $0x5b0] sm:$0xff]
    %v297 = vld [vmem:[#allocation7 + $0x5b8] sm:$0xff]
    %v298 = vld [vmem:[#allocation7 + $0x5c0] sm:$0xff]
    %v299 = vld [vmem:[#allocation7 + $0x5c8] sm:$0xff]
    %v300 = vld [vmem:[#allocation7 + $0x5d0] sm:$0xff]
    %v301 = vld [vmem:[#allocation7 + $0x5d8] sm:$0xff]
    %v302 = vld [vmem:[#allocation7 + $0x5e0] sm:$0xff]
    %v303 = vld [vmem:[#allocation7 + $0x5e8] sm:$0xff]
    %v304 = vld [vmem:[#allocation7 + $0x5f0] sm:$0xff]
    %v305 = vld [vmem:[#allocation7 + $0x5f8] sm:$0xff]
    %v306 = vld [vmem:[#allocation7 + $0x600] sm:$0xff]
    %v307 = vld [vmem:[#allocation7 + $0x608] sm:$0xff]
    %v308 = vld [vmem:[#allocation7 + $0x610] sm:$0xff]
    %v309 = vld [vmem:[#allocation7 + $0x618] sm:$0xff]
    %v310 = vld [vmem:[#allocation7 + $0x620] sm:$0xff]
    %v311 = vld [vmem:[#allocation7 + $0x628] sm:$0xff]
    %v312 = vld [vmem:[#allocation7 + $0x630] sm:$0xff]
    %v313 = vld [vmem:[#allocation7 + $0x638] sm:$0xff]
    %v314 = vld [vmem:[#allocation7 + $0x640] sm:$0xff]
    %v315 = vld [vmem:[#allocation7 + $0x648] sm:$0xff]
    %v316 = vld [vmem:[#allocation7 + $0x650] sm:$0xff]
    %v317 = vld [vmem:[#allocation7 + $0x658] sm:$0xff]
    %v318 = vld [vmem:[#allocation7 + $0x660] sm:$0xff]
    %v319 = vld [vmem:[#allocation7 + $0x668] sm:$0xff]
    %v320 = vld [vmem:[#allocation7 + $0x670] sm:$0xff]
    %v321 = vld [vmem:[#allocation7 + $0x678] sm:$0xff]
    %v322 = vld [vmem:[#allocation7 + $0x680] sm:$0xff]
    %v323 = vld [vmem:[#allocation7 + $0x688] sm:$0xff]
    %v324 = vld [vmem:[#allocation7 + $0x690] sm:$0xff]
    %v325 = vld [vmem:[#allocation7 + $0x698] sm:$0xff]
    %v326 = vld [vmem:[#allocation7 + $0x6a0] sm:$0xff]
    %v327 = vld [vmem:[#allocation7 + $0x6a8] sm:$0xff]
    %v328 = vld [vmem:[#allocation7 + $0x6b0] sm:$0xff]
    %v329 = vld [vmem:[#allocation7 + $0x6b8] sm:$0xff]
    %v330 = vld [vmem:[#allocation7 + $0x6c0] sm:$0xff]
    %v331 = vld [vmem:[#allocation7 + $0x6c8] sm:$0xff]
    %v332 = vld [vmem:[#allocation7 + $0x6d0] sm:$0xff]
    %v333 = vld [vmem:[#allocation7 + $0x6d8] sm:$0xff]
    %v334 = vld [vmem:[#allocation7 + $0x6e0] sm:$0xff]
    %v335 = vld [vmem:[#allocation7 + $0x6e8] sm:$0xff]
    %v336 = vld [vmem:[#allocation7 + $0x6f0] sm:$0xff]
    %v337 = vld [vmem:[#allocation7 + $0x6f8] sm:$0xff]
    %v338 = vld [vmem:[#allocation7 + $0x700] sm:$0xff]
    %v339 = vld [vmem:[#allocation7 + $0x708] sm:$0xff]
    %v340 = vld [vmem:[#allocation7 + $0x710] sm:$0xff]
    %v341 = vld [vmem:[#allocation7 + $0x718] sm:$0xff]
    %v342 = vld [vmem:[#allocation7 + $0x720] sm:$0xff]
    %v343 = vld [vmem:[#allocation7 + $0x728] sm:$0xff]
    %v344 = vld [vmem:[#allocation7 + $0x730] sm:$0xff]
    %v345 = vld [vmem:[#allocation7 + $0x738] sm:$0xff]
    %v346 = vld [vmem:[#allocation7 + $0x740] sm:$0xff]
    %v347 = vld [vmem:[#allocation7 + $0x748] sm:$0xff]
    %v348 = vld [vmem:[#allocation7 + $0x750] sm:$0xff]
    %v349 = vld [vmem:[#allocation7 + $0x758] sm:$0xff]
    %v350 = vld [vmem:[#allocation7 + $0x760] sm:$0xff]
    %v351 = vld [vmem:[#allocation7 + $0x768] sm:$0xff]
    %v352 = vld [vmem:[#allocation7 + $0x770] sm:$0xff]
    %v353 = vld [vmem:[#allocation7 + $0x778] sm:$0xff]
    %v354 = vld [vmem:[#allocation7 + $0x780] sm:$0xff]
    %v355 = vld [vmem:[#allocation7 + $0x788] sm:$0xff]
    %v356 = vld [vmem:[#allocation7 + $0x790] sm:$0xff]
    %v357 = vld [vmem:[#allocation7 + $0x798] sm:$0xff]
    %v358 = vld [vmem:[#allocation7 + $0x7a0] sm:$0xff]
    %v359 = vld [vmem:[#allocation7 + $0x7a8] sm:$0xff]
    %v360 = vld [vmem:[#allocation7 + $0x7b0] sm:$0xff]
    %v361 = vld [vmem:[#allocation7 + $0x7b8] sm:$0xff]
    %v362 = vld [vmem:[#allocation7 + $0x7c0] sm:$0xff]
    %v363 = vld [vmem:[#allocation7 + $0x7c8] sm:$0xff]
    %v364 = vld [vmem:[#allocation7 + $0x7d0] sm:$0xff]
    %v365 = vld [vmem:[#allocation7 + $0x7d8] sm:$0xff]
    %v366 = vld [vmem:[#allocation7 + $0x7e0] sm:$0xff]
    %v367 = vld [vmem:[#allocation7 + $0x7e8] sm:$0xff]
    %v368 = vld [vmem:[#allocation7 + $0x7f0] sm:$0xff]
    %v369 = vld [vmem:[#allocation7 + $0x7f8] sm:$0xff]
    %v626 = vunpack.c.l.b16 %v114
    %v627 = vunpack.c.h.b16 %v114
    %v628 = vunpack.c.l.b16 %v115
    %v629 = vunpack.c.h.b16 %v115
    %v630 = vunpack.c.l.b16 %v116
    %v631 = vunpack.c.h.b16 %v116
    %v632 = vunpack.c.l.b16 %v117
    %v633 = vunpack.c.h.b16 %v117
    %v634 = vunpack.c.l.b16 %v118
    %v635 = vunpack.c.h.b16 %v118
    %v636 = vunpack.c.l.b16 %v119
    %v637 = vunpack.c.h.b16 %v119
    %v638 = vunpack.c.l.b16 %v120
    %v639 = vunpack.c.h.b16 %v120
    %v640 = vunpack.c.l.b16 %v121
    %v641 = vunpack.c.h.b16 %v121
    %v642 = vunpack.c.l.b16 %v122
    %v643 = vunpack.c.h.b16 %v122
    %v644 = vunpack.c.l.b16 %v123
    %v645 = vunpack.c.h.b16 %v123
    %v646 = vunpack.c.l.b16 %v124
    %v647 = vunpack.c.h.b16 %v124
    %v648 = vunpack.c.l.b16 %v125
    %v649 = vunpack.c.h.b16 %v125
    %v650 = vunpack.c.l.b16 %v126
    %v651 = vunpack.c.h.b16 %v126
    %v652 = vunpack.c.l.b16 %v127
    %v653 = vunpack.c.h.b16 %v127
    %v654 = vunpack.c.l.b16 %v128
    %v655 = vunpack.c.h.b16 %v128
    %v656 = vunpack.c.l.b16 %v129
    %v657 = vunpack.c.h.b16 %v129
    %v658 = vunpack.c.l.b16 %v130
    %v659 = vunpack.c.h.b16 %v130
    %v660 = vunpack.c.l.b16 %v131
    %v661 = vunpack.c.h.b16 %v131
    %v662 = vunpack.c.l.b16 %v132
    %v663 = vunpack.c.h.b16 %v132
    %v664 = vunpack.c.l.b16 %v133
    %v665 = vunpack.c.h.b16 %v133
    %v666 = vunpack.c.l.b16 %v134
    %v667 = vunpack.c.h.b16 %v134
    %v668 = vunpack.c.l.b16 %v135
    %v669 = vunpack.c.h.b16 %v135
    %v670 = vunpack.c.l.b16 %v136
    %v671 = vunpack.c.h.b16 %v136
    %v672 = vunpack.c.l.b16 %v137
    %v673 = vunpack.c.h.b16 %v137
    %v674 = vunpack.c.l.b16 %v138
    %v675 = vunpack.c.h.b16 %v138
    %v676 = vunpack.c.l.b16 %v139
    %v677 = vunpack.c.h.b16 %v139
    %v678 = vunpack.c.l.b16 %v140
    %v679 = vunpack.c.h.b16 %v140
    %v680 = vunpack.c.l.b16 %v141
    %v681 = vunpack.c.h.b16 %v141
    %v682 = vunpack.c.l.b16 %v142
    %v683 = vunpack.c.h.b16 %v142
    %v684 = vunpack.c.l.b16 %v143
    %v685 = vunpack.c.h.b16 %v143
    %v686 = vunpack.c.l.b16 %v144
    %v687 = vunpack.c.h.b16 %v144
    %v688 = vunpack.c.l.b16 %v145
    %v689 = vunpack.c.h.b16 %v145
    %v690 = vunpack.c.l.b16 %v146
    %v691 = vunpack.c.h.b16 %v146
    %v692 = vunpack.c.l.b16 %v147
    %v693 = vunpack.c.h.b16 %v147
    %v694 = vunpack.c.l.b16 %v148
    %v695 = vunpack.c.h.b16 %v148
    %v696 = vunpack.c.l.b16 %v149
    %v697 = vunpack.c.h.b16 %v149
    %v698 = vunpack.c.l.b16 %v150
    %v699 = vunpack.c.h.b16 %v150
    %v700 = vunpack.c.l.b16 %v151
    %v701 = vunpack.c.h.b16 %v151
    %v702 = vunpack.c.l.b16 %v152
    %v703 = vunpack.c.h.b16 %v152
    %v704 = vunpack.c.l.b16 %v153
    %v705 = vunpack.c.h.b16 %v153
    %v706 = vunpack.c.l.b16 %v154
    %v707 = vunpack.c.h.b16 %v154
    %v708 = vunpack.c.l.b16 %v155
    %v709 = vunpack.c.h.b16 %v155
    %v710 = vunpack.c.l.b16 %v156
    %v711 = vunpack.c.h.b16 %v156
    %v712 = vunpack.c.l.b16 %v157
    %v713 = vunpack.c.h.b16 %v157
    %v714 = vunpack.c.l.b16 %v158
    %v715 = vunpack.c.h.b16 %v158
    %v716 = vunpack.c.l.b16 %v159
    %v717 = vunpack.c.h.b16 %v159
    %v718 = vunpack.c.l.b16 %v160
    %v719 = vunpack.c.h.b16 %v160
    %v720 = vunpack.c.l.b16 %v161
    %v721 = vunpack.c.h.b16 %v161
    %v722 = vunpack.c.l.b16 %v162
    %v723 = vunpack.c.h.b16 %v162
    %v724 = vunpack.c.l.b16 %v163
    %v725 = vunpack.c.h.b16 %v163
    %v726 = vunpack.c.l.b16 %v164
    %v727 = vunpack.c.h.b16 %v164
    %v728 = vunpack.c.l.b16 %v165
    %v729 = vunpack.c.h.b16 %v165
    %v730 = vunpack.c.l.b16 %v166
    %v731 = vunpack.c.h.b16 %v166
    %v732 = vunpack.c.l.b16 %v167
    %v733 = vunpack.c.h.b16 %v167
    %v734 = vunpack.c.l.b16 %v168
    %v735 = vunpack.c.h.b16 %v168
    %v736 = vunpack.c.l.b16 %v169
    %v737 = vunpack.c.h.b16 %v169
    %v738 = vunpack.c.l.b16 %v170
    %v739 = vunpack.c.h.b16 %v170
    %v740 = vunpack.c.l.b16 %v171
    %v741 = vunpack.c.h.b16 %v171
    %v742 = vunpack.c.l.b16 %v172
    %v743 = vunpack.c.h.b16 %v172
    %v744 = vunpack.c.l.b16 %v173
    %v745 = vunpack.c.h.b16 %v173
    %v746 = vunpack.c.l.b16 %v174
    %v747 = vunpack.c.h.b16 %v174
    %v748 = vunpack.c.l.b16 %v175
    %v749 = vunpack.c.h.b16 %v175
    %v750 = vunpack.c.l.b16 %v176
    %v751 = vunpack.c.h.b16 %v176
    %v752 = vunpack.c.l.b16 %v177
    %v753 = vunpack.c.h.b16 %v177
    %v754 = vunpack.c.l.b16 %v178
    %v755 = vunpack.c.h.b16 %v178
    %v756 = vunpack.c.l.b16 %v179
    %v757 = vunpack.c.h.b16 %v179
    %v758 = vunpack.c.l.b16 %v180
    %v759 = vunpack.c.h.b16 %v180
    %v760 = vunpack.c.l.b16 %v181
    %v761 = vunpack.c.h.b16 %v181
    %v762 = vunpack.c.l.b16 %v182
    %v763 = vunpack.c.h.b16 %v182
    %v764 = vunpack.c.l.b16 %v183
    %v765 = vunpack.c.h.b16 %v183
    %v766 = vunpack.c.l.b16 %v184
    %v767 = vunpack.c.h.b16 %v184
    %v768 = vunpack.c.l.b16 %v185
    %v769 = vunpack.c.h.b16 %v185
    %v770 = vunpack.c.l.b16 %v186
    %v771 = vunpack.c.h.b16 %v186
    %v772 = vunpack.c.l.b16 %v187
    %v773 = vunpack.c.h.b16 %v187
    %v774 = vunpack.c.l.b16 %v188
    %v775 = vunpack.c.h.b16 %v188
    %v776 = vunpack.c.l.b16 %v189
    %v777 = vunpack.c.h.b16 %v189
    %v778 = vunpack.c.l.b16 %v190
    %v779 = vunpack.c.h.b16 %v190
    %v780 = vunpack.c.l.b16 %v191
    %v781 = vunpack.c.h.b16 %v191
    %v782 = vunpack.c.l.b16 %v192
    %v783 = vunpack.c.h.b16 %v192
    %v784 = vunpack.c.l.b16 %v193
    %v785 = vunpack.c.h.b16 %v193
    %v786 = vunpack.c.l.b16 %v194
    %v787 = vunpack.c.h.b16 %v194
    %v788 = vunpack.c.l.b16 %v195
    %v789 = vunpack.c.h.b16 %v195
    %v790 = vunpack.c.l.b16 %v196
    %v791 = vunpack.c.h.b16 %v196
    %v792 = vunpack.c.l.b16 %v197
    %v793 = vunpack.c.h.b16 %v197
    %v794 = vunpack.c.l.b16 %v198
    %v795 = vunpack.c.h.b16 %v198
    %v796 = vunpack.c.l.b16 %v199
    %v797 = vunpack.c.h.b16 %v199
    %v798 = vunpack.c.l.b16 %v200
    %v799 = vunpack.c.h.b16 %v200
    %v800 = vunpack.c.l.b16 %v201
    %v801 = vunpack.c.h.b16 %v201
    %v802 = vunpack.c.l.b16 %v202
    %v803 = vunpack.c.h.b16 %v202
    %v804 = vunpack.c.l.b16 %v203
    %v805 = vunpack.c.h.b16 %v203
    %v806 = vunpack.c.l.b16 %v204
    %v807 = vunpack.c.h.b16 %v204
    %v808 = vunpack.c.l.b16 %v205
    %v809 = vunpack.c.h.b16 %v205
    %v810 = vunpack.c.l.b16 %v206
    %v811 = vunpack.c.h.b16 %v206
    %v812 = vunpack.c.l.b16 %v207
    %v813 = vunpack.c.h.b16 %v207
    %v814 = vunpack.c.l.b16 %v208
    %v815 = vunpack.c.h.b16 %v208
    %v816 = vunpack.c.l.b16 %v209
    %v817 = vunpack.c.h.b16 %v209
    %v818 = vunpack.c.l.b16 %v210
    %v819 = vunpack.c.h.b16 %v210
    %v820 = vunpack.c.l.b16 %v211
    %v821 = vunpack.c.h.b16 %v211
    %v822 = vunpack.c.l.b16 %v212
    %v823 = vunpack.c.h.b16 %v212
    %v824 = vunpack.c.l.b16 %v213
    %v825 = vunpack.c.h.b16 %v213
    %v826 = vunpack.c.l.b16 %v214
    %v827 = vunpack.c.h.b16 %v214
    %v828 = vunpack.c.l.b16 %v215
    %v829 = vunpack.c.h.b16 %v215
    %v830 = vunpack.c.l.b16 %v216
    %v831 = vunpack.c.h.b16 %v216
    %v832 = vunpack.c.l.b16 %v217
    %v833 = vunpack.c.h.b16 %v217
    %v834 = vunpack.c.l.b16 %v218
    %v835 = vunpack.c.h.b16 %v218
    %v836 = vunpack.c.l.b16 %v219
    %v837 = vunpack.c.h.b16 %v219
    %v838 = vunpack.c.l.b16 %v220
    %v839 = vunpack.c.h.b16 %v220
    %v840 = vunpack.c.l.b16 %v221
    %v841 = vunpack.c.h.b16 %v221
    %v842 = vunpack.c.l.b16 %v222
    %v843 = vunpack.c.h.b16 %v222
    %v844 = vunpack.c.l.b16 %v223
    %v845 = vunpack.c.h.b16 %v223
    %v846 = vunpack.c.l.b16 %v224
    %v847 = vunpack.c.h.b16 %v224
    %v848 = vunpack.c.l.b16 %v225
    %v849 = vunpack.c.h.b16 %v225
    %v850 = vunpack.c.l.b16 %v226
    %v851 = vunpack.c.h.b16 %v226
    %v852 = vunpack.c.l.b16 %v227
    %v853 = vunpack.c.h.b16 %v227
    %v854 = vunpack.c.l.b16 %v228
    %v855 = vunpack.c.h.b16 %v228
    %v856 = vunpack.c.l.b16 %v229
    %v857 = vunpack.c.h.b16 %v229
    %v858 = vunpack.c.l.b16 %v230
    %v859 = vunpack.c.h.b16 %v230
    %v860 = vunpack.c.l.b16 %v231
    %v861 = vunpack.c.h.b16 %v231
    %v862 = vunpack.c.l.b16 %v232
    %v863 = vunpack.c.h.b16 %v232
    %v864 = vunpack.c.l.b16 %v233
    %v865 = vunpack.c.h.b16 %v233
    %v866 = vunpack.c.l.b16 %v234
    %v867 = vunpack.c.h.b16 %v234
    %v868 = vunpack.c.l.b16 %v235
    %v869 = vunpack.c.h.b16 %v235
    %v870 = vunpack.c.l.b16 %v236
    %v871 = vunpack.c.h.b16 %v236
    %v872 = vunpack.c.l.b16 %v237
    %v873 = vunpack.c.h.b16 %v237
    %v874 = vunpack.c.l.b16 %v238
    %v875 = vunpack.c.h.b16 %v238
    %v876 = vunpack.c.l.b16 %v239
    %v877 = vunpack.c.h.b16 %v239
    %v878 = vunpack.c.l.b16 %v240
    %v879 = vunpack.c.h.b16 %v240
    %v880 = vunpack.c.l.b16 %v241
    %v881 = vunpack.c.h.b16 %v241
    %v882 = vunpack.c.l.b16 %v242
    %v883 = vunpack.c.h.b16 %v242
    %v884 = vunpack.c.l.b16 %v243
    %v885 = vunpack.c.h.b16 %v243
    %v886 = vunpack.c.l.b16 %v244
    %v887 = vunpack.c.h.b16 %v244
    %v888 = vunpack.c.l.b16 %v245
    %v889 = vunpack.c.h.b16 %v245
    %v890 = vunpack.c.l.b16 %v246
    %v891 = vunpack.c.h.b16 %v246
    %v892 = vunpack.c.l.b16 %v247
    %v893 = vunpack.c.h.b16 %v247
    %v894 = vunpack.c.l.b16 %v248
    %v895 = vunpack.c.h.b16 %v248
    %v896 = vunpack.c.l.b16 %v249
    %v897 = vunpack.c.h.b16 %v249
    %v898 = vunpack.c.l.b16 %v250
    %v899 = vunpack.c.h.b16 %v250
    %v900 = vunpack.c.l.b16 %v251
    %v901 = vunpack.c.h.b16 %v251
    %v902 = vunpack.c.l.b16 %v252
    %v903 = vunpack.c.h.b16 %v252
    %v904 = vunpack.c.l.b16 %v253
    %v905 = vunpack.c.h.b16 %v253
    %v906 = vunpack.c.l.b16 %v254
    %v907 = vunpack.c.h.b16 %v254
    %v908 = vunpack.c.l.b16 %v255
    %v909 = vunpack.c.h.b16 %v255
    %v910 = vunpack.c.l.b16 %v256
    %v911 = vunpack.c.h.b16 %v256
    %v912 = vunpack.c.l.b16 %v257
    %v913 = vunpack.c.h.b16 %v257
    %v914 = vunpack.c.l.b16 %v258
    %v915 = vunpack.c.h.b16 %v258
    %v916 = vunpack.c.l.b16 %v259
    %v917 = vunpack.c.h.b16 %v259
    %v918 = vunpack.c.l.b16 %v260
    %v919 = vunpack.c.h.b16 %v260
    %v920 = vunpack.c.l.b16 %v261
    %v921 = vunpack.c.h.b16 %v261
    %v922 = vunpack.c.l.b16 %v262
    %v923 = vunpack.c.h.b16 %v262
    %v924 = vunpack.c.l.b16 %v263
    %v925 = vunpack.c.h.b16 %v263
    %v926 = vunpack.c.l.b16 %v264
    %v927 = vunpack.c.h.b16 %v264
    %v928 = vunpack.c.l.b16 %v265
    %v929 = vunpack.c.h.b16 %v265
    %v930 = vunpack.c.l.b16 %v266
    %v931 = vunpack.c.h.b16 %v266
    %v932 = vunpack.c.l.b16 %v267
    %v933 = vunpack.c.h.b16 %v267
    %v934 = vunpack.c.l.b16 %v268
    %v935 = vunpack.c.h.b16 %v268
    %v936 = vunpack.c.l.b16 %v269
    %v937 = vunpack.c.h.b16 %v269
    %v938 = vunpack.c.l.b16 %v270
    %v939 = vunpack.c.h.b16 %v270
    %v940 = vunpack.c.l.b16 %v271
    %v941 = vunpack.c.h.b16 %v271
    %v942 = vunpack.c.l.b16 %v272
    %v943 = vunpack.c.h.b16 %v272
    %v944 = vunpack.c.l.b16 %v273
    %v945 = vunpack.c.h.b16 %v273
    %v946 = vunpack.c.l.b16 %v274
    %v947 = vunpack.c.h.b16 %v274
    %v948 = vunpack.c.l.b16 %v275
    %v949 = vunpack.c.h.b16 %v275
    %v950 = vunpack.c.l.b16 %v276
    %v951 = vunpack.c.h.b16 %v276
    %v952 = vunpack.c.l.b16 %v277
    %v953 = vunpack.c.h.b16 %v277
    %v954 = vunpack.c.l.b16 %v278
    %v955 = vunpack.c.h.b16 %v278
    %v956 = vunpack.c.l.b16 %v279
    %v957 = vunpack.c.h.b16 %v279
    %v958 = vunpack.c.l.b16 %v280
    %v959 = vunpack.c.h.b16 %v280
    %v960 = vunpack.c.l.b16 %v281
    %v961 = vunpack.c.h.b16 %v281
    %v962 = vunpack.c.l.b16 %v282
    %v963 = vunpack.c.h.b16 %v282
    %v964 = vunpack.c.l.b16 %v283
    %v965 = vunpack.c.h.b16 %v283
    %v966 = vunpack.c.l.b16 %v284
    %v967 = vunpack.c.h.b16 %v284
    %v968 = vunpack.c.l.b16 %v285
    %v969 = vunpack.c.h.b16 %v285
    %v970 = vunpack.c.l.b16 %v286
    %v971 = vunpack.c.h.b16 %v286
    %v972 = vunpack.c.l.b16 %v287
    %v973 = vunpack.c.h.b16 %v287
    %v974 = vunpack.c.l.b16 %v288
    %v975 = vunpack.c.h.b16 %v288
    %v976 = vunpack.c.l.b16 %v289
    %v977 = vunpack.c.h.b16 %v289
    %v978 = vunpack.c.l.b16 %v290
    %v979 = vunpack.c.h.b16 %v290
    %v980 = vunpack.c.l.b16 %v291
    %v981 = vunpack.c.h.b16 %v291
    %v982 = vunpack.c.l.b16 %v292
    %v983 = vunpack.c.h.b16 %v292
    %v984 = vunpack.c.l.b16 %v293
    %v985 = vunpack.c.h.b16 %v293
    %v986 = vunpack.c.l.b16 %v294
    %v987 = vunpack.c.h.b16 %v294
    %v988 = vunpack.c.l.b16 %v295
    %v989 = vunpack.c.h.b16 %v295
    %v990 = vunpack.c.l.b16 %v296
    %v991 = vunpack.c.h.b16 %v296
    %v992 = vunpack.c.l.b16 %v297
    %v993 = vunpack.c.h.b16 %v297
    %v994 = vunpack.c.l.b16 %v298
    %v995 = vunpack.c.h.b16 %v298
    %v996 = vunpack.c.l.b16 %v299
    %v997 = vunpack.c.h.b16 %v299
    %v998 = vunpack.c.l.b16 %v300
    %v999 = vunpack.c.h.b16 %v300
    %v1000 = vunpack.c.l.b16 %v301
    %v1001 = vunpack.c.h.b16 %v301
    %v1002 = vunpack.c.l.b16 %v302
    %v1003 = vunpack.c.h.b16 %v302
    %v1004 = vunpack.c.l.b16 %v303
    %v1005 = vunpack.c.h.b16 %v303
    %v1006 = vunpack.c.l.b16 %v304
    %v1007 = vunpack.c.h.b16 %v304
    %v1008 = vunpack.c.l.b16 %v305
    %v1009 = vunpack.c.h.b16 %v305
    %v1010 = vunpack.c.l.b16 %v306
    %v1011 = vunpack.c.h.b16 %v306
    %v1012 = vunpack.c.l.b16 %v307
    %v1013 = vunpack.c.h.b16 %v307
    %v1014 = vunpack.c.l.b16 %v308
    %v1015 = vunpack.c.h.b16 %v308
    %v1016 = vunpack.c.l.b16 %v309
    %v1017 = vunpack.c.h.b16 %v309
    %v1018 = vunpack.c.l.b16 %v310
    %v1019 = vunpack.c.h.b16 %v310
    %v1020 = vunpack.c.l.b16 %v311
    %v1021 = vunpack.c.h.b16 %v311
    %v1022 = vunpack.c.l.b16 %v312
    %v1023 = vunpack.c.h.b16 %v312
    %v1024 = vunpack.c.l.b16 %v313
    %v1025 = vunpack.c.h.b16 %v313
    %v1026 = vunpack.c.l.b16 %v314
    %v1027 = vunpack.c.h.b16 %v314
    %v1028 = vunpack.c.l.b16 %v315
    %v1029 = vunpack.c.h.b16 %v315
    %v1030 = vunpack.c.l.b16 %v316
    %v1031 = vunpack.c.h.b16 %v316
    %v1032 = vunpack.c.l.b16 %v317
    %v1033 = vunpack.c.h.b16 %v317
    %v1034 = vunpack.c.l.b16 %v318
    %v1035 = vunpack.c.h.b16 %v318
    %v1036 = vunpack.c.l.b16 %v319
    %v1037 = vunpack.c.h.b16 %v319
    %v1038 = vunpack.c.l.b16 %v320
    %v1039 = vunpack.c.h.b16 %v320
    %v1040 = vunpack.c.l.b16 %v321
    %v1041 = vunpack.c.h.b16 %v321
    %v1042 = vunpack.c.l.b16 %v322
    %v1043 = vunpack.c.h.b16 %v322
    %v1044 = vunpack.c.l.b16 %v323
    %v1045 = vunpack.c.h.b16 %v323
    %v1046 = vunpack.c.l.b16 %v324
    %v1047 = vunpack.c.h.b16 %v324
    %v1048 = vunpack.c.l.b16 %v325
    %v1049 = vunpack.c.h.b16 %v325
    %v1050 = vunpack.c.l.b16 %v326
    %v1051 = vunpack.c.h.b16 %v326
    %v1052 = vunpack.c.l.b16 %v327
    %v1053 = vunpack.c.h.b16 %v327
    %v1054 = vunpack.c.l.b16 %v328
    %v1055 = vunpack.c.h.b16 %v328
    %v1056 = vunpack.c.l.b16 %v329
    %v1057 = vunpack.c.h.b16 %v329
    %v1058 = vunpack.c.l.b16 %v330
    %v1059 = vunpack.c.h.b16 %v330
    %v1060 = vunpack.c.l.b16 %v331
    %v1061 = vunpack.c.h.b16 %v331
    %v1062 = vunpack.c.l.b16 %v332
    %v1063 = vunpack.c.h.b16 %v332
    %v1064 = vunpack.c.l.b16 %v333
    %v1065 = vunpack.c.h.b16 %v333
    %v1066 = vunpack.c.l.b16 %v334
    %v1067 = vunpack.c.h.b16 %v334
    %v1068 = vunpack.c.l.b16 %v335
    %v1069 = vunpack.c.h.b16 %v335
    %v1070 = vunpack.c.l.b16 %v336
    %v1071 = vunpack.c.h.b16 %v336
    %v1072 = vunpack.c.l.b16 %v337
    %v1073 = vunpack.c.h.b16 %v337
    %v1074 = vunpack.c.l.b16 %v338
    %v1075 = vunpack.c.h.b16 %v338
    %v1076 = vunpack.c.l.b16 %v339
    %v1077 = vunpack.c.h.b16 %v339
    %v1078 = vunpack.c.l.b16 %v340
    %v1079 = vunpack.c.h.b16 %v340
    %v1080 = vunpack.c.l.b16 %v341
    %v1081 = vunpack.c.h.b16 %v341
    %v1082 = vunpack.c.l.b16 %v342
    %v1083 = vunpack.c.h.b16 %v342
    %v1084 = vunpack.c.l.b16 %v343
    %v1085 = vunpack.c.h.b16 %v343
    %v1086 = vunpack.c.l.b16 %v344
    %v1087 = vunpack.c.h.b16 %v344
    %v1088 = vunpack.c.l.b16 %v345
    %v1089 = vunpack.c.h.b16 %v345
    %v1090 = vunpack.c.l.b16 %v346
    %v1091 = vunpack.c.h.b16 %v346
    %v1092 = vunpack.c.l.b16 %v347
    %v1093 = vunpack.c.h.b16 %v347
    %v1094 = vunpack.c.l.b16 %v348
    %v1095 = vunpack.c.h.b16 %v348
    %v1096 = vunpack.c.l.b16 %v349
    %v1097 = vunpack.c.h.b16 %v349
    %v1098 = vunpack.c.l.b16 %v350
    %v1099 = vunpack.c.h.b16 %v350
    %v1100 = vunpack.c.l.b16 %v351
    %v1101 = vunpack.c.h.b16 %v351
    %v1102 = vunpack.c.l.b16 %v352
    %v1103 = vunpack.c.h.b16 %v352
    %v1104 = vunpack.c.l.b16 %v353
    %v1105 = vunpack.c.h.b16 %v353
    %v1106 = vunpack.c.l.b16 %v354
    %v1107 = vunpack.c.h.b16 %v354
    %v1108 = vunpack.c.l.b16 %v355
    %v1109 = vunpack.c.h.b16 %v355
    %v1110 = vunpack.c.l.b16 %v356
    %v1111 = vunpack.c.h.b16 %v356
    %v1112 = vunpack.c.l.b16 %v357
    %v1113 = vunpack.c.h.b16 %v357
    %v1114 = vunpack.c.l.b16 %v358
    %v1115 = vunpack.c.h.b16 %v358
    %v1116 = vunpack.c.l.b16 %v359
    %v1117 = vunpack.c.h.b16 %v359
    %v1118 = vunpack.c.l.b16 %v360
    %v1119 = vunpack.c.h.b16 %v360
    %v1120 = vunpack.c.l.b16 %v361
    %v1121 = vunpack.c.h.b16 %v361
    %v1122 = vunpack.c.l.b16 %v362
    %v1123 = vunpack.c.h.b16 %v362
    %v1124 = vunpack.c.l.b16 %v363
    %v1125 = vunpack.c.h.b16 %v363
    %v1126 = vunpack.c.l.b16 %v364
    %v1127 = vunpack.c.h.b16 %v364
    %v1128 = vunpack.c.l.b16 %v365
    %v1129 = vunpack.c.h.b16 %v365
    %v1130 = vunpack.c.l.b16 %v366
    %v1131 = vunpack.c.h.b16 %v366
    %v1132 = vunpack.c.l.b16 %v367
    %v1133 = vunpack.c.h.b16 %v367
    %v1134 = vunpack.c.l.b16 %v368
    %v1135 = vunpack.c.h.b16 %v368
    %v1136 = vunpack.c.l.b16 %v369
    %v1137 = vunpack.c.h.b16 %v369
    %v1138 = vpack.c.b16 %v630, %v626
    %v1139 = vpack.c.b16 %v631, %v627
    %v1140 = vpack.c.b16 %v632, %v628
    %v1141 = vpack.c.b16 %v633, %v629
    %v1142 = vpack.c.b16 %v638, %v634
    %v1143 = vpack.c.b16 %v639, %v635
    %v1144 = vpack.c.b16 %v640, %v636
    %v1145 = vpack.c.b16 %v641, %v637
    %v1146 = vpack.c.b16 %v646, %v642
    %v1147 = vpack.c.b16 %v647, %v643
    %v1148 = vpack.c.b16 %v648, %v644
    %v1149 = vpack.c.b16 %v649, %v645
    %v1150 = vpack.c.b16 %v654, %v650
    %v1151 = vpack.c.b16 %v655, %v651
    %v1152 = vpack.c.b16 %v656, %v652
    %v1153 = vpack.c.b16 %v657, %v653
    %v1154 = vpack.c.b16 %v662, %v658
    %v1155 = vpack.c.b16 %v663, %v659
    %v1156 = vpack.c.b16 %v664, %v660
    %v1157 = vpack.c.b16 %v665, %v661
    %v1158 = vpack.c.b16 %v670, %v666
    %v1159 = vpack.c.b16 %v671, %v667
    %v1160 = vpack.c.b16 %v672, %v668
    %v1161 = vpack.c.b16 %v673, %v669
    %v1162 = vpack.c.b16 %v678, %v674
    %v1163 = vpack.c.b16 %v679, %v675
    %v1164 = vpack.c.b16 %v680, %v676
    %v1165 = vpack.c.b16 %v681, %v677
    %v1166 = vpack.c.b16 %v686, %v682
    %v1167 = vpack.c.b16 %v687, %v683
    %v1168 = vpack.c.b16 %v688, %v684
    %v1169 = vpack.c.b16 %v689, %v685
    %v1170 = vpack.c.b16 %v694, %v690
    %v1171 = vpack.c.b16 %v695, %v691
    %v1172 = vpack.c.b16 %v696, %v692
    %v1173 = vpack.c.b16 %v697, %v693
    %v1174 = vpack.c.b16 %v702, %v698
    %v1175 = vpack.c.b16 %v703, %v699
    %v1176 = vpack.c.b16 %v704, %v700
    %v1177 = vpack.c.b16 %v705, %v701
    %v1178 = vpack.c.b16 %v710, %v706
    %v1179 = vpack.c.b16 %v711, %v707
    %v1180 = vpack.c.b16 %v712, %v708
    %v1181 = vpack.c.b16 %v713, %v709
    %v1182 = vpack.c.b16 %v718, %v714
    %v1183 = vpack.c.b16 %v719, %v715
    %v1184 = vpack.c.b16 %v720, %v716
    %v1185 = vpack.c.b16 %v721, %v717
    %v1186 = vpack.c.b16 %v726, %v722
    %v1187 = vpack.c.b16 %v727, %v723
    %v1188 = vpack.c.b16 %v728, %v724
    %v1189 = vpack.c.b16 %v729, %v725
    %v1190 = vpack.c.b16 %v734, %v730
    %v1191 = vpack.c.b16 %v735, %v731
    %v1192 = vpack.c.b16 %v736, %v732
    %v1193 = vpack.c.b16 %v737, %v733
    %v1194 = vpack.c.b16 %v742, %v738
    %v1195 = vpack.c.b16 %v743, %v739
    %v1196 = vpack.c.b16 %v744, %v740
    %v1197 = vpack.c.b16 %v745, %v741
    %v1198 = vpack.c.b16 %v750, %v746
    %v1199 = vpack.c.b16 %v751, %v747
    %v1200 = vpack.c.b16 %v752, %v748
    %v1201 = vpack.c.b16 %v753, %v749
    %v1202 = vpack.c.b16 %v758, %v754
    %v1203 = vpack.c.b16 %v759, %v755
    %v1204 = vpack.c.b16 %v760, %v756
    %v1205 = vpack.c.b16 %v761, %v757
    %v1206 = vpack.c.b16 %v766, %v762
    %v1207 = vpack.c.b16 %v767, %v763
    %v1208 = vpack.c.b16 %v768, %v764
    %v1209 = vpack.c.b16 %v769, %v765
    %v1210 = vpack.c.b16 %v774, %v770
    %v1211 = vpack.c.b16 %v775, %v771
    %v1212 = vpack.c.b16 %v776, %v772
    %v1213 = vpack.c.b16 %v777, %v773
    %v1214 = vpack.c.b16 %v782, %v778
    %v1215 = vpack.c.b16 %v783, %v779
    %v1216 = vpack.c.b16 %v784, %v780
    %v1217 = vpack.c.b16 %v785, %v781
    %v1218 = vpack.c.b16 %v790, %v786
    %v1219 = vpack.c.b16 %v791, %v787
    %v1220 = vpack.c.b16 %v792, %v788
    %v1221 = vpack.c.b16 %v793, %v789
    %v1222 = vpack.c.b16 %v798, %v794
    %v1223 = vpack.c.b16 %v799, %v795
    %v1224 = vpack.c.b16 %v800, %v796
    %v1225 = vpack.c.b16 %v801, %v797
    %v1226 = vpack.c.b16 %v806, %v802
    %v1227 = vpack.c.b16 %v807, %v803
    %v1228 = vpack.c.b16 %v808, %v804
    %v1229 = vpack.c.b16 %v809, %v805
    %v1230 = vpack.c.b16 %v814, %v810
    %v1231 = vpack.c.b16 %v815, %v811
    %v1232 = vpack.c.b16 %v816, %v812
    %v1233 = vpack.c.b16 %v817, %v813
    %v1234 = vpack.c.b16 %v822, %v818
    %v1235 = vpack.c.b16 %v823, %v819
    %v1236 = vpack.c.b16 %v824, %v820
    %v1237 = vpack.c.b16 %v825, %v821
    %v1238 = vpack.c.b16 %v830, %v826
    %v1239 = vpack.c.b16 %v831, %v827
    %v1240 = vpack.c.b16 %v832, %v828
    %v1241 = vpack.c.b16 %v833, %v829
    %v1242 = vpack.c.b16 %v838, %v834
    %v1243 = vpack.c.b16 %v839, %v835
    %v1244 = vpack.c.b16 %v840, %v836
    %v1245 = vpack.c.b16 %v841, %v837
    %v1246 = vpack.c.b16 %v846, %v842
    %v1247 = vpack.c.b16 %v847, %v843
    %v1248 = vpack.c.b16 %v848, %v844
    %v1249 = vpack.c.b16 %v849, %v845
    %v1250 = vpack.c.b16 %v854, %v850
    %v1251 = vpack.c.b16 %v855, %v851
    %v1252 = vpack.c.b16 %v856, %v852
    %v1253 = vpack.c.b16 %v857, %v853
    %v1254 = vpack.c.b16 %v862, %v858
    %v1255 = vpack.c.b16 %v863, %v859
    %v1256 = vpack.c.b16 %v864, %v860
    %v1257 = vpack.c.b16 %v865, %v861
    %v1258 = vpack.c.b16 %v870, %v866
    %v1259 = vpack.c.b16 %v871, %v867
    %v1260 = vpack.c.b16 %v872, %v868
    %v1261 = vpack.c.b16 %v873, %v869
    %v1262 = vpack.c.b16 %v878, %v874
    %v1263 = vpack.c.b16 %v879, %v875
    %v1264 = vpack.c.b16 %v880, %v876
    %v1265 = vpack.c.b16 %v881, %v877
    %v1266 = vpack.c.b16 %v886, %v882
    %v1267 = vpack.c.b16 %v887, %v883
    %v1268 = vpack.c.b16 %v888, %v884
    %v1269 = vpack.c.b16 %v889, %v885
    %v1270 = vpack.c.b16 %v894, %v890
    %v1271 = vpack.c.b16 %v895, %v891
    %v1272 = vpack.c.b16 %v896, %v892
    %v1273 = vpack.c.b16 %v897, %v893
    %v1274 = vpack.c.b16 %v902, %v898
    %v1275 = vpack.c.b16 %v903, %v899
    %v1276 = vpack.c.b16 %v904, %v900
    %v1277 = vpack.c.b16 %v905, %v901
    %v1278 = vpack.c.b16 %v910, %v906
    %v1279 = vpack.c.b16 %v911, %v907
    %v1280 = vpack.c.b16 %v912, %v908
    %v1281 = vpack.c.b16 %v913, %v909
    %v1282 = vpack.c.b16 %v918, %v914
    %v1283 = vpack.c.b16 %v919, %v915
    %v1284 = vpack.c.b16 %v920, %v916
    %v1285 = vpack.c.b16 %v921, %v917
    %v1286 = vpack.c.b16 %v926, %v922
    %v1287 = vpack.c.b16 %v927, %v923
    %v1288 = vpack.c.b16 %v928, %v924
    %v1289 = vpack.c.b16 %v929, %v925
    %v1290 = vpack.c.b16 %v934, %v930
    %v1291 = vpack.c.b16 %v935, %v931
    %v1292 = vpack.c.b16 %v936, %v932
    %v1293 = vpack.c.b16 %v937, %v933
    %v1294 = vpack.c.b16 %v942, %v938
    %v1295 = vpack.c.b16 %v943, %v939
    %v1296 = vpack.c.b16 %v944, %v940
    %v1297 = vpack.c.b16 %v945, %v941
    %v1298 = vpack.c.b16 %v950, %v946
    %v1299 = vpack.c.b16 %v951, %v947
    %v1300 = vpack.c.b16 %v952, %v948
    %v1301 = vpack.c.b16 %v953, %v949
    %v1302 = vpack.c.b16 %v958, %v954
    %v1303 = vpack.c.b16 %v959, %v955
    %v1304 = vpack.c.b16 %v960, %v956
    %v1305 = vpack.c.b16 %v961, %v957
    %v1306 = vpack.c.b16 %v966, %v962
    %v1307 = vpack.c.b16 %v967, %v963
    %v1308 = vpack.c.b16 %v968, %v964
    %v1309 = vpack.c.b16 %v969, %v965
    %v1310 = vpack.c.b16 %v974, %v970
    %v1311 = vpack.c.b16 %v975, %v971
    %v1312 = vpack.c.b16 %v976, %v972
    %v1313 = vpack.c.b16 %v977, %v973
    %v1314 = vpack.c.b16 %v982, %v978
    %v1315 = vpack.c.b16 %v983, %v979
    %v1316 = vpack.c.b16 %v984, %v980
    %v1317 = vpack.c.b16 %v985, %v981
    %v1318 = vpack.c.b16 %v990, %v986
    %v1319 = vpack.c.b16 %v991, %v987
    %v1320 = vpack.c.b16 %v992, %v988
    %v1321 = vpack.c.b16 %v993, %v989
    %v1322 = vpack.c.b16 %v998, %v994
    %v1323 = vpack.c.b16 %v999, %v995
    %v1324 = vpack.c.b16 %v1000, %v996
    %v1325 = vpack.c.b16 %v1001, %v997
    %v1326 = vpack.c.b16 %v1006, %v1002
    %v1327 = vpack.c.b16 %v1007, %v1003
    %v1328 = vpack.c.b16 %v1008, %v1004
    %v1329 = vpack.c.b16 %v1009, %v1005
    %v1330 = vpack.c.b16 %v1014, %v1010
    %v1331 = vpack.c.b16 %v1015, %v1011
    %v1332 = vpack.c.b16 %v1016, %v1012
    %v1333 = vpack.c.b16 %v1017, %v1013
    %v1334 = vpack.c.b16 %v1022, %v1018
    %v1335 = vpack.c.b16 %v1023, %v1019
    %v1336 = vpack.c.b16 %v1024, %v1020
    %v1337 = vpack.c.b16 %v1025, %v1021
    %v1338 = vpack.c.b16 %v1030, %v1026
    %v1339 = vpack.c.b16 %v1031, %v1027
    %v1340 = vpack.c.b16 %v1032, %v1028
    %v1341 = vpack.c.b16 %v1033, %v1029
    %v1342 = vpack.c.b16 %v1038, %v1034
    %v1343 = vpack.c.b16 %v1039, %v1035
    %v1344 = vpack.c.b16 %v1040, %v1036
    %v1345 = vpack.c.b16 %v1041, %v1037
    %v1346 = vpack.c.b16 %v1046, %v1042
    %v1347 = vpack.c.b16 %v1047, %v1043
    %v1348 = vpack.c.b16 %v1048, %v1044
    %v1349 = vpack.c.b16 %v1049, %v1045
    %v1350 = vpack.c.b16 %v1054, %v1050
    %v1351 = vpack.c.b16 %v1055, %v1051
    %v1352 = vpack.c.b16 %v1056, %v1052
    %v1353 = vpack.c.b16 %v1057, %v1053
    %v1354 = vpack.c.b16 %v1062, %v1058
    %v1355 = vpack.c.b16 %v1063, %v1059
    %v1356 = vpack.c.b16 %v1064, %v1060
    %v1357 = vpack.c.b16 %v1065, %v1061
    %v1358 = vpack.c.b16 %v1070, %v1066
    %v1359 = vpack.c.b16 %v1071, %v1067
    %v1360 = vpack.c.b16 %v1072, %v1068
    %v1361 = vpack.c.b16 %v1073, %v1069
    %v1362 = vpack.c.b16 %v1078, %v1074
    %v1363 = vpack.c.b16 %v1079, %v1075
    %v1364 = vpack.c.b16 %v1080, %v1076
    %v1365 = vpack.c.b16 %v1081, %v1077
    %v1366 = vpack.c.b16 %v1086, %v1082
    %v1367 = vpack.c.b16 %v1087, %v1083
    %v1368 = vpack.c.b16 %v1088, %v1084
    %v1369 = vpack.c.b16 %v1089, %v1085
    %v1370 = vpack.c.b16 %v1094, %v1090
    %v1371 = vpack.c.b16 %v1095, %v1091
    %v1372 = vpack.c.b16 %v1096, %v1092
    %v1373 = vpack.c.b16 %v1097, %v1093
    %v1374 = vpack.c.b16 %v1102, %v1098
    %v1375 = vpack.c.b16 %v1103, %v1099
    %v1376 = vpack.c.b16 %v1104, %v1100
    %v1377 = vpack.c.b16 %v1105, %v1101
    %v1378 = vpack.c.b16 %v1110, %v1106
    %v1379 = vpack.c.b16 %v1111, %v1107
    %v1380 = vpack.c.b16 %v1112, %v1108
    %v1381 = vpack.c.b16 %v1113, %v1109
    %v1382 = vpack.c.b16 %v1118, %v1114
    %v1383 = vpack.c.b16 %v1119, %v1115
    %v1384 = vpack.c.b16 %v1120, %v1116
    %v1385 = vpack.c.b16 %v1121, %v1117
    %v1386 = vpack.c.b16 %v1126, %v1122
    %v1387 = vpack.c.b16 %v1127, %v1123
    %v1388 = vpack.c.b16 %v1128, %v1124
    %v1389 = vpack.c.b16 %v1129, %v1125
    %v1390 = vpack.c.b16 %v1134, %v1130
    %v1391 = vpack.c.b16 %v1135, %v1131
    %v1392 = vpack.c.b16 %v1136, %v1132
    %v1393 = vpack.c.b16 %v1137, %v1133
    %1650 = vmatprep.subr.bf16.mxu0 %v1167
    %1651 = vmatpush1.bf16.msra.mxu0 %v1166
    %1652 = vmatprep.subr.bf16.mxu0 %v1163
    %1653 = vmatpush1.bf16.msra.mxu0 %v1162
    %1654 = vmatprep.subr.bf16.mxu0 %v1159
    %1655 = vmatpush1.bf16.msra.mxu0 %v1158
    %1656 = vmatprep.subr.bf16.mxu0 %v1155
    %1657 = vmatpush1.bf16.msra.mxu0 %v1154
    %1658 = vmatprep.subr.bf16.mxu0 %v1151
    %1659 = vmatpush1.bf16.msra.mxu0 %v1150
    %1660 = vmatprep.subr.bf16.mxu0 %v1147
    %1661 = vmatpush1.bf16.msra.mxu0 %v1146
    %1662 = vmatprep.subr.bf16.mxu0 %v1143
    %1663 = vmatpush1.bf16.msra.mxu0 %v1142
    %1664 = vmatprep.subr.bf16.mxu0 %v1139
    %1665 = vmatpush1.bf16.msra.mxu0 %v1138
    %1666 = vmatprep.subr.bf16.mxu0 %v1199
    %1667 = vmatpush2.bf16.msra.mxu0 %v1198
    %1668 = vmatprep.subr.bf16.mxu0 %v1195
    %1669 = vmatpush2.bf16.msra.mxu0 %v1194
    %1670 = vmatprep.subr.bf16.mxu0 %v1191
    %1671 = vmatpush2.bf16.msra.mxu0 %v1190
    %1672 = vmatprep.subr.bf16.mxu0 %v1187
    %1673 = vmatpush2.bf16.msra.mxu0 %v1186
    %1674 = vmatprep.subr.bf16.mxu0 %v1183
    %1675 = vmatpush2.bf16.msra.mxu0 %v1182
    %1676 = vmatprep.subr.bf16.mxu0 %v1179
    %1677 = vmatpush2.bf16.msra.mxu0 %v1178
    %1678 = vmatprep.subr.bf16.mxu0 %v1175
    %1679 = vmatpush2.bf16.msra.mxu0 %v1174
    %1680 = vmatprep.subr.bf16.mxu0 %v1171
    %1681 = vmatpush2.bf16.msra.mxu0 %v1170
    %1682 = vmatprep.mubr.bf16.mxu0 %v99
    %1683 = vmatmul.mubr.bf16.gmra.mxu0 %v98
    %v1684 = vpop.f32.mrf.mxu0
    %v1685 = vadd.f32 0.0, %v1684
    %v1686 = vpop.f32.mrf.mxu0
    %v1687 = vadd.f32 0.0, %v1686
    %v1688 = vpop.f32.mrf.mxu0
    %v1689 = vadd.f32 0.0, %v1688
    %v1690 = vpop.f32.mrf.mxu0
    %v1691 = vadd.f32 0.0, %v1690
    %1692 = vdwg.mxu0
    %1693 = vmatprep.subr.bf16.mxu0 %v1231
    %1694 = vmatpush1.bf16.msra.mxu0 %v1230
    %1695 = vmatprep.subr.bf16.mxu0 %v1227
    %1696 = vmatpush1.bf16.msra.mxu0 %v1226
    %1697 = vmatprep.subr.bf16.mxu0 %v1223
    %1698 = vmatpush1.bf16.msra.mxu0 %v1222
    %1699 = vmatprep.subr.bf16.mxu0 %v1219
    %1700 = vmatpush1.bf16.msra.mxu0 %v1218
    %1701 = vmatprep.subr.bf16.mxu0 %v1215
    %1702 = vmatpush1.bf16.msra.mxu0 %v1214
    %1703 = vmatprep.subr.bf16.mxu0 %v1211
    %1704 = vmatpush1.bf16.msra.mxu0 %v1210
    %1705 = vmatprep.subr.bf16.mxu0 %v1207
    %1706 = vmatpush1.bf16.msra.mxu0 %v1206
    %1707 = vmatprep.subr.bf16.mxu0 %v1203
    %1708 = vmatpush1.bf16.msra.mxu0 %v1202
    %1709 = vmatprep.subr.bf16.mxu0 %v1263
    %1710 = vmatpush2.bf16.msra.mxu0 %v1262
    %1711 = vmatprep.subr.bf16.mxu0 %v1259
    %1712 = vmatpush2.bf16.msra.mxu0 %v1258
    %1713 = vmatprep.subr.bf16.mxu0 %v1255
    %1714 = vmatpush2.bf16.msra.mxu0 %v1254
    %1715 = vmatprep.subr.bf16.mxu0 %v1251
    %1716 = vmatpush2.bf16.msra.mxu0 %v1250
    %1717 = vmatprep.subr.bf16.mxu0 %v1247
    %1718 = vmatpush2.bf16.msra.mxu0 %v1246
    %1719 = vmatprep.subr.bf16.mxu0 %v1243
    %1720 = vmatpush2.bf16.msra.mxu0 %v1242
    %1721 = vmatprep.subr.bf16.mxu0 %v1239
    %1722 = vmatpush2.bf16.msra.mxu0 %v1238
    %1723 = vmatprep.subr.bf16.mxu0 %v1235
    %1724 = vmatpush2.bf16.msra.mxu0 %v1234
    %1725 = vmatprep.mubr.bf16.mxu0 %v101
    %1726 = vmatmul.mubr.bf16.gmra.mxu0 %v100
    %v1727 = vpop.f32.mrf.mxu0
    %v1728 = vadd.f32 %v1685, %v1727
    %v1729 = vpop.f32.mrf.mxu0
    %v1730 = vadd.f32 %v1687, %v1729
    %v1731 = vpop.f32.mrf.mxu0
    %v1732 = vadd.f32 %v1689, %v1731
    %v1733 = vpop.f32.mrf.mxu0
    %v1734 = vadd.f32 %v1691, %v1733
    %1735 = vdwg.mxu0
    %1736 = vmatprep.subr.bf16.mxu0 %v1295
    %1737 = vmatpush1.bf16.msra.mxu0 %v1294
    %1738 = vmatprep.subr.bf16.mxu0 %v1291
    %1739 = vmatpush1.bf16.msra.mxu0 %v1290
    %1740 = vmatprep.subr.bf16.mxu0 %v1287
    %1741 = vmatpush1.bf16.msra.mxu0 %v1286
    %1742 = vmatprep.subr.bf16.mxu0 %v1283
    %1743 = vmatpush1.bf16.msra.mxu0 %v1282
    %1744 = vmatprep.subr.bf16.mxu0 %v1279
    %1745 = vmatpush1.bf16.msra.mxu0 %v1278
    %1746 = vmatprep.subr.bf16.mxu0 %v1275
    %1747 = vmatpush1.bf16.msra.mxu0 %v1274
    %1748 = vmatprep.subr.bf16.mxu0 %v1271
    %1749 = vmatpush1.bf16.msra.mxu0 %v1270
    %1750 = vmatprep.subr.bf16.mxu0 %v1267
    %1751 = vmatpush1.bf16.msra.mxu0 %v1266
    %1752 = vmatprep.subr.bf16.mxu0 %v1327
    %1753 = vmatpush2.bf16.msra.mxu0 %v1326
    %1754 = vmatprep.subr.bf16.mxu0 %v1323
    %1755 = vmatpush2.bf16.msra.mxu0 %v1322
    %1756 = vmatprep.subr.bf16.mxu0 %v1319
    %1757 = vmatpush2.bf16.msra.mxu0 %v1318
    %1758 = vmatprep.subr.bf16.mxu0 %v1315
    %1759 = vmatpush2.bf16.msra.mxu0 %v1314
    %1760 = vmatprep.subr.bf16.mxu0 %v1311
    %1761 = vmatpush2.bf16.msra.mxu0 %v1310
    %1762 = vmatprep.subr.bf16.mxu0 %v1307
    %1763 = vmatpush2.bf16.msra.mxu0 %v1306
    %1764 = vmatprep.subr.bf16.mxu0 %v1303
    %1765 = vmatpush2.bf16.msra.mxu0 %v1302
    %1766 = vmatprep.subr.bf16.mxu0 %v1299
    %1767 = vmatpush2.bf16.msra.mxu0 %v1298
    %1768 = vmatprep.mubr.bf16.mxu0 %v103
    %1769 = vmatmul.mubr.bf16.gmra.mxu0 %v102
    %v1770 = vpop.f32.mrf.mxu0
    %v1771 = vadd.f32 %v1728, %v1770
    %v1772 = vpop.f32.mrf.mxu0
    %v1773 = vadd.f32 %v1730, %v1772
    %v1774 = vpop.f32.mrf.mxu0
    %v1775 = vadd.f32 %v1732, %v1774
    %v1776 = vpop.f32.mrf.mxu0
    %v1777 = vadd.f32 %v1734, %v1776
    %1778 = vdwg.mxu0
    %1779 = vmatprep.subr.bf16.mxu0 %v1359
    %1780 = vmatpush1.bf16.msra.mxu0 %v1358
    %1781 = vmatprep.subr.bf16.mxu0 %v1355
    %1782 = vmatpush1.bf16.msra.mxu0 %v1354
    %1783 = vmatprep.subr.bf16.mxu0 %v1351
    %1784 = vmatpush1.bf16.msra.mxu0 %v1350
    %1785 = vmatprep.subr.bf16.mxu0 %v1347
    %1786 = vmatpush1.bf16.msra.mxu0 %v1346
    %1787 = vmatprep.subr.bf16.mxu0 %v1343
    %1788 = vmatpush1.bf16.msra.mxu0 %v1342
    %1789 = vmatprep.subr.bf16.mxu0 %v1339
    %1790 = vmatpush1.bf16.msra.mxu0 %v1338
    %1791 = vmatprep.subr.bf16.mxu0 %v1335
    %1792 = vmatpush1.bf16.msra.mxu0 %v1334
    %1793 = vmatprep.subr.bf16.mxu0 %v1331
    %1794 = vmatpush1.bf16.msra.mxu0 %v1330
    %1795 = vmatprep.subr.bf16.mxu0 %v1391
    %1796 = vmatpush2.bf16.msra.mxu0 %v1390
    %1797 = vmatprep.subr.bf16.mxu0 %v1387
    %1798 = vmatpush2.bf16.msra.mxu0 %v1386
    %1799 = vmatprep.subr.bf16.mxu0 %v1383
    %1800 = vmatpush2.bf16.msra.mxu0 %v1382
    %1801 = vmatprep.subr.bf16.mxu0 %v1379
    %1802 = vmatpush2.bf16.msra.mxu0 %v1378
    %1803 = vmatprep.subr.bf16.mxu0 %v1375
    %1804 = vmatpush2.bf16.msra.mxu0 %v1374
    %1805 = vmatprep.subr.bf16.mxu0 %v1371
    %1806 = vmatpush2.bf16.msra.mxu0 %v1370
    %1807 = vmatprep.subr.bf16.mxu0 %v1367
    %1808 = vmatpush2.bf16.msra.mxu0 %v1366
    %1809 = vmatprep.subr.bf16.mxu0 %v1363
    %1810 = vmatpush2.bf16.msra.mxu0 %v1362
    %1811 = vmatprep.mubr.bf16.mxu0 %v105
    %1812 = vmatmul.mubr.bf16.gmra.mxu0 %v104
    %v1813 = vpop.f32.mrf.mxu0
    %v1814 = vadd.f32 %v1771, %v1813
    %v1815 = vpop.f32.mrf.mxu0
    %v1816 = vadd.f32 %v1773, %v1815
    %v1817 = vpop.f32.mrf.mxu0
    %v1818 = vadd.f32 %v1775, %v1817
    %v1819 = vpop.f32.mrf.mxu0
    %v1820 = vadd.f32 %v1777, %v1819
    %1821 = vdwg.mxu0
    %1822 = vmatprep.subr.bf16.mxu0 %v1169
    %1823 = vmatpush1.bf16.msra.mxu0 %v1168
    %1824 = vmatprep.subr.bf16.mxu0 %v1165
    %1825 = vmatpush1.bf16.msra.mxu0 %v1164
    %1826 = vmatprep.subr.bf16.mxu0 %v1161
    %1827 = vmatpush1.bf16.msra.mxu0 %v1160
    %1828 = vmatprep.subr.bf16.mxu0 %v1157
    %1829 = vmatpush1.bf16.msra.mxu0 %v1156
    %1830 = vmatprep.subr.bf16.mxu0 %v1153
    %1831 = vmatpush1.bf16.msra.mxu0 %v1152
    %1832 = vmatprep.subr.bf16.mxu0 %v1149
    %1833 = vmatpush1.bf16.msra.mxu0 %v1148
    %1834 = vmatprep.subr.bf16.mxu0 %v1145
    %1835 = vmatpush1.bf16.msra.mxu0 %v1144
    %1836 = vmatprep.subr.bf16.mxu0 %v1141
    %1837 = vmatpush1.bf16.msra.mxu0 %v1140
    %1838 = vmatprep.subr.bf16.mxu0 %v1201
    %1839 = vmatpush2.bf16.msra.mxu0 %v1200
    %1840 = vmatprep.subr.bf16.mxu0 %v1197
    %1841 = vmatpush2.bf16.msra.mxu0 %v1196
    %1842 = vmatprep.subr.bf16.mxu0 %v1193
    %1843 = vmatpush2.bf16.msra.mxu0 %v1192
    %1844 = vmatprep.subr.bf16.mxu0 %v1189
    %1845 = vmatpush2.bf16.msra.mxu0 %v1188
    %1846 = vmatprep.subr.bf16.mxu0 %v1185
    %1847 = vmatpush2.bf16.msra.mxu0 %v1184
    %1848 = vmatprep.subr.bf16.mxu0 %v1181
    %1849 = vmatpush2.bf16.msra.mxu0 %v1180
    %1850 = vmatprep.subr.bf16.mxu0 %v1177
    %1851 = vmatpush2.bf16.msra.mxu0 %v1176
    %1852 = vmatprep.subr.bf16.mxu0 %v1173
    %1853 = vmatpush2.bf16.msra.mxu0 %v1172
    %1854 = vmatprep.mubr.bf16.mxu0 %v99
    %1855 = vmatmul.mubr.bf16.gmra.mxu0 %v98
    %v1856 = vpop.f32.mrf.mxu0
    %v1857 = vadd.f32 0.0, %v1856
    %v1858 = vpop.f32.mrf.mxu0
    %v1859 = vadd.f32 0.0, %v1858
    %v1860 = vpop.f32.mrf.mxu0
    %v1861 = vadd.f32 0.0, %v1860
    %v1862 = vpop.f32.mrf.mxu0
    %v1863 = vadd.f32 0.0, %v1862
    %1864 = vdwg.mxu0
    %1865 = vmatprep.subr.bf16.mxu0 %v1233
    %1866 = vmatpush1.bf16.msra.mxu0 %v1232
    %1867 = vmatprep.subr.bf16.mxu0 %v1229
    %1868 = vmatpush1.bf16.msra.mxu0 %v1228
    %1869 = vmatprep.subr.bf16.mxu0 %v1225
    %1870 = vmatpush1.bf16.msra.mxu0 %v1224
    %1871 = vmatprep.subr.bf16.mxu0 %v1221
    %1872 = vmatpush1.bf16.msra.mxu0 %v1220
    %1873 = vmatprep.subr.bf16.mxu0 %v1217
    %1874 = vmatpush1.bf16.msra.mxu0 %v1216
    %1875 = vmatprep.subr.bf16.mxu0 %v1213
    %1876 = vmatpush1.bf16.msra.mxu0 %v1212
    %1877 = vmatprep.subr.bf16.mxu0 %v1209
    %1878 = vmatpush1.bf16.msra.mxu0 %v1208
    %1879 = vmatprep.subr.bf16.mxu0 %v1205
    %1880 = vmatpush1.bf16.msra.mxu0 %v1204
    %1881 = vmatprep.subr.bf16.mxu0 %v1265
    %1882 = vmatpush2.bf16.msra.mxu0 %v1264
    %1883 = vmatprep.subr.bf16.mxu0 %v1261
    %1884 = vmatpush2.bf16.msra.mxu0 %v1260
    %1885 = vmatprep.subr.bf16.mxu0 %v1257
    %1886 = vmatpush2.bf16.msra.mxu0 %v1256
    %1887 = vmatprep.subr.bf16.mxu0 %v1253
    %1888 = vmatpush2.bf16.msra.mxu0 %v1252
    %1889 = vmatprep.subr.bf16.mxu0 %v1249
    %1890 = vmatpush2.bf16.msra.mxu0 %v1248
    %1891 = vmatprep.subr.bf16.mxu0 %v1245
    %1892 = vmatpush2.bf16.msra.mxu0 %v1244
    %1893 = vmatprep.subr.bf16.mxu0 %v1241
    %1894 = vmatpush2.bf16.msra.mxu0 %v1240
    %1895 = vmatprep.subr.bf16.mxu0 %v1237
    %1896 = vmatpush2.bf16.msra.mxu0 %v1236
    %1897 = vmatprep.mubr.bf16.mxu0 %v101
    %1898 = vmatmul.mubr.bf16.gmra.mxu0 %v100
    %v1899 = vpop.f32.mrf.mxu0
    %v1900 = vadd.f32 %v1857, %v1899
    %v1901 = vpop.f32.mrf.mxu0
    %v1902 = vadd.f32 %v1859, %v1901
    %v1903 = vpop.f32.mrf.mxu0
    %v1904 = vadd.f32 %v1861, %v1903
    %v1905 = vpop.f32.mrf.mxu0
    %v1906 = vadd.f32 %v1863, %v1905
    %1907 = vdwg.mxu0
    %1908 = vmatprep.subr.bf16.mxu0 %v1297
    %1909 = vmatpush1.bf16.msra.mxu0 %v1296
    %1910 = vmatprep.subr.bf16.mxu0 %v1293
    %1911 = vmatpush1.bf16.msra.mxu0 %v1292
    %1912 = vmatprep.subr.bf16.mxu0 %v1289
    %1913 = vmatpush1.bf16.msra.mxu0 %v1288
    %1914 = vmatprep.subr.bf16.mxu0 %v1285
    %1915 = vmatpush1.bf16.msra.mxu0 %v1284
    %1916 = vmatprep.subr.bf16.mxu0 %v1281
    %1917 = vmatpush1.bf16.msra.mxu0 %v1280
    %1918 = vmatprep.subr.bf16.mxu0 %v1277
    %1919 = vmatpush1.bf16.msra.mxu0 %v1276
    %1920 = vmatprep.subr.bf16.mxu0 %v1273
    %1921 = vmatpush1.bf16.msra.mxu0 %v1272
    %1922 = vmatprep.subr.bf16.mxu0 %v1269
    %1923 = vmatpush1.bf16.msra.mxu0 %v1268
    %1924 = vmatprep.subr.bf16.mxu0 %v1329
    %1925 = vmatpush2.bf16.msra.mxu0 %v1328
    %1926 = vmatprep.subr.bf16.mxu0 %v1325
    %1927 = vmatpush2.bf16.msra.mxu0 %v1324
    %1928 = vmatprep.subr.bf16.mxu0 %v1321
    %1929 = vmatpush2.bf16.msra.mxu0 %v1320
    %1930 = vmatprep.subr.bf16.mxu0 %v1317
    %1931 = vmatpush2.bf16.msra.mxu0 %v1316
    %1932 = vmatprep.subr.bf16.mxu0 %v1313
    %1933 = vmatpush2.bf16.msra.mxu0 %v1312
    %1934 = vmatprep.subr.bf16.mxu0 %v1309
    %1935 = vmatpush2.bf16.msra.mxu0 %v1308
    %1936 = vmatprep.subr.bf16.mxu0 %v1305
    %1937 = vmatpush2.bf16.msra.mxu0 %v1304
    %1938 = vmatprep.subr.bf16.mxu0 %v1301
    %1939 = vmatpush2.bf16.msra.mxu0 %v1300
    %1940 = vmatprep.mubr.bf16.mxu0 %v103
    %1941 = vmatmul.mubr.bf16.gmra.mxu0 %v102
    %v1942 = vpop.f32.mrf.mxu0
    %v1943 = vadd.f32 %v1900, %v1942
    %v1944 = vpop.f32.mrf.mxu0
    %v1945 = vadd.f32 %v1902, %v1944
    %v1946 = vpop.f32.mrf.mxu0
    %v1947 = vadd.f32 %v1904, %v1946
    %v1948 = vpop.f32.mrf.mxu0
    %v1949 = vadd.f32 %v1906, %v1948
    %1950 = vdwg.mxu0
    %1951 = vmatprep.subr.bf16.mxu0 %v1361
    %1952 = vmatpush1.bf16.msra.mxu0 %v1360
    %1953 = vmatprep.subr.bf16.mxu0 %v1357
    %1954 = vmatpush1.bf16.msra.mxu0 %v1356
    %1955 = vmatprep.subr.bf16.mxu0 %v1353
    %1956 = vmatpush1.bf16.msra.mxu0 %v1352
    %1957 = vmatprep.subr.bf16.mxu0 %v1349
    %1958 = vmatpush1.bf16.msra.mxu0 %v1348
    %1959 = vmatprep.subr.bf16.mxu0 %v1345
    %1960 = vmatpush1.bf16.msra.mxu0 %v1344
    %1961 = vmatprep.subr.bf16.mxu0 %v1341
    %1962 = vmatpush1.bf16.msra.mxu0 %v1340
    %1963 = vmatprep.subr.bf16.mxu0 %v1337
    %1964 = vmatpush1.bf16.msra.mxu0 %v1336
    %1965 = vmatprep.subr.bf16.mxu0 %v1333
    %1966 = vmatpush1.bf16.msra.mxu0 %v1332
    %1967 = vmatprep.subr.bf16.mxu0 %v1393
    %1968 = vmatpush2.bf16.msra.mxu0 %v1392
    %1969 = vmatprep.subr.bf16.mxu0 %v1389
    %1970 = vmatpush2.bf16.msra.mxu0 %v1388
    %1971 = vmatprep.subr.bf16.mxu0 %v1385
    %1972 = vmatpush2.bf16.msra.mxu0 %v1384
    %1973 = vmatprep.subr.bf16.mxu0 %v1381
    %1974 = vmatpush2.bf16.msra.mxu0 %v1380
    %1975 = vmatprep.subr.bf16.mxu0 %v1377
    %1976 = vmatpush2.bf16.msra.mxu0 %v1376
    %1977 = vmatprep.subr.bf16.mxu0 %v1373
    %1978 = vmatpush2.bf16.msra.mxu0 %v1372
    %1979 = vmatprep.subr.bf16.mxu0 %v1369
    %1980 = vmatpush2.bf16.msra.mxu0 %v1368
    %1981 = vmatprep.subr.bf16.mxu0 %v1365
    %1982 = vmatpush2.bf16.msra.mxu0 %v1364
    %1983 = vmatprep.mubr.bf16.mxu0 %v105
    %1984 = vmatmul.mubr.bf16.gmra.mxu0 %v104
    %v1985 = vpop.f32.mrf.mxu0
    %v1986 = vadd.f32 %v1943, %v1985
    %v1987 = vpop.f32.mrf.mxu0
    %v1988 = vadd.f32 %v1945, %v1987
    %v1989 = vpop.f32.mrf.mxu0
    %v1990 = vadd.f32 %v1947, %v1989
    %v1991 = vpop.f32.mrf.mxu0
    %v1992 = vadd.f32 %v1949, %v1991
    %1993 = vdwg.mxu0
    %v1994 = vadd.f32 %v106, %v1814
    %v1995 = vadd.f32 %v107, %v1816
    %v1996 = vadd.f32 %v108, %v1986
    %v1997 = vadd.f32 %v109, %v1988
    %v1998 = vadd.f32 %v110, %v1818
    %v1999 = vadd.f32 %v111, %v1820
    %v2000 = vadd.f32 %v112, %v1990
    %v2001 = vadd.f32 %v113, %v1992
    %2002 = vst [vmem:[#allocation2] sm:$0xff] %v1994
    %2003 = vst [vmem:[#allocation2 + $0x8] sm:$0xff] %v1995
    %2004 = vst [vmem:[#allocation2 + $0x10] sm:$0xff] %v1996
    %2005 = vst [vmem:[#allocation2 + $0x18] sm:$0xff] %v1997
    %2006 = vst [vmem:[#allocation2 + $0x20] sm:$0xff] %v1998
    %2007 = vst [vmem:[#allocation2 + $0x28] sm:$0xff] %v1999
    %2008 = vst [vmem:[#allocation2 + $0x30] sm:$0xff] %v2000
    %2009 = vst [vmem:[#allocation2 + $0x38] sm:$0xff] %v2001
    // Predicated region
    $region46: #{tpu_custom_call.1} parent=1 // pred_check
      %p2010 = pneg %p70
    $region47: #{tpu_custom_call.1} parent=1 // pred_check_branch
      %2012 = sbr.rel (%p2010) target = $region49
    $region48: #{tpu_custom_call.1} parent=1 // pred_region
      %v2013 = vld [vmem:[#allocation2] sm:$0xff]
      %v2014 = vld [vmem:[#allocation2 + $0x8] sm:$0xff]
      %v2015 = vld [vmem:[#allocation2 + $0x10] sm:$0xff]
      %v2016 = vld [vmem:[#allocation2 + $0x18] sm:$0xff]
      %v2017 = vld [vmem:[#allocation2 + $0x20] sm:$0xff]
      %v2018 = vld [vmem:[#allocation2 + $0x28] sm:$0xff]
      %v2019 = vld [vmem:[#allocation2 + $0x30] sm:$0xff]
      %v2020 = vld [vmem:[#allocation2 + $0x38] sm:$0xff]
      %v2021 = vld [vmem:[%s2] sm:$0xf]
      %v2023 = vlaneseq
      %v2024 = vshrl.u32 %v2023, 7
      %v2025 = vsub.s32 0, %v2024
      %v2026 = vrot.slane %v2021, %v2025
      %v2027 = vlaneseq
      %v2028 = vshrl.u32 %v2027, 7
      %v2029 = vsub.s32 1, %v2028
      %v2030 = vrot.slane %v2021, %v2029
      %v2031 = vlaneseq
      %v2032 = vshrl.u32 %v2031, 7
      %v2033 = vsub.s32 2, %v2032
      %v2034 = vrot.slane %v2021, %v2033
      %v2035 = vlaneseq
      %v2036 = vshrl.u32 %v2035, 7
      %v2037 = vsub.s32 3, %v2036
      %v2038 = vrot.slane %v2021, %v2037
      %v2043 = vadd.f32 %v2013, %v2026
      %v2044 = vadd.f32 %v2014, %v2030
      %v2045 = vadd.f32 %v2015, %v2034
      %v2046 = vadd.f32 %v2016, %v2038
      %v2047 = vadd.f32 %v2017, %v2026
      %v2048 = vadd.f32 %v2018, %v2030
      %v2049 = vadd.f32 %v2019, %v2034
      %v2050 = vadd.f32 %v2020, %v2038
      %v2051 = vmul.f32 %v2043, 0.2
      %v2052 = vmul.f32 %v2044, 0.2
      %v2053 = vmul.f32 %v2045, 0.2
      %v2054 = vmul.f32 %v2046, 0.2
      %v2055 = vmul.f32 %v2047, 0.2
      %v2056 = vmul.f32 %v2048, 0.2
      %v2057 = vmul.f32 %v2049, 0.2
      %v2058 = vmul.f32 %v2050, 0.2
      %v2059 = vmax.f32 %v2043, %v2051
      %v2060 = vmax.f32 %v2044, %v2052
      %v2061 = vmax.f32 %v2045, %v2053
      %v2062 = vmax.f32 %v2046, %v2054
      %v2063 = vmax.f32 %v2047, %v2055
      %v2064 = vmax.f32 %v2048, %v2056
      %v2065 = vmax.f32 %v2049, %v2057
      %v2066 = vmax.f32 %v2050, %v2058
      %v2067 = vpack.c.bf16 %v2063, %v2059
      %v2068 = vpack.c.bf16 %v2064, %v2060
      %v2069 = vpack.c.bf16 %v2065, %v2061
      %v2070 = vpack.c.bf16 %v2066, %v2062
      %v2071 = vld [vmem:[#allocation9] sm:$0xff]
      %v2072 = vld [vmem:[#allocation9 + $0x8] sm:$0xff]
      %v2073 = vld [vmem:[#allocation9 + $0x10] sm:$0xff]
      %v2074 = vld [vmem:[#allocation9 + $0x18] sm:$0xff]
      %v2075 = vld [vmem:[#allocation9 + $0x20] sm:$0xff]
      %v2076 = vld [vmem:[#allocation9 + $0x28] sm:$0xff]
      %v2077 = vld [vmem:[#allocation9 + $0x30] sm:$0xff]
      %v2078 = vld [vmem:[#allocation9 + $0x38] sm:$0xff]
      %v2079 = vld [vmem:[#allocation9 + $0x40] sm:$0xff]
      %v2080 = vld [vmem:[#allocation9 + $0x48] sm:$0xff]
      %v2081 = vld [vmem:[#allocation9 + $0x50] sm:$0xff]
      %v2082 = vld [vmem:[#allocation9 + $0x58] sm:$0xff]
      %v2083 = vld [vmem:[#allocation9 + $0x60] sm:$0xff]
      %v2084 = vld [vmem:[#allocation9 + $0x68] sm:$0xff]
      %v2085 = vld [vmem:[#allocation9 + $0x70] sm:$0xff]
      %v2086 = vld [vmem:[#allocation9 + $0x78] sm:$0xff]
      %v2087 = vld [vmem:[#allocation9 + $0x80] sm:$0xff]
      %v2088 = vld [vmem:[#allocation9 + $0x88] sm:$0xff]
      %v2089 = vld [vmem:[#allocation9 + $0x90] sm:$0xff]
      %v2090 = vld [vmem:[#allocation9 + $0x98] sm:$0xff]
      %v2091 = vld [vmem:[#allocation9 + $0xa0] sm:$0xff]
      %v2092 = vld [vmem:[#allocation9 + $0xa8] sm:$0xff]
      %v2093 = vld [vmem:[#allocation9 + $0xb0] sm:$0xff]
      %v2094 = vld [vmem:[#allocation9 + $0xb8] sm:$0xff]
      %v2095 = vld [vmem:[#allocation9 + $0xc0] sm:$0xff]
      %v2096 = vld [vmem:[#allocation9 + $0xc8] sm:$0xff]
      %v2097 = vld [vmem:[#allocation9 + $0xd0] sm:$0xff]
      %v2098 = vld [vmem:[#allocation9 + $0xd8] sm:$0xff]
      %v2099 = vld [vmem:[#allocation9 + $0xe0] sm:$0xff]
      %v2100 = vld [vmem:[#allocation9 + $0xe8] sm:$0xff]
      %v2101 = vld [vmem:[#allocation9 + $0xf0] sm:$0xff]
      %v2102 = vld [vmem:[#allocation9 + $0xf8] sm:$0xff]
      %v2103 = vld [vmem:[#allocation9 + $0x100] sm:$0xff]
      %v2104 = vld [vmem:[#allocation9 + $0x108] sm:$0xff]
      %v2105 = vld [vmem:[#allocation9 + $0x110] sm:$0xff]
      %v2106 = vld [vmem:[#allocation9 + $0x118] sm:$0xff]
      %v2107 = vld [vmem:[#allocation9 + $0x120] sm:$0xff]
      %v2108 = vld [vmem:[#allocation9 + $0x128] sm:$0xff]
      %v2109 = vld [vmem:[#allocation9 + $0x130] sm:$0xff]
      %v2110 = vld [vmem:[#allocation9 + $0x138] sm:$0xff]
      %v2111 = vld [vmem:[#allocation9 + $0x140] sm:$0xff]
      %v2112 = vld [vmem:[#allocation9 + $0x148] sm:$0xff]
      %v2113 = vld [vmem:[#allocation9 + $0x150] sm:$0xff]
      %v2114 = vld [vmem:[#allocation9 + $0x158] sm:$0xff]
      %v2115 = vld [vmem:[#allocation9 + $0x160] sm:$0xff]
      %v2116 = vld [vmem:[#allocation9 + $0x168] sm:$0xff]
      %v2117 = vld [vmem:[#allocation9 + $0x170] sm:$0xff]
      %v2118 = vld [vmem:[#allocation9 + $0x178] sm:$0xff]
      %v2119 = vld [vmem:[#allocation9 + $0x180] sm:$0xff]
      %v2120 = vld [vmem:[#allocation9 + $0x188] sm:$0xff]
      %v2121 = vld [vmem:[#allocation9 + $0x190] sm:$0xff]
      %v2122 = vld [vmem:[#allocation9 + $0x198] sm:$0xff]
      %v2123 = vld [vmem:[#allocation9 + $0x1a0] sm:$0xff]
      %v2124 = vld [vmem:[#allocation9 + $0x1a8] sm:$0xff]
      %v2125 = vld [vmem:[#allocation9 + $0x1b0] sm:$0xff]
      %v2126 = vld [vmem:[#allocation9 + $0x1b8] sm:$0xff]
      %v2127 = vld [vmem:[#allocation9 + $0x1c0] sm:$0xff]
      %v2128 = vld [vmem:[#allocation9 + $0x1c8] sm:$0xff]
      %v2129 = vld [vmem:[#allocation9 + $0x1d0] sm:$0xff]
      %v2130 = vld [vmem:[#allocation9 + $0x1d8] sm:$0xff]
      %v2131 = vld [vmem:[#allocation9 + $0x1e0] sm:$0xff]
      %v2132 = vld [vmem:[#allocation9 + $0x1e8] sm:$0xff]
      %v2133 = vld [vmem:[#allocation9 + $0x1f0] sm:$0xff]
      %v2134 = vld [vmem:[#allocation9 + $0x1f8] sm:$0xff]
      %v2135 = vld [vmem:[%s4] sm:$0x3]
      %v2137 = vlaneseq
      %v2138 = vshrl.u32 %v2137, 7
      %v2139 = vsub.s32 0, %v2138
      %v2140 = vrot.slane %v2135, %v2139
      %v2141 = vlaneseq
      %v2142 = vshrl.u32 %v2141, 7
      %v2143 = vsub.s32 1, %v2142
      %v2144 = vrot.slane %v2135, %v2143
      %v2211 = vunpack.c.l.b16 %v2071
      %v2212 = vunpack.c.h.b16 %v2071
      %v2213 = vunpack.c.l.b16 %v2072
      %v2214 = vunpack.c.h.b16 %v2072
      %v2215 = vunpack.c.l.b16 %v2073
      %v2216 = vunpack.c.h.b16 %v2073
      %v2217 = vunpack.c.l.b16 %v2074
      %v2218 = vunpack.c.h.b16 %v2074
      %v2219 = vunpack.c.l.b16 %v2075
      %v2220 = vunpack.c.h.b16 %v2075
      %v2221 = vunpack.c.l.b16 %v2076
      %v2222 = vunpack.c.h.b16 %v2076
      %v2223 = vunpack.c.l.b16 %v2077
      %v2224 = vunpack.c.h.b16 %v2077
      %v2225 = vunpack.c.l.b16 %v2078
      %v2226 = vunpack.c.h.b16 %v2078
      %v2227 = vunpack.c.l.b16 %v2079
      %v2228 = vunpack.c.h.b16 %v2079
      %v2229 = vunpack.c.l.b16 %v2080
      %v2230 = vunpack.c.h.b16 %v2080
      %v2231 = vunpack.c.l.b16 %v2081
      %v2232 = vunpack.c.h.b16 %v2081
      %v2233 = vunpack.c.l.b16 %v2082
      %v2234 = vunpack.c.h.b16 %v2082
      %v2235 = vunpack.c.l.b16 %v2083
      %v2236 = vunpack.c.h.b16 %v2083
      %v2237 = vunpack.c.l.b16 %v2084
      %v2238 = vunpack.c.h.b16 %v2084
      %v2239 = vunpack.c.l.b16 %v2085
      %v2240 = vunpack.c.h.b16 %v2085
      %v2241 = vunpack.c.l.b16 %v2086
      %v2242 = vunpack.c.h.b16 %v2086
      %v2243 = vunpack.c.l.b16 %v2087
      %v2244 = vunpack.c.h.b16 %v2087
      %v2245 = vunpack.c.l.b16 %v2088
      %v2246 = vunpack.c.h.b16 %v2088
      %v2247 = vunpack.c.l.b16 %v2089
      %v2248 = vunpack.c.h.b16 %v2089
      %v2249 = vunpack.c.l.b16 %v2090
      %v2250 = vunpack.c.h.b16 %v2090
      %v2251 = vunpack.c.l.b16 %v2091
      %v2252 = vunpack.c.h.b16 %v2091
      %v2253 = vunpack.c.l.b16 %v2092
      %v2254 = vunpack.c.h.b16 %v2092
      %v2255 = vunpack.c.l.b16 %v2093
      %v2256 = vunpack.c.h.b16 %v2093
      %v2257 = vunpack.c.l.b16 %v2094
      %v2258 = vunpack.c.h.b16 %v2094
      %v2259 = vunpack.c.l.b16 %v2095
      %v2260 = vunpack.c.h.b16 %v2095
      %v2261 = vunpack.c.l.b16 %v2096
      %v2262 = vunpack.c.h.b16 %v2096
      %v2263 = vunpack.c.l.b16 %v2097
      %v2264 = vunpack.c.h.b16 %v2097
      %v2265 = vunpack.c.l.b16 %v2098
      %v2266 = vunpack.c.h.b16 %v2098
      %v2267 = vunpack.c.l.b16 %v2099
      %v2268 = vunpack.c.h.b16 %v2099
      %v2269 = vunpack.c.l.b16 %v2100
      %v2270 = vunpack.c.h.b16 %v2100
      %v2271 = vunpack.c.l.b16 %v2101
      %v2272 = vunpack.c.h.b16 %v2101
      %v2273 = vunpack.c.l.b16 %v2102
      %v2274 = vunpack.c.h.b16 %v2102
      %v2275 = vunpack.c.l.b16 %v2103
      %v2276 = vunpack.c.h.b16 %v2103
      %v2277 = vunpack.c.l.b16 %v2104
      %v2278 = vunpack.c.h.b16 %v2104
      %v2279 = vunpack.c.l.b16 %v2105
      %v2280 = vunpack.c.h.b16 %v2105
      %v2281 = vunpack.c.l.b16 %v2106
      %v2282 = vunpack.c.h.b16 %v2106
      %v2283 = vunpack.c.l.b16 %v2107
      %v2284 = vunpack.c.h.b16 %v2107
      %v2285 = vunpack.c.l.b16 %v2108
      %v2286 = vunpack.c.h.b16 %v2108
      %v2287 = vunpack.c.l.b16 %v2109
      %v2288 = vunpack.c.h.b16 %v2109
      %v2289 = vunpack.c.l.b16 %v2110
      %v2290 = vunpack.c.h.b16 %v2110
      %v2291 = vunpack.c.l.b16 %v2111
      %v2292 = vunpack.c.h.b16 %v2111
      %v2293 = vunpack.c.l.b16 %v2112
      %v2294 = vunpack.c.h.b16 %v2112
      %v2295 = vunpack.c.l.b16 %v2113
      %v2296 = vunpack.c.h.b16 %v2113
      %v2297 = vunpack.c.l.b16 %v2114
      %v2298 = vunpack.c.h.b16 %v2114
      %v2299 = vunpack.c.l.b16 %v2115
      %v2300 = vunpack.c.h.b16 %v2115
      %v2301 = vunpack.c.l.b16 %v2116
      %v2302 = vunpack.c.h.b16 %v2116
      %v2303 = vunpack.c.l.b16 %v2117
      %v2304 = vunpack.c.h.b16 %v2117
      %v2305 = vunpack.c.l.b16 %v2118
      %v2306 = vunpack.c.h.b16 %v2118
      %v2307 = vunpack.c.l.b16 %v2119
      %v2308 = vunpack.c.h.b16 %v2119
      %v2309 = vunpack.c.l.b16 %v2120
      %v2310 = vunpack.c.h.b16 %v2120
      %v2311 = vunpack.c.l.b16 %v2121
      %v2312 = vunpack.c.h.b16 %v2121
      %v2313 = vunpack.c.l.b16 %v2122
      %v2314 = vunpack.c.h.b16 %v2122
      %v2315 = vunpack.c.l.b16 %v2123
      %v2316 = vunpack.c.h.b16 %v2123
      %v2317 = vunpack.c.l.b16 %v2124
      %v2318 = vunpack.c.h.b16 %v2124
      %v2319 = vunpack.c.l.b16 %v2125
      %v2320 = vunpack.c.h.b16 %v2125
      %v2321 = vunpack.c.l.b16 %v2126
      %v2322 = vunpack.c.h.b16 %v2126
      %v2323 = vunpack.c.l.b16 %v2127
      %v2324 = vunpack.c.h.b16 %v2127
      %v2325 = vunpack.c.l.b16 %v2128
      %v2326 = vunpack.c.h.b16 %v2128
      %v2327 = vunpack.c.l.b16 %v2129
      %v2328 = vunpack.c.h.b16 %v2129
      %v2329 = vunpack.c.l.b16 %v2130
      %v2330 = vunpack.c.h.b16 %v2130
      %v2331 = vunpack.c.l.b16 %v2131
      %v2332 = vunpack.c.h.b16 %v2131
      %v2333 = vunpack.c.l.b16 %v2132
      %v2334 = vunpack.c.h.b16 %v2132
      %v2335 = vunpack.c.l.b16 %v2133
      %v2336 = vunpack.c.h.b16 %v2133
      %v2337 = vunpack.c.l.b16 %v2134
      %v2338 = vunpack.c.h.b16 %v2134
      %v2339 = vpack.c.b16 %v2213, %v2211
      %v2340 = vpack.c.b16 %v2214, %v2212
      %v2341 = vpack.c.b16 %v2217, %v2215
      %v2342 = vpack.c.b16 %v2218, %v2216
      %v2343 = vpack.c.b16 %v2221, %v2219
      %v2344 = vpack.c.b16 %v2222, %v2220
      %v2345 = vpack.c.b16 %v2225, %v2223
      %v2346 = vpack.c.b16 %v2226, %v2224
      %v2347 = vpack.c.b16 %v2229, %v2227
      %v2348 = vpack.c.b16 %v2230, %v2228
      %v2349 = vpack.c.b16 %v2233, %v2231
      %v2350 = vpack.c.b16 %v2234, %v2232
      %v2351 = vpack.c.b16 %v2237, %v2235
      %v2352 = vpack.c.b16 %v2238, %v2236
      %v2353 = vpack.c.b16 %v2241, %v2239
      %v2354 = vpack.c.b16 %v2242, %v2240
      %v2355 = vpack.c.b16 %v2245, %v2243
      %v2356 = vpack.c.b16 %v2246, %v2244
      %v2357 = vpack.c.b16 %v2249, %v2247
      %v2358 = vpack.c.b16 %v2250, %v2248
      %v2359 = vpack.c.b16 %v2253, %v2251
      %v2360 = vpack.c.b16 %v2254, %v2252
      %v2361 = vpack.c.b16 %v2257, %v2255
      %v2362 = vpack.c.b16 %v2258, %v2256
      %v2363 = vpack.c.b16 %v2261, %v2259
      %v2364 = vpack.c.b16 %v2262, %v2260
      %v2365 = vpack.c.b16 %v2265, %v2263
      %v2366 = vpack.c.b16 %v2266, %v2264
      %v2367 = vpack.c.b16 %v2269, %v2267
      %v2368 = vpack.c.b16 %v2270, %v2268
      %v2369 = vpack.c.b16 %v2273, %v2271
      %v2370 = vpack.c.b16 %v2274, %v2272
      %v2371 = vpack.c.b16 %v2277, %v2275
      %v2372 = vpack.c.b16 %v2278, %v2276
      %v2373 = vpack.c.b16 %v2281, %v2279
      %v2374 = vpack.c.b16 %v2282, %v2280
      %v2375 = vpack.c.b16 %v2285, %v2283
      %v2376 = vpack.c.b16 %v2286, %v2284
      %v2377 = vpack.c.b16 %v2289, %v2287
      %v2378 = vpack.c.b16 %v2290, %v2288
      %v2379 = vpack.c.b16 %v2293, %v2291
      %v2380 = vpack.c.b16 %v2294, %v2292
      %v2381 = vpack.c.b16 %v2297, %v2295
      %v2382 = vpack.c.b16 %v2298, %v2296
      %v2383 = vpack.c.b16 %v2301, %v2299
      %v2384 = vpack.c.b16 %v2302, %v2300
      %v2385 = vpack.c.b16 %v2305, %v2303
      %v2386 = vpack.c.b16 %v2306, %v2304
      %v2387 = vpack.c.b16 %v2309, %v2307
      %v2388 = vpack.c.b16 %v2310, %v2308
      %v2389 = vpack.c.b16 %v2313, %v2311
      %v2390 = vpack.c.b16 %v2314, %v2312
      %v2391 = vpack.c.b16 %v2317, %v2315
      %v2392 = vpack.c.b16 %v2318, %v2316
      %v2393 = vpack.c.b16 %v2321, %v2319
      %v2394 = vpack.c.b16 %v2322, %v2320
      %v2395 = vpack.c.b16 %v2325, %v2323
      %v2396 = vpack.c.b16 %v2326, %v2324
      %v2397 = vpack.c.b16 %v2329, %v2327
      %v2398 = vpack.c.b16 %v2330, %v2328
      %v2399 = vpack.c.b16 %v2333, %v2331
      %v2400 = vpack.c.b16 %v2334, %v2332
      %v2401 = vpack.c.b16 %v2337, %v2335
      %v2402 = vpack.c.b16 %v2338, %v2336
      %2467 = vmatprep.subr.bf16.mxu0 %v2354
      %2468 = vmatpush1.bf16.msra.mxu0 %v2353
      %2469 = vmatprep.subr.bf16.mxu0 %v2352
      %2470 = vmatpush1.bf16.msra.mxu0 %v2351
      %2471 = vmatprep.subr.bf16.mxu0 %v2350
      %2472 = vmatpush1.bf16.msra.mxu0 %v2349
      %2473 = vmatprep.subr.bf16.mxu0 %v2348
      %2474 = vmatpush1.bf16.msra.mxu0 %v2347
      %2475 = vmatprep.subr.bf16.mxu0 %v2346
      %2476 = vmatpush1.bf16.msra.mxu0 %v2345
      %2477 = vmatprep.subr.bf16.mxu0 %v2344
      %2478 = vmatpush1.bf16.msra.mxu0 %v2343
      %2479 = vmatprep.subr.bf16.mxu0 %v2342
      %2480 = vmatpush1.bf16.msra.mxu0 %v2341
      %2481 = vmatprep.subr.bf16.mxu0 %v2340
      %2482 = vmatpush1.bf16.msra.mxu0 %v2339
      %2483 = vmatprep.subr.bf16.mxu0 %v2370
      %2484 = vmatpush2.bf16.msra.mxu0 %v2369
      %2485 = vmatprep.subr.bf16.mxu0 %v2368
      %2486 = vmatpush2.bf16.msra.mxu0 %v2367
      %2487 = vmatprep.subr.bf16.mxu0 %v2366
      %2488 = vmatpush2.bf16.msra.mxu0 %v2365
      %2489 = vmatprep.subr.bf16.mxu0 %v2364
      %2490 = vmatpush2.bf16.msra.mxu0 %v2363
      %2491 = vmatprep.subr.bf16.mxu0 %v2362
      %2492 = vmatpush2.bf16.msra.mxu0 %v2361
      %2493 = vmatprep.subr.bf16.mxu0 %v2360
      %2494 = vmatpush2.bf16.msra.mxu0 %v2359
      %2495 = vmatprep.subr.bf16.mxu0 %v2358
      %2496 = vmatpush2.bf16.msra.mxu0 %v2357
      %2497 = vmatprep.subr.bf16.mxu0 %v2356
      %2498 = vmatpush2.bf16.msra.mxu0 %v2355
      %2499 = vmatprep.mubr.bf16.mxu0 %v2068
      %2500 = vmatmul.mubr.bf16.gmra.mxu0 %v2067
      %v2501 = vpop.f32.mrf.mxu0
      %v2502 = vadd.f32 %v2140, %v2501
      %v2503 = vpop.f32.mrf.mxu0
      %v2504 = vadd.f32 %v2144, %v2503
      %v2505 = vpop.f32.mrf.mxu0
      %v2506 = vadd.f32 %v2140, %v2505
      %v2507 = vpop.f32.mrf.mxu0
      %v2508 = vadd.f32 %v2144, %v2507
      %2509 = vdwg.mxu0
      %2510 = vmatprep.subr.bf16.mxu0 %v2386
      %2511 = vmatpush1.bf16.msra.mxu0 %v2385
      %2512 = vmatprep.subr.bf16.mxu0 %v2384
      %2513 = vmatpush1.bf16.msra.mxu0 %v2383
      %2514 = vmatprep.subr.bf16.mxu0 %v2382
      %2515 = vmatpush1.bf16.msra.mxu0 %v2381
      %2516 = vmatprep.subr.bf16.mxu0 %v2380
      %2517 = vmatpush1.bf16.msra.mxu0 %v2379
      %2518 = vmatprep.subr.bf16.mxu0 %v2378
      %2519 = vmatpush1.bf16.msra.mxu0 %v2377
      %2520 = vmatprep.subr.bf16.mxu0 %v2376
      %2521 = vmatpush1.bf16.msra.mxu0 %v2375
      %2522 = vmatprep.subr.bf16.mxu0 %v2374
      %2523 = vmatpush1.bf16.msra.mxu0 %v2373
      %2524 = vmatprep.subr.bf16.mxu0 %v2372
      %2525 = vmatpush1.bf16.msra.mxu0 %v2371
      %2526 = vmatprep.subr.bf16.mxu0 %v2402
      %2527 = vmatpush2.bf16.msra.mxu0 %v2401
      %2528 = vmatprep.subr.bf16.mxu0 %v2400
      %2529 = vmatpush2.bf16.msra.mxu0 %v2399
      %2530 = vmatprep.subr.bf16.mxu0 %v2398
      %2531 = vmatpush2.bf16.msra.mxu0 %v2397
      %2532 = vmatprep.subr.bf16.mxu0 %v2396
      %2533 = vmatpush2.bf16.msra.mxu0 %v2395
      %2534 = vmatprep.subr.bf16.mxu0 %v2394
      %2535 = vmatpush2.bf16.msra.mxu0 %v2393
      %2536 = vmatprep.subr.bf16.mxu0 %v2392
      %2537 = vmatpush2.bf16.msra.mxu0 %v2391
      %2538 = vmatprep.subr.bf16.mxu0 %v2390
      %2539 = vmatpush2.bf16.msra.mxu0 %v2389
      %2540 = vmatprep.subr.bf16.mxu0 %v2388
      %2541 = vmatpush2.bf16.msra.mxu0 %v2387
      %2542 = vmatprep.mubr.bf16.mxu0 %v2070
      %2543 = vmatmul.mubr.bf16.gmra.mxu0 %v2069
      %v2544 = vpop.f32.mrf.mxu0
      %v2545 = vadd.f32 %v2502, %v2544
      %v2546 = vpop.f32.mrf.mxu0
      %v2547 = vadd.f32 %v2504, %v2546
      %v2548 = vpop.f32.mrf.mxu0
      %v2549 = vadd.f32 %v2506, %v2548
      %v2550 = vpop.f32.mrf.mxu0
      %v2551 = vadd.f32 %v2508, %v2550
      %2552 = vdwg.mxu0
      %v2553 = vmul.f32 %v2545, 0.2
      %v2554 = vmul.f32 %v2547, 0.2
      %v2555 = vmul.f32 %v2549, 0.2
      %v2556 = vmul.f32 %v2551, 0.2
      %v2557 = vmax.f32 %v2545, %v2553
      %v2558 = vmax.f32 %v2547, %v2554
      %v2559 = vmax.f32 %v2549, %v2555
      %v2560 = vmax.f32 %v2551, %v2556
      %v2561 = vld [vmem:[%s5] sm:$0x3]
      %v2562 = vld [vmem:[#allocation3] sm:$0x1]
      %2564 = vset.pattern.permute.xlu0 0
      %2565 = vperm.xlu0 %2564, %v2562
      %v2566 = vpop.permute.xlu0 %2565
      %v2568 = vlaneseq
      %v2569 = vshrl.u32 %v2568, 7
      %v2570 = vsub.s32 0, %v2569
      %v2571 = vrot.slane %v2566, %v2570
      %v2573 = vlaneseq
      %v2574 = vshrl.u32 %v2573, 7
      %v2575 = vsub.s32 0, %v2574
      %v2576 = vrot.slane %v2561, %v2575
      %v2577 = vlaneseq
      %v2578 = vshrl.u32 %v2577, 7
      %v2579 = vsub.s32 1, %v2578
      %v2580 = vrot.slane %v2561, %v2579
      %2583 = vmatprep.subr.mxu0 0.0
      %2584 = vmatpush1.xpose.msra.mxu0 0.0
      %2585 = vmatprep.subr.mxu0 0.0
      %2586 = vmatpush1.xpose.msra.mxu0 0.0
      %2587 = vmatprep.subr.mxu0 0.0
      %2588 = vmatpush1.xpose.msra.mxu0 0.0
      %2589 = vmatprep.subr.mxu0 0.0
      %2590 = vmatpush1.xpose.msra.mxu0 0.0
      %2591 = vmatprep.subr.mxu0 0.0
      %2592 = vmatpush1.xpose.msra.mxu0 0.0
      %2593 = vmatprep.subr.mxu0 0.0
      %2594 = vmatpush1.xpose.msra.mxu0 0.0
      %2595 = vmatprep.subr.mxu0 0.0
      %2596 = vmatpush1.xpose.msra.mxu0 0.0
      %2597 = vmatprep.subr.mxu0 0.0
      %2598 = vmatpush1.xpose.msra.mxu0 0.0
      %2599 = vmatprep.subr.mxu0 0.0
      %2600 = vmatpush1.xpose.msra.mxu0 0.0
      %2601 = vmatprep.subr.mxu0 0.0
      %2602 = vmatpush1.xpose.msra.mxu0 0.0
      %2603 = vmatprep.subr.mxu0 0.0
      %2604 = vmatpush1.xpose.msra.mxu0 0.0
      %2605 = vmatprep.subr.mxu0 0.0
      %2606 = vmatpush1.xpose.msra.mxu0 0.0
      %2607 = vmatprep.subr.mxu0 0.0
      %2608 = vmatpush1.xpose.msra.mxu0 0.0
      %2609 = vmatprep.subr.mxu0 0.0
      %2610 = vmatpush1.xpose.msra.mxu0 0.0
      %2611 = vmatprep.subr.mxu0 %v2560
      %2612 = vmatpush1.xpose.msra.mxu0 %v2559
      %2613 = vmatprep.subr.mxu0 %v2558
      %2614 = vmatpush1.xpose.msra.mxu0 %v2557
      %2615 = vmatprep.subr.mxu0 0.0
      %2616 = vmatpush2.xpose.msra.mxu0 0.0
      %2617 = vmatprep.subr.mxu0 0.0
      %2618 = vmatpush2.xpose.msra.mxu0 0.0
      %2619 = vmatprep.subr.mxu0 0.0
      %2620 = vmatpush2.xpose.msra.mxu0 0.0
      %2621 = vmatprep.subr.mxu0 0.0
      %2622 = vmatpush2.xpose.msra.mxu0 0.0
      %2623 = vmatprep.subr.mxu0 0.0
      %2624 = vmatpush2.xpose.msra.mxu0 0.0
      %2625 = vmatprep.subr.mxu0 0.0
      %2626 = vmatpush2.xpose.msra.mxu0 0.0
      %2627 = vmatprep.subr.mxu0 0.0
      %2628 = vmatpush2.xpose.msra.mxu0 0.0
      %2629 = vmatprep.subr.mxu0 0.0
      %2630 = vmatpush2.xpose.msra.mxu0 0.0
      %2631 = vmatprep.subr.mxu0 0.0
      %2632 = vmatpush2.xpose.msra.mxu0 0.0
      %2633 = vmatprep.subr.mxu0 0.0
      %2634 = vmatpush2.xpose.msra.mxu0 0.0
      %2635 = vmatprep.subr.mxu0 0.0
      %2636 = vmatpush2.xpose.msra.mxu0 0.0
      %2637 = vmatprep.subr.mxu0 0.0
      %2638 = vmatpush2.xpose.msra.mxu0 0.0
      %2639 = vmatprep.subr.mxu0 0.0
      %2640 = vmatpush2.xpose.msra.mxu0 0.0
      %2641 = vmatprep.subr.mxu0 0.0
      %2642 = vmatpush2.xpose.msra.mxu0 0.0
      %2643 = vmatprep.subr.mxu0 0.0
      %2644 = vmatpush2.xpose.msra.mxu0 0.0
      %2645 = vmatprep.subr.mxu0 0.0
      %2646 = vmatpush2.xpose.msra.mxu0 0.0
      %2647 = vmatprep.mubr.f32.mxu0 %v2580
      %2648 = vmatmul.mubr.f32.gmra.mxu0 %v2576
      %v2649 = vpop.f32.mrf.mxu0
      %v2650 = vadd.f32 %v2571, %v2649
      %v2651 = vpop.f32.mrf.mxu0
      %2652 = vdwg.mxu0
      %v2653 = vxor.u32 %v2650, 2147483648
      %v2654 = vmul.f32 %v2653, 1.442695
      %v2655 = vpow.pop %v2654
      %v2656 = vadd.f32 %v2655, 1.0
      %v2657 = vrcp.pop %v2656
      %v2658 = vmul.f32 1.0, %v2657
      %vm2659 = vcmask 122880
      %2660 = vst.msk [vmem:[#allocation10] sm:$0x1] %vm2659, %v2658
    $region49: #{tpu_custom_call.1} parent=1 // pred_fallthru
      _
    // Predicated region
    $region50: #{tpu_custom_call.1} parent=1 // pred_check
      _
    $region51: #{tpu_custom_call.1} parent=1 // pred_check_branch
      %2662 = sbr.rel (0) target = $region53
    $region52: #{tpu_custom_call.1} parent=1 // pred_region
      %s2664 = ssub.s32 16, 16
      %2665 = vsyncadd [#allocation6], %s2664
      %s2667 = sshll.u32 [#allocation10], 4
      %s2668 = int_to_ptr.vmem [resolvable:$true] %s2667
      %2670 = dma.vmem_to_hbm [thread:$0]  %s2668, 16, %s7, [#allocation6]
    $region53: #{tpu_custom_call.1} parent=1 // pred_fallthru
      _
    // Predicated region
    $region54: #{tpu_custom_call.1} parent=1 // pred_check
      _
    $region55: #{tpu_custom_call.1} parent=1 // pred_check_branch
      %2672 = sbr.rel (0) target = $region57
    $region56: #{tpu_custom_call.1} parent=1 // pred_region
      %2673 = dma.done [#allocation6], 16
    $region57: #{tpu_custom_call.1} parent=1 // pred_fallthru
      _
    %2674 = vsyncpa [#allocation5], 1
    %2675 = vsyncpa [#allocation8], 1
    %2676 = vsyncpa [#allocation6], 1

// kernel: tpu_custom_call.1
$region0: #{tpu_custom_call.1}
  #allocation0 [shape = 'u32[]', space=smem, size = 0x4, offset = 0x4, fixed_abs, tag = 'smem constant byte address 0x4 - core index']
  #allocation1 [shape = 'u32[144,128]{1,0:T(1,128)}', space=vmem, size = 0x12000, scoped, tag = 'internal scratch']
  #allocation2 [shape = 'f32[16,512]{1,0:T(8,128)}', space=vmem, size = 0x8000, scoped, tag = 'scratch operand']
  #allocation3 [shape = 'f32[1,1]{1,0:T(1,128)S(1)}', space=vmem, size = 0x200, scoped, tag = 'scoped memory for tpu_custom_call.1']
  %s0 = inlined_call_operand.hbm [shape: f32[16,1024], index: 0, kind: input, shape index: {}]
  %s1 = inlined_call_operand.hbm [shape: bf16[1024,512], index: 1, kind: input, shape index: {}]
  %s2 = inlined_call_operand.vmem [shape: f32[1,512], index: 2, kind: input, shape index: {}]
  %s3 = inlined_call_operand.hbm [shape: bf16[512,256], index: 3, kind: input, shape index: {}]
  %s4 = inlined_call_operand.vmem [shape: f32[1,256], index: 4, kind: input, shape index: {}]
  %s5 = inlined_call_operand.vmem [shape: f32[1,256], index: 5, kind: input, shape index: {}]
  %s6 = inlined_call_operand.<no memory space> [shape: f32[1,1], index: 6, kind: input, shape index: {}]
  %s7 = inlined_call_operand.hbm [shape: f32[1,16], index: 7, kind: output, shape index: {}]
  %s8 = sld [smem:[#allocation0]]
  $region58: #{tpu_custom_call.1} parent=0
    _
  %s10 = ssub.s32 1, %s8
  %s11 = scalar_select 0, %s10, %s8
  %v12 = vstv %s6
  %13 = vst [vmem:[#allocation3] sm:$0x1] %v12
  $region1: #{tpu_custom_call.1} parent=0
    #allocation4 [shape = 'u8[65536]{0}', space=vmem, size = 0x10000, scoped, tag = 'input window, operand 0, single buffered']
    #allocation5 [shape = 's32[1]{0}', space=sflag, size = 0x4, scoped, tag = 'scoped memory for tpu_custom_call.1']
    #allocation6 [shape = 's32[1]{0}', space=sflag, size = 0x4, scoped, tag = 'scoped memory for tpu_custom_call.1']
    #allocation7 [shape = 'u8[1048576]{0}', space=vmem, size = 0x100000, scoped, tag = 'input window, operand 1, single buffered']
    #allocation8 [shape = 's32[1]{0}', space=sflag, size = 0x4, scoped, tag = 'scoped memory for tpu_custom_call.1']
    #allocation9 [shape = 'u8[262144]{0}', space=vmem, size = 0x40000, scoped, tag = 'input window, operand 3, single buffered']
    #allocation10 [shape = 'u8[512]{0}', space=vmem, size = 0x400, scoped, tag = 'output window, operand 0, single buffered']
    %14 = vsyncpa [#allocation5], 0
    %15 = vsyncpa [#allocation8], 0
    %16 = vsyncpa [#allocation6], 0
    // Predicated region
    $region2: #{tpu_custom_call.1} parent=1 // pred_check
      _
    $region3: #{tpu_custom_call.1} parent=1 // pred_check_branch
      %18 = sbr.rel (0) target = $region5
    $region4: #{tpu_custom_call.1} parent=1 // pred_region
      %s20 = ssub.s32 2048, 2048
      %21 = vsyncadd [#allocation5], %s20
      %s22 = sshll.u32 [#allocation4], 4
      %s23 = int_to_ptr.vmem [resolvable:$true] %s22
      %28 = dma.hbm_to_vmem [thread:$0]  %s0, 2048, %s23, [#allocation5], 1024, 1024, 64
    $region5: #{tpu_custom_call.1} parent=1 // pred_fallthru
      _
    // Predicated region
    $region6: #{tpu_custom_call.1} parent=1 // pred_check
      _
    $region7: #{tpu_custom_call.1} parent=1 // pred_check_branch
      %30 = sbr.rel (0) target = $region9
    $region8: #{tpu_custom_call.1} parent=1 // pred_region
      %s32 = ssub.s32 32768, 32768
      %33 = vsyncadd [#allocation8], %s32
      %s34 = sshll.u32 [#allocation7], 4
      %s35 = int_to_ptr.vmem [resolvable:$true] %s34
      %40 = dma.hbm_to_vmem [thread:$0]  %s1, 32768, %s35, [#allocation8], 256, 256, 16
    $region9: #{tpu_custom_call.1} parent=1 // pred_fallthru
      _
    // Predicated region
    $region10: #{tpu_custom_call.1} parent=1 // pred_check
      _
    $region11: #{tpu_custom_call.1} parent=1 // pred_check_branch
      %42 = sbr.rel (0) target = $region13
    $region12: #{tpu_custom_call.1} parent=1 // pred_region
      _
    $region13: #{tpu_custom_call.1} parent=1 // pred_fallthru
      _
    // Predicated region
    $region14: #{tpu_custom_call.1} parent=1 // pred_check
      _
    $region15: #{tpu_custom_call.1} parent=1 // pred_check_branch
      %44 = sbr.rel (0) target = $region17
    $region16: #{tpu_custom_call.1} parent=1 // pred_region
      %s46 = ssub.s32 8192, 8192
      %47 = vsyncadd [#allocation8], %s46
      %s48 = sshll.u32 [#allocation9], 4
      %s49 = int_to_ptr.vmem [resolvable:$true] %s48
      %54 = dma.hbm_to_vmem [thread:$0]  %s3, 8192, %s49, [#allocation8], 128, 128, 8
    $region17: #{tpu_custom_call.1} parent=1 // pred_fallthru
      _
    // Predicated region
    $region18: #{tpu_custom_call.1} parent=1 // pred_check
      _
    $region19: #{tpu_custom_call.1} parent=1 // pred_check_branch
      %56 = sbr.rel (0) target = $region21
    $region20: #{tpu_custom_call.1} parent=1 // pred_region
      _
    $region21: #{tpu_custom_call.1} parent=1 // pred_fallthru
      _
    // Predicated region
    $region22: #{tpu_custom_call.1} parent=1 // pred_check
      _
    $region23: #{tpu_custom_call.1} parent=1 // pred_check_branch
      %58 = sbr.rel (0) target = $region25
    $region24: #{tpu_custom_call.1} parent=1 // pred_region
      _
    $region25: #{tpu_custom_call.1} parent=1 // pred_fallthru
      _
    // Predicated region
    $region26: #{tpu_custom_call.1} parent=1 // pred_check
      _
    $region27: #{tpu_custom_call.1} parent=1 // pred_check_branch
      %60 = sbr.rel (0) target = $region29
    $region28: #{tpu_custom_call.1} parent=1 // pred_region
      _
    $region29: #{tpu_custom_call.1} parent=1 // pred_fallthru
      _
    // Predicated region
    $region30: #{tpu_custom_call.1} parent=1 // pred_check
      _
    $region31: #{tpu_custom_call.1} parent=1 // pred_check_branch
      %62 = sbr.rel (0) target = $region33
    $region32: #{tpu_custom_call.1} parent=1 // pred_region
      %63 = dma.done [#allocation5], 2048
    $region33: #{tpu_custom_call.1} parent=1 // pred_fallthru
      _
    // Predicated region
    $region34: #{tpu_custom_call.1} parent=1 // pred_check
      _
    $region35: #{tpu_custom_call.1} parent=1 // pred_check_branch
      %65 = sbr.rel (0) target = $region37
    $region36: #{tpu_custom_call.1} parent=1 // pred_region
      %66 = dma.done [#allocation8], 32768
    $region37: #{tpu_custom_call.1} parent=1 // pred_fallthru
      _
    // Predicated region
    $region38: #{tpu_custom_call.1} parent=1 // pred_check
      _
    $region39: #{tpu_custom_call.1} parent=1 // pred_check_branch
      %68 = sbr.rel (0) target = $region41
    $region40: #{tpu_custom_call.1} parent=1 // pred_region
      %69 = dma.done [#allocation8], 8192
    $region41: #{tpu_custom_call.1} parent=1 // pred_fallthru
      _
    %p70 = scmp.eq.s32.totalorder 0, 0
    // Predicated region
    $region42: #{tpu_custom_call.1} parent=1 // pred_check
      %p71 = pneg %p70
    $region43: #{tpu_custom_call.1} parent=1 // pred_check_branch
      %73 = sbr.rel (%p71) target = $region45
    $region44: #{tpu_custom_call.1} parent=1 // pred_region
      %74 = vst [vmem:[#allocation2] sm:$0xff] 0.0
      %75 = vst [vmem:[#allocation2 + $0x8] sm:$0xff] 0.0
      %76 = vst [vmem:[#allocation2 + $0x10] sm:$0xff] 0.0
      %77 = vst [vmem:[#allocation2 + $0x18] sm:$0xff] 0.0
      %78 = vst [vmem:[#allocation2 + $0x20] sm:$0xff] 0.0
      %79 = vst [vmem:[#allocation2 + $0x28] sm:$0xff] 0.0
      %80 = vst [vmem:[#allocation2 + $0x30] sm:$0xff] 0.0
      %81 = vst [vmem:[#allocation2 + $0x38] sm:$0xff] 0.0
    $region45: #{tpu_custom_call.1} parent=1 // pred_fallthru
      _
    %v82 = vld [vmem:[#allocation4] sm:$0xff]
    %v83 = vld [vmem:[#allocation4 + $0x8] sm:$0xff]
    %v84 = vld [vmem:[#allocation4 + $0x10] sm:$0xff]
    %v85 = vld [vmem:[#allocation4 + $0x18] sm:$0xff]
    %v86 = vld [vmem:[#allocation4 + $0x20] sm:$0xff]
    %v87 = vld [vmem:[#allocation4 + $0x28] sm:$0xff]
    %v88 = vld [vmem:[#allocation4 + $0x30] sm:$0xff]
    %v89 = vld [vmem:[#allocation4 + $0x38] sm:$0xff]
    %v90 = vld [vmem:[#allocation4 + $0x40] sm:$0xff]
    %v91 = vld [vmem:[#allocation4 + $0x48] sm:$0xff]
    %v92 = vld [vmem:[#allocation4 + $0x50] sm:$0xff]
    %v93 = vld [vmem:[#allocation4 + $0x58] sm:$0xff]
    %v94 = vld [vmem:[#allocation4 + $0x60] sm:$0xff]
    %v95 = vld [vmem:[#allocation4 + $0x68] sm:$0xff]
    %v96 = vld [vmem:[#allocation4 + $0x70] sm:$0xff]
    %v97 = vld [vmem:[#allocation4 + $0x78] sm:$0xff]
    %v98 = vpack.c.bf16 %v90, %v82
    %v99 = vpack.c.bf16 %v91, %v83
    %v100 = vpack.c.bf16 %v92, %v84
    %v101 = vpack.c.bf16 %v93, %v85
    %v102 = vpack.c.bf16 %v94, %v86
    %v103 = vpack.c.bf16 %v95, %v87
    %v104 = vpack.c.bf16 %v96, %v88
    %v105 = vpack.c.bf16 %v97, %v89
    %v106 = vld [vmem:[#allocation2] sm:$0xff]
    %v107 = vld [vmem:[#allocation2 + $0x8] sm:$0xff]
    %v108 = vld [vmem:[#allocation2 + $0x10] sm:$0xff]
    %v109 = vld [vmem:[#allocation2 + $0x18] sm:$0xff]
    %v110 = vld [vmem:[#allocation2 + $0x20] sm:$0xff]
    %v111 = vld [vmem:[#allocation2 + $0x28] sm:$0xff]
    %v112 = vld [vmem:[#allocation2 + $0x30] sm:$0xff]
    %v113 = vld [vmem:[#allocation2 + $0x38] sm:$0xff]
    %v114 = vld [vmem:[#allocation7] sm:$0xff]
    %v115 = vld [vmem:[#allocation7 + $0x8] sm:$0xff]
    %v116 = vld [vmem:[#allocation7 + $0x10] sm:$0xff]
    %v117 = vld [vmem:[#allocation7 + $0x18] sm:$0xff]
    %v118 = vld [vmem:[#allocation7 + $0x20] sm:$0xff]
    %v119 = vld [vmem:[#allocation7 + $0x28] sm:$0xff]
    %v120 = vld [vmem:[#allocation7 + $0x30] sm:$0xff]
    %v121 = vld [vmem:[#allocation7 + $0x38] sm:$0xff]
    %v122 = vld [vmem:[#allocation7 + $0x40] sm:$0xff]
    %v123 = vld [vmem:[#allocation7 + $0x48] sm:$0xff]
    %v124 = vld [vmem:[#allocation7 + $0x50] sm:$0xff]
    %v125 = vld [vmem:[#allocation7 + $0x58] sm:$0xff]
    %v126 = vld [vmem:[#allocation7 + $0x60] sm:$0xff]
    %v127 = vld [vmem:[#allocation7 + $0x68] sm:$0xff]
    %v128 = vld [vmem:[#allocation7 + $0x70] sm:$0xff]
    %v129 = vld [vmem:[#allocation7 + $0x78] sm:$0xff]
    %v130 = vld [vmem:[#allocation7 + $0x80] sm:$0xff]
    %v131 = vld [vmem:[#allocation7 + $0x88] sm:$0xff]
    %v132 = vld [vmem:[#allocation7 + $0x90] sm:$0xff]
    %v133 = vld [vmem:[#allocation7 + $0x98] sm:$0xff]
    %v134 = vld [vmem:[#allocation7 + $0xa0] sm:$0xff]
    %v135 = vld [vmem:[#allocation7 + $0xa8] sm:$0xff]
    %v136 = vld [vmem:[#allocation7 + $0xb0] sm:$0xff]
    %v137 = vld [vmem:[#allocation7 + $0xb8] sm:$0xff]
    %v138 = vld [vmem:[#allocation7 + $0xc0] sm:$0xff]
    %v139 = vld [vmem:[#allocation7 + $0xc8] sm:$0xff]
    %v140 = vld [vmem:[#allocation7 + $0xd0] sm:$0xff]
    %v141 = vld [vmem:[#allocation7 + $0xd8] sm:$0xff]
    %v142 = vld [vmem:[#allocation7 + $0xe0] sm:$0xff]
    %v143 = vld [vmem:[#allocation7 + $0xe8] sm:$0xff]
    %v144 = vld [vmem:[#allocation7 + $0xf0] sm:$0xff]
    %v145 = vld [vmem:[#allocation7 + $0xf8] sm:$0xff]
    %v146 = vld [vmem:[#allocation7 + $0x100] sm:$0xff]
    %v147 = vld [vmem:[#allocation7 + $0x108] sm:$0xff]
    %v148 = vld [vmem:[#allocation7 + $0x110] sm:$0xff]
    %v149 = vld [vmem:[#allocation7 + $0x118] sm:$0xff]
    %v150 = vld [vmem:[#allocation7 + $0x120] sm:$0xff]
    %v151 = vld [vmem:[#allocation7 + $0x128] sm:$0xff]
    %v152 = vld [vmem:[#allocation7 + $0x130] sm:$0xff]
    %v153 = vld [vmem:[#allocation7 + $0x138] sm:$0xff]
    %v154 = vld [vmem:[#allocation7 + $0x140] sm:$0xff]
    %v155 = vld [vmem:[#allocation7 + $0x148] sm:$0xff]
    %v156 = vld [vmem:[#allocation7 + $0x150] sm:$0xff]
    %v157 = vld [vmem:[#allocation7 + $0x158] sm:$0xff]
    %v158 = vld [vmem:[#allocation7 + $0x160] sm:$0xff]
    %v159 = vld [vmem:[#allocation7 + $0x168] sm:$0xff]
    %v160 = vld [vmem:[#allocation7 + $0x170] sm:$0xff]
    %v161 = vld [vmem:[#allocation7 + $0x178] sm:$0xff]
    %v162 = vld [vmem:[#allocation7 + $0x180] sm:$0xff]
    %v163 = vld [vmem:[#allocation7 + $0x188] sm:$0xff]
    %v164 = vld [vmem:[#allocation7 + $0x190] sm:$0xff]
    %v165 = vld [vmem:[#allocation7 + $0x198] sm:$0xff]
    %v166 = vld [vmem:[#allocation7 + $0x1a0] sm:$0xff]
    %v167 = vld [vmem:[#allocation7 + $0x1a8] sm:$0xff]
    %v168 = vld [vmem:[#allocation7 + $0x1b0] sm:$0xff]
    %v169 = vld [vmem:[#allocation7 + $0x1b8] sm:$0xff]
    %v170 = vld [vmem:[#allocation7 + $0x1c0] sm:$0xff]
    %v171 = vld [vmem:[#allocation7 + $0x1c8] sm:$0xff]
    %v172 = vld [vmem:[#allocation7 + $0x1d0] sm:$0xff]
    %v173 = vld [vmem:[#allocation7 + $0x1d8] sm:$0xff]
    %v174 = vld [vmem:[#allocation7 + $0x1e0] sm:$0xff]
    %v175 = vld [vmem:[#allocation7 + $0x1e8] sm:$0xff]
    %v176 = vld [vmem:[#allocation7 + $0x1f0] sm:$0xff]
    %v177 = vld [vmem:[#allocation7 + $0x1f8] sm:$0xff]
    %v178 = vld [vmem:[#allocation7 + $0x200] sm:$0xff]
    %v179 = vld [vmem:[#allocation7 + $0x208] sm:$0xff]
    %v180 = vld [vmem:[#allocation7 + $0x210] sm:$0xff]
    %v181 = vld [vmem:[#allocation7 + $0x218] sm:$0xff]
    %v182 = vld [vmem:[#allocation7 + $0x220] sm:$0xff]
    %v183 = vld [vmem:[#allocation7 + $0x228] sm:$0xff]
    %v184 = vld [vmem:[#allocation7 + $0x230] sm:$0xff]
    %v185 = vld [vmem:[#allocation7 + $0x238] sm:$0xff]
    %v186 = vld [vmem:[#allocation7 + $0x240] sm:$0xff]
    %v187 = vld [vmem:[#allocation7 + $0x248] sm:$0xff]
    %v188 = vld [vmem:[#allocation7 + $0x250] sm:$0xff]
    %v189 = vld [vmem:[#allocation7 + $0x258] sm:$0xff]
    %v190 = vld [vmem:[#allocation7 + $0x260] sm:$0xff]
    %v191 = vld [vmem:[#allocation7 + $0x268] sm:$0xff]
    %v192 = vld [vmem:[#allocation7 + $0x270] sm:$0xff]
    %v193 = vld [vmem:[#allocation7 + $0x278] sm:$0xff]
    %v194 = vld [vmem:[#allocation7 + $0x280] sm:$0xff]
    %v195 = vld [vmem:[#allocation7 + $0x288] sm:$0xff]
    %v196 = vld [vmem:[#allocation7 + $0x290] sm:$0xff]
    %v197 = vld [vmem:[#allocation7 + $0x298] sm:$0xff]
    %v198 = vld [vmem:[#allocation7 + $0x2a0] sm:$0xff]
    %v199 = vld [vmem:[#allocation7 + $0x2a8] sm:$0xff]
    %v200 = vld [vmem:[#allocation7 + $0x2b0] sm:$0xff]
    %v201 = vld [vmem:[#allocation7 + $0x2b8] sm:$0xff]
    %v202 = vld [vmem:[#allocation7 + $0x2c0] sm:$0xff]
    %v203 = vld [vmem:[#allocation7 + $0x2c8] sm:$0xff]
    %v204 = vld [vmem:[#allocation7 + $0x2d0] sm:$0xff]
    %v205 = vld [vmem:[#allocation7 + $0x2d8] sm:$0xff]
    %v206 = vld [vmem:[#allocation7 + $0x2e0] sm:$0xff]
    %v207 = vld [vmem:[#allocation7 + $0x2e8] sm:$0xff]
    %v208 = vld [vmem:[#allocation7 + $0x2f0] sm:$0xff]
    %v209 = vld [vmem:[#allocation7 + $0x2f8] sm:$0xff]
    %v210 = vld [vmem:[#allocation7 + $0x300] sm:$0xff]
    %v211 = vld [vmem:[#allocation7 + $0x308] sm:$0xff]
    %v212 = vld [vmem:[#allocation7 + $0x310] sm:$0xff]
    %v213 = vld [vmem:[#allocation7 + $0x318] sm:$0xff]
    %v214 = vld [vmem:[#allocation7 + $0x320] sm:$0xff]
    %v215 = vld [vmem:[#allocation7 + $0x328] sm:$0xff]
    %v216 = vld [vmem:[#allocation7 + $0x330] sm:$0xff]
    %v217 = vld [vmem:[#allocation7 + $0x338] sm:$0xff]
    %v218 = vld [vmem:[#allocation7 + $0x340] sm:$0xff]
    %v219 = vld [vmem:[#allocation7 + $0x348] sm:$0xff]
    %v220 = vld [vmem:[#allocation7 + $0x350] sm:$0xff]
    %v221 = vld [vmem:[#allocation7 + $0x358] sm:$0xff]
    %v222 = vld [vmem:[#allocation7 + $0x360] sm:$0xff]
    %v223 = vld [vmem:[#allocation7 + $0x368] sm:$0xff]
    %v224 = vld [vmem:[#allocation7 + $0x370] sm:$0xff]
    %v225 = vld [vmem:[#allocation7 + $0x378] sm:$0xff]
    %v226 = vld [vmem:[#allocation7 + $0x380] sm:$0xff]
    %v227 = vld [vmem:[#allocation7 + $0x388] sm:$0xff]
    %v228 = vld [vmem:[#allocation7 + $0x390] sm:$0xff]
    %v229 = vld [vmem:[#allocation7 + $0x398] sm:$0xff]
    %v230 = vld [vmem:[#allocation7 + $0x3a0] sm:$0xff]
    %v231 = vld [vmem:[#allocation7 + $0x3a8] sm:$0xff]
    %v232 = vld [vmem:[#allocation7 + $0x3b0] sm:$0xff]
    %v233 = vld [vmem:[#allocation7 + $0x3b8] sm:$0xff]
    %v234 = vld [vmem:[#allocation7 + $0x3c0] sm:$0xff]
    %v235 = vld [vmem:[#allocation7 + $0x3c8] sm:$0xff]
    %v236 = vld [vmem:[#allocation7 + $0x3d0] sm:$0xff]
    %v237 = vld [vmem:[#allocation7 + $0x3d8] sm:$0xff]
    %v238 = vld [vmem:[#allocation7 + $0x3e0] sm:$0xff]
    %v239 = vld [vmem:[#allocation7 + $0x3e8] sm:$0xff]
    %v240 = vld [vmem:[#allocation7 + $0x3f0] sm:$0xff]
    %v241 = vld [vmem:[#allocation7 + $0x3f8] sm:$0xff]
    %v242 = vld [vmem:[#allocation7 + $0x400] sm:$0xff]
    %v243 = vld [vmem:[#allocation7 + $0x408] sm:$0xff]
    %v244 = vld [vmem:[#allocation7 + $0x410] sm:$0xff]
    %v245 = vld [vmem:[#allocation7 + $0x418] sm:$0xff]
    %v246 = vld [vmem:[#allocation7 + $0x420] sm:$0xff]
    %v247 = vld [vmem:[#allocation7 + $0x428] sm:$0xff]
    %v248 = vld [vmem:[#allocation7 + $0x430] sm:$0xff]
    %v249 = vld [vmem:[#allocation7 + $0x438] sm:$0xff]
    %v250 = vld [vmem:[#allocation7 + $0x440] sm:$0xff]
    %v251 = vld [vmem:[#allocation7 + $0x448] sm:$0xff]
    %v252 = vld [vmem:[#allocation7 + $0x450] sm:$0xff]
    %v253 = vld [vmem:[#allocation7 + $0x458] sm:$0xff]
    %v254 = vld [vmem:[#allocation7 + $0x460] sm:$0xff]
    %v255 = vld [vmem:[#allocation7 + $0x468] sm:$0xff]
    %v256 = vld [vmem:[#allocation7 + $0x470] sm:$0xff]
    %v257 = vld [vmem:[#allocation7 + $0x478] sm:$0xff]
    %v258 = vld [vmem:[#allocation7 + $0x480] sm:$0xff]
    %v259 = vld [vmem:[#allocation7 + $0x488] sm:$0xff]
    %v260 = vld [vmem:[#allocation7 + $0x490] sm:$0xff]
    %v261 = vld [vmem:[#allocation7 + $0x498] sm:$0xff]
    %v262 = vld [vmem:[#allocation7 + $0x4a0] sm:$0xff]
    %v263 = vld [vmem:[#allocation7 + $0x4a8] sm:$0xff]
    %v264 = vld [vmem:[#allocation7 + $0x4b0] sm:$0xff]
    %v265 = vld [vmem:[#allocation7 + $0x4b8] sm:$0xff]
    %v266 = vld [vmem:[#allocation7 + $0x4c0] sm:$0xff]
    %v267 = vld [vmem:[#allocation7 + $0x4c8] sm:$0xff]
    %v268 = vld [vmem:[#allocation7 + $0x4d0] sm:$0xff]
    %v269 = vld [vmem:[#allocation7 + $0x4d8] sm:$0xff]
    %v270 = vld [vmem:[#allocation7 + $0x4e0] sm:$0xff]
    %v271 = vld [vmem:[#allocation7 + $0x4e8] sm:$0xff]
    %v272 = vld [vmem:[#allocation7 + $0x4f0] sm:$0xff]
    %v273 = vld [vmem:[#allocation7 + $0x4f8] sm:$0xff]
    %v274 = vld [vmem:[#allocation7 + $0x500] sm:$0xff]
    %v275 = vld [vmem:[#allocation7 + $0x508] sm:$0xff]
    %v276 = vld [vmem:[#allocation7 + $0x510] sm:$0xff]
    %v277 = vld [vmem:[#allocation7 + $0x518] sm:$0xff]
    %v278 = vld [vmem:[#allocation7 + $0x520] sm:$0xff]
    %v279 = vld [vmem:[#allocation7 + $0x528] sm:$0xff]
    %v280 = vld [vmem:[#allocation7 + $0x530] sm:$0xff]
    %v281 = vld [vmem:[#allocation7 + $0x538] sm:$0xff]
    %v282 = vld [vmem:[#allocation7 + $0x540] sm:$0xff]
    %v283 = vld [vmem:[#allocation7 + $0x548] sm:$0xff]
    %v284 = vld [vmem:[#allocation7 + $0x550] sm:$0xff]
    %v285 = vld [vmem:[#allocation7 + $0x558] sm:$0xff]
    %v286 = vld [vmem:[#allocation7 + $0x560] sm:$0xff]
    %v287 = vld [vmem:[#allocation7 + $0x568] sm:$0xff]
    %v288 = vld [vmem:[#allocation7 + $0x570] sm:$0xff]
    %v289 = vld [vmem:[#allocation7 + $0x578] sm:$0xff]
    %v290 = vld [vmem:[#allocation7 + $0x580] sm:$0xff]
    %v291 = vld [vmem:[#allocation7 + $0x588] sm:$0xff]
    %v292 = vld [vmem:[#allocation7 + $0x590] sm:$0xff]
    %v293 = vld [vmem:[#allocation7 + $0x598] sm:$0xff]
    %v294 = vld [vmem:[#allocation7 + $0x5a0] sm:$0xff]
    %v295 = vld [vmem:[#allocation7 + $0x5a8] sm:$0xff]
    %v296 = vld [vmem:[#allocation7 + $0x5b0] sm:$0xff]
    %v297 = vld [vmem:[#allocation7 + $0x5b8] sm:$0xff]
    %v298 = vld [vmem:[#allocation7 + $0x5c0] sm:$0xff]
    %v299 = vld [vmem:[#allocation7 + $0x5c8] sm:$0xff]
    %v300 = vld [vmem:[#allocation7 + $0x5d0] sm:$0xff]
    %v301 = vld [vmem:[#allocation7 + $0x5d8] sm:$0xff]
    %v302 = vld [vmem:[#allocation7 + $0x5e0] sm:$0xff]
    %v303 = vld [vmem:[#allocation7 + $0x5e8] sm:$0xff]
    %v304 = vld [vmem:[#allocation7 + $0x5f0] sm:$0xff]
    %v305 = vld [vmem:[#allocation7 + $0x5f8] sm:$0xff]
    %v306 = vld [vmem:[#allocation7 + $0x600] sm:$0xff]
    %v307 = vld [vmem:[#allocation7 + $0x608] sm:$0xff]
    %v308 = vld [vmem:[#allocation7 + $0x610] sm:$0xff]
    %v309 = vld [vmem:[#allocation7 + $0x618] sm:$0xff]
    %v310 = vld [vmem:[#allocation7 + $0x620] sm:$0xff]
    %v311 = vld [vmem:[#allocation7 + $0x628] sm:$0xff]
    %v312 = vld [vmem:[#allocation7 + $0x630] sm:$0xff]
    %v313 = vld [vmem:[#allocation7 + $0x638] sm:$0xff]
    %v314 = vld [vmem:[#allocation7 + $0x640] sm:$0xff]
    %v315 = vld [vmem:[#allocation7 + $0x648] sm:$0xff]
    %v316 = vld [vmem:[#allocation7 + $0x650] sm:$0xff]
    %v317 = vld [vmem:[#allocation7 + $0x658] sm:$0xff]
    %v318 = vld [vmem:[#allocation7 + $0x660] sm:$0xff]
    %v319 = vld [vmem:[#allocation7 + $0x668] sm:$0xff]
    %v320 = vld [vmem:[#allocation7 + $0x670] sm:$0xff]
    %v321 = vld [vmem:[#allocation7 + $0x678] sm:$0xff]
    %v322 = vld [vmem:[#allocation7 + $0x680] sm:$0xff]
    %v323 = vld [vmem:[#allocation7 + $0x688] sm:$0xff]
    %v324 = vld [vmem:[#allocation7 + $0x690] sm:$0xff]
    %v325 = vld [vmem:[#allocation7 + $0x698] sm:$0xff]
    %v326 = vld [vmem:[#allocation7 + $0x6a0] sm:$0xff]
    %v327 = vld [vmem:[#allocation7 + $0x6a8] sm:$0xff]
    %v328 = vld [vmem:[#allocation7 + $0x6b0] sm:$0xff]
    %v329 = vld [vmem:[#allocation7 + $0x6b8] sm:$0xff]
    %v330 = vld [vmem:[#allocation7 + $0x6c0] sm:$0xff]
    %v331 = vld [vmem:[#allocation7 + $0x6c8] sm:$0xff]
    %v332 = vld [vmem:[#allocation7 + $0x6d0] sm:$0xff]
    %v333 = vld [vmem:[#allocation7 + $0x6d8] sm:$0xff]
    %v334 = vld [vmem:[#allocation7 + $0x6e0] sm:$0xff]
    %v335 = vld [vmem:[#allocation7 + $0x6e8] sm:$0xff]
    %v336 = vld [vmem:[#allocation7 + $0x6f0] sm:$0xff]
    %v337 = vld [vmem:[#allocation7 + $0x6f8] sm:$0xff]
    %v338 = vld [vmem:[#allocation7 + $0x700] sm:$0xff]
    %v339 = vld [vmem:[#allocation7 + $0x708] sm:$0xff]
    %v340 = vld [vmem:[#allocation7 + $0x710] sm:$0xff]
    %v341 = vld [vmem:[#allocation7 + $0x718] sm:$0xff]
    %v342 = vld [vmem:[#allocation7 + $0x720] sm:$0xff]
    %v343 = vld [vmem:[#allocation7 + $0x728] sm:$0xff]
    %v344 = vld [vmem:[#allocation7 + $0x730] sm:$0xff]
    %v345 = vld [vmem:[#allocation7 + $0x738] sm:$0xff]
    %v346 = vld [vmem:[#allocation7 + $0x740] sm:$0xff]
    %v347 = vld [vmem:[#allocation7 + $0x748] sm:$0xff]
    %v348 = vld [vmem:[#allocation7 + $0x750] sm:$0xff]
    %v349 = vld [vmem:[#allocation7 + $0x758] sm:$0xff]
    %v350 = vld [vmem:[#allocation7 + $0x760] sm:$0xff]
    %v351 = vld [vmem:[#allocation7 + $0x768] sm:$0xff]
    %v352 = vld [vmem:[#allocation7 + $0x770] sm:$0xff]
    %v353 = vld [vmem:[#allocation7 + $0x778] sm:$0xff]
    %v354 = vld [vmem:[#allocation7 + $0x780] sm:$0xff]
    %v355 = vld [vmem:[#allocation7 + $0x788] sm:$0xff]
    %v356 = vld [vmem:[#allocation7 + $0x790] sm:$0xff]
    %v357 = vld [vmem:[#allocation7 + $0x798] sm:$0xff]
    %v358 = vld [vmem:[#allocation7 + $0x7a0] sm:$0xff]
    %v359 = vld [vmem:[#allocation7 + $0x7a8] sm:$0xff]
    %v360 = vld [vmem:[#allocation7 + $0x7b0] sm:$0xff]
    %v361 = vld [vmem:[#allocation7 + $0x7b8] sm:$0xff]
    %v362 = vld [vmem:[#allocation7 + $0x7c0] sm:$0xff]
    %v363 = vld [vmem:[#allocation7 + $0x7c8] sm:$0xff]
    %v364 = vld [vmem:[#allocation7 + $0x7d0] sm:$0xff]
    %v365 = vld [vmem:[#allocation7 + $0x7d8] sm:$0xff]
    %v366 = vld [vmem:[#allocation7 + $0x7e0] sm:$0xff]
    %v367 = vld [vmem:[#allocation7 + $0x7e8] sm:$0xff]
    %v368 = vld [vmem:[#allocation7 + $0x7f0] sm:$0xff]
    %v369 = vld [vmem:[#allocation7 + $0x7f8] sm:$0xff]
    %v626 = vunpack.c.l.b16 %v114
    %v627 = vunpack.c.h.b16 %v114
    %v628 = vunpack.c.l.b16 %v115
    %v629 = vunpack.c.h.b16 %v115
    %v630 = vunpack.c.l.b16 %v116
    %v631 = vunpack.c.h.b16 %v116
    %v632 = vunpack.c.l.b16 %v117
    %v633 = vunpack.c.h.b16 %v117
    %v634 = vunpack.c.l.b16 %v118
    %v635 = vunpack.c.h.b16 %v118
    %v636 = vunpack.c.l.b16 %v119
    %v637 = vunpack.c.h.b16 %v119
    %v638 = vunpack.c.l.b16 %v120
    %v639 = vunpack.c.h.b16 %v120
    %v640 = vunpack.c.l.b16 %v121
    %v641 = vunpack.c.h.b16 %v121
    %v642 = vunpack.c.l.b16 %v122
    %v643 = vunpack.c.h.b16 %v122
    %v644 = vunpack.c.l.b16 %v123
    %v645 = vunpack.c.h.b16 %v123
    %v646 = vunpack.c.l.b16 %v124
    %v647 = vunpack.c.h.b16 %v124
    %v648 = vunpack.c.l.b16 %v125
    %v649 = vunpack.c.h.b16 %v125
    %v650 = vunpack.c.l.b16 %v126
    %v651 = vunpack.c.h.b16 %v126
    %v652 = vunpack.c.l.b16 %v127
    %v653 = vunpack.c.h.b16 %v127
    %v654 = vunpack.c.l.b16 %v128
    %v655 = vunpack.c.h.b16 %v128
    %v656 = vunpack.c.l.b16 %v129
    %v657 = vunpack.c.h.b16 %v129
    %v658 = vunpack.c.l.b16 %v130
    %v659 = vunpack.c.h.b16 %v130
    %v660 = vunpack.c.l.b16 %v131
    %v661 = vunpack.c.h.b16 %v131
    %v662 = vunpack.c.l.b16 %v132
    %v663 = vunpack.c.h.b16 %v132
    %v664 = vunpack.c.l.b16 %v133
    %v665 = vunpack.c.h.b16 %v133
    %v666 = vunpack.c.l.b16 %v134
    %v667 = vunpack.c.h.b16 %v134
    %v668 = vunpack.c.l.b16 %v135
    %v669 = vunpack.c.h.b16 %v135
    %v670 = vunpack.c.l.b16 %v136
    %v671 = vunpack.c.h.b16 %v136
    %v672 = vunpack.c.l.b16 %v137
    %v673 = vunpack.c.h.b16 %v137
    %v674 = vunpack.c.l.b16 %v138
    %v675 = vunpack.c.h.b16 %v138
    %v676 = vunpack.c.l.b16 %v139
    %v677 = vunpack.c.h.b16 %v139
    %v678 = vunpack.c.l.b16 %v140
    %v679 = vunpack.c.h.b16 %v140
    %v680 = vunpack.c.l.b16 %v141
    %v681 = vunpack.c.h.b16 %v141
    %v682 = vunpack.c.l.b16 %v142
    %v683 = vunpack.c.h.b16 %v142
    %v684 = vunpack.c.l.b16 %v143
    %v685 = vunpack.c.h.b16 %v143
    %v686 = vunpack.c.l.b16 %v144
    %v687 = vunpack.c.h.b16 %v144
    %v688 = vunpack.c.l.b16 %v145
    %v689 = vunpack.c.h.b16 %v145
    %v690 = vunpack.c.l.b16 %v146
    %v691 = vunpack.c.h.b16 %v146
    %v692 = vunpack.c.l.b16 %v147
    %v693 = vunpack.c.h.b16 %v147
    %v694 = vunpack.c.l.b16 %v148
    %v695 = vunpack.c.h.b16 %v148
    %v696 = vunpack.c.l.b16 %v149
    %v697 = vunpack.c.h.b16 %v149
    %v698 = vunpack.c.l.b16 %v150
    %v699 = vunpack.c.h.b16 %v150
    %v700 = vunpack.c.l.b16 %v151
    %v701 = vunpack.c.h.b16 %v151
    %v702 = vunpack.c.l.b16 %v152
    %v703 = vunpack.c.h.b16 %v152
    %v704 = vunpack.c.l.b16 %v153
    %v705 = vunpack.c.h.b16 %v153
    %v706 = vunpack.c.l.b16 %v154
    %v707 = vunpack.c.h.b16 %v154
    %v708 = vunpack.c.l.b16 %v155
    %v709 = vunpack.c.h.b16 %v155
    %v710 = vunpack.c.l.b16 %v156
    %v711 = vunpack.c.h.b16 %v156
    %v712 = vunpack.c.l.b16 %v157
    %v713 = vunpack.c.h.b16 %v157
    %v714 = vunpack.c.l.b16 %v158
    %v715 = vunpack.c.h.b16 %v158
    %v716 = vunpack.c.l.b16 %v159
    %v717 = vunpack.c.h.b16 %v159
    %v718 = vunpack.c.l.b16 %v160
    %v719 = vunpack.c.h.b16 %v160
    %v720 = vunpack.c.l.b16 %v161
    %v721 = vunpack.c.h.b16 %v161
    %v722 = vunpack.c.l.b16 %v162
    %v723 = vunpack.c.h.b16 %v162
    %v724 = vunpack.c.l.b16 %v163
    %v725 = vunpack.c.h.b16 %v163
    %v726 = vunpack.c.l.b16 %v164
    %v727 = vunpack.c.h.b16 %v164
    %v728 = vunpack.c.l.b16 %v165
    %v729 = vunpack.c.h.b16 %v165
    %v730 = vunpack.c.l.b16 %v166
    %v731 = vunpack.c.h.b16 %v166
    %v732 = vunpack.c.l.b16 %v167
    %v733 = vunpack.c.h.b16 %v167
    %v734 = vunpack.c.l.b16 %v168
    %v735 = vunpack.c.h.b16 %v168
    %v736 = vunpack.c.l.b16 %v169
    %v737 = vunpack.c.h.b16 %v169
    %v738 = vunpack.c.l.b16 %v170
    %v739 = vunpack.c.h.b16 %v170
    %v740 = vunpack.c.l.b16 %v171
    %v741 = vunpack.c.h.b16 %v171
    %v742 = vunpack.c.l.b16 %v172
    %v743 = vunpack.c.h.b16 %v172
    %v744 = vunpack.c.l.b16 %v173
    %v745 = vunpack.c.h.b16 %v173
    %v746 = vunpack.c.l.b16 %v174
    %v747 = vunpack.c.h.b16 %v174
    %v748 = vunpack.c.l.b16 %v175
    %v749 = vunpack.c.h.b16 %v175
    %v750 = vunpack.c.l.b16 %v176
    %v751 = vunpack.c.h.b16 %v176
    %v752 = vunpack.c.l.b16 %v177
    %v753 = vunpack.c.h.b16 %v177
    %v754 = vunpack.c.l.b16 %v178
    %v755 = vunpack.c.h.b16 %v178
    %v756 = vunpack.c.l.b16 %v179
    %v757 = vunpack.c.h.b16 %v179
    %v758 = vunpack.c.l.b16 %v180
    %v759 = vunpack.c.h.b16 %v180
    %v760 = vunpack.c.l.b16 %v181
    %v761 = vunpack.c.h.b16 %v181
    %v762 = vunpack.c.l.b16 %v182
    %v763 = vunpack.c.h.b16 %v182
    %v764 = vunpack.c.l.b16 %v183
    %v765 = vunpack.c.h.b16 %v183
    %v766 = vunpack.c.l.b16 %v184
    %v767 = vunpack.c.h.b16 %v184
    %v768 = vunpack.c.l.b16 %v185
    %v769 = vunpack.c.h.b16 %v185
    %v770 = vunpack.c.l.b16 %v186
    %v771 = vunpack.c.h.b16 %v186
    %v772 = vunpack.c.l.b16 %v187
    %v773 = vunpack.c.h.b16 %v187
    %v774 = vunpack.c.l.b16 %v188
    %v775 = vunpack.c.h.b16 %v188
    %v776 = vunpack.c.l.b16 %v189
    %v777 = vunpack.c.h.b16 %v189
    %v778 = vunpack.c.l.b16 %v190
    %v779 = vunpack.c.h.b16 %v190
    %v780 = vunpack.c.l.b16 %v191
    %v781 = vunpack.c.h.b16 %v191
    %v782 = vunpack.c.l.b16 %v192
    %v783 = vunpack.c.h.b16 %v192
    %v784 = vunpack.c.l.b16 %v193
    %v785 = vunpack.c.h.b16 %v193
    %v786 = vunpack.c.l.b16 %v194
    %v787 = vunpack.c.h.b16 %v194
    %v788 = vunpack.c.l.b16 %v195
    %v789 = vunpack.c.h.b16 %v195
    %v790 = vunpack.c.l.b16 %v196
    %v791 = vunpack.c.h.b16 %v196
    %v792 = vunpack.c.l.b16 %v197
    %v793 = vunpack.c.h.b16 %v197
    %v794 = vunpack.c.l.b16 %v198
    %v795 = vunpack.c.h.b16 %v198
    %v796 = vunpack.c.l.b16 %v199
    %v797 = vunpack.c.h.b16 %v199
    %v798 = vunpack.c.l.b16 %v200
    %v799 = vunpack.c.h.b16 %v200
    %v800 = vunpack.c.l.b16 %v201
    %v801 = vunpack.c.h.b16 %v201
    %v802 = vunpack.c.l.b16 %v202
    %v803 = vunpack.c.h.b16 %v202
    %v804 = vunpack.c.l.b16 %v203
    %v805 = vunpack.c.h.b16 %v203
    %v806 = vunpack.c.l.b16 %v204
    %v807 = vunpack.c.h.b16 %v204
    %v808 = vunpack.c.l.b16 %v205
    %v809 = vunpack.c.h.b16 %v205
    %v810 = vunpack.c.l.b16 %v206
    %v811 = vunpack.c.h.b16 %v206
    %v812 = vunpack.c.l.b16 %v207
    %v813 = vunpack.c.h.b16 %v207
    %v814 = vunpack.c.l.b16 %v208
    %v815 = vunpack.c.h.b16 %v208
    %v816 = vunpack.c.l.b16 %v209
    %v817 = vunpack.c.h.b16 %v209
    %v818 = vunpack.c.l.b16 %v210
    %v819 = vunpack.c.h.b16 %v210
    %v820 = vunpack.c.l.b16 %v211
    %v821 = vunpack.c.h.b16 %v211
    %v822 = vunpack.c.l.b16 %v212
    %v823 = vunpack.c.h.b16 %v212
    %v824 = vunpack.c.l.b16 %v213
    %v825 = vunpack.c.h.b16 %v213
    %v826 = vunpack.c.l.b16 %v214
    %v827 = vunpack.c.h.b16 %v214
    %v828 = vunpack.c.l.b16 %v215
    %v829 = vunpack.c.h.b16 %v215
    %v830 = vunpack.c.l.b16 %v216
    %v831 = vunpack.c.h.b16 %v216
    %v832 = vunpack.c.l.b16 %v217
    %v833 = vunpack.c.h.b16 %v217
    %v834 = vunpack.c.l.b16 %v218
    %v835 = vunpack.c.h.b16 %v218
    %v836 = vunpack.c.l.b16 %v219
    %v837 = vunpack.c.h.b16 %v219
    %v838 = vunpack.c.l.b16 %v220
    %v839 = vunpack.c.h.b16 %v220
    %v840 = vunpack.c.l.b16 %v221
    %v841 = vunpack.c.h.b16 %v221
    %v842 = vunpack.c.l.b16 %v222
    %v843 = vunpack.c.h.b16 %v222
    %v844 = vunpack.c.l.b16 %v223
    %v845 = vunpack.c.h.b16 %v223
    %v846 = vunpack.c.l.b16 %v224
    %v847 = vunpack.c.h.b16 %v224
    %v848 = vunpack.c.l.b16 %v225
    %v849 = vunpack.c.h.b16 %v225
    %v850 = vunpack.c.l.b16 %v226
    %v851 = vunpack.c.h.b16 %v226
    %v852 = vunpack.c.l.b16 %v227
    %v853 = vunpack.c.h.b16 %v227
    %v854 = vunpack.c.l.b16 %v228
    %v855 = vunpack.c.h.b16 %v228
    %v856 = vunpack.c.l.b16 %v229
    %v857 = vunpack.c.h.b16 %v229
    %v858 = vunpack.c.l.b16 %v230
    %v859 = vunpack.c.h.b16 %v230
    %v860 = vunpack.c.l.b16 %v231
    %v861 = vunpack.c.h.b16 %v231
    %v862 = vunpack.c.l.b16 %v232
    %v863 = vunpack.c.h.b16 %v232
    %v864 = vunpack.c.l.b16 %v233
    %v865 = vunpack.c.h.b16 %v233
    %v866 = vunpack.c.l.b16 %v234
    %v867 = vunpack.c.h.b16 %v234
    %v868 = vunpack.c.l.b16 %v235
    %v869 = vunpack.c.h.b16 %v235
    %v870 = vunpack.c.l.b16 %v236
    %v871 = vunpack.c.h.b16 %v236
    %v872 = vunpack.c.l.b16 %v237
    %v873 = vunpack.c.h.b16 %v237
    %v874 = vunpack.c.l.b16 %v238
    %v875 = vunpack.c.h.b16 %v238
    %v876 = vunpack.c.l.b16 %v239
    %v877 = vunpack.c.h.b16 %v239
    %v878 = vunpack.c.l.b16 %v240
    %v879 = vunpack.c.h.b16 %v240
    %v880 = vunpack.c.l.b16 %v241
    %v881 = vunpack.c.h.b16 %v241
    %v882 = vunpack.c.l.b16 %v242
    %v883 = vunpack.c.h.b16 %v242
    %v884 = vunpack.c.l.b16 %v243
    %v885 = vunpack.c.h.b16 %v243
    %v886 = vunpack.c.l.b16 %v244
    %v887 = vunpack.c.h.b16 %v244
    %v888 = vunpack.c.l.b16 %v245
    %v889 = vunpack.c.h.b16 %v245
    %v890 = vunpack.c.l.b16 %v246
    %v891 = vunpack.c.h.b16 %v246
    %v892 = vunpack.c.l.b16 %v247
    %v893 = vunpack.c.h.b16 %v247
    %v894 = vunpack.c.l.b16 %v248
    %v895 = vunpack.c.h.b16 %v248
    %v896 = vunpack.c.l.b16 %v249
    %v897 = vunpack.c.h.b16 %v249
    %v898 = vunpack.c.l.b16 %v250
    %v899 = vunpack.c.h.b16 %v250
    %v900 = vunpack.c.l.b16 %v251
    %v901 = vunpack.c.h.b16 %v251
    %v902 = vunpack.c.l.b16 %v252
    %v903 = vunpack.c.h.b16 %v252
    %v904 = vunpack.c.l.b16 %v253
    %v905 = vunpack.c.h.b16 %v253
    %v906 = vunpack.c.l.b16 %v254
    %v907 = vunpack.c.h.b16 %v254
    %v908 = vunpack.c.l.b16 %v255
    %v909 = vunpack.c.h.b16 %v255
    %v910 = vunpack.c.l.b16 %v256
    %v911 = vunpack.c.h.b16 %v256
    %v912 = vunpack.c.l.b16 %v257
    %v913 = vunpack.c.h.b16 %v257
    %v914 = vunpack.c.l.b16 %v258
    %v915 = vunpack.c.h.b16 %v258
    %v916 = vunpack.c.l.b16 %v259
    %v917 = vunpack.c.h.b16 %v259
    %v918 = vunpack.c.l.b16 %v260
    %v919 = vunpack.c.h.b16 %v260
    %v920 = vunpack.c.l.b16 %v261
    %v921 = vunpack.c.h.b16 %v261
    %v922 = vunpack.c.l.b16 %v262
    %v923 = vunpack.c.h.b16 %v262
    %v924 = vunpack.c.l.b16 %v263
    %v925 = vunpack.c.h.b16 %v263
    %v926 = vunpack.c.l.b16 %v264
    %v927 = vunpack.c.h.b16 %v264
    %v928 = vunpack.c.l.b16 %v265
    %v929 = vunpack.c.h.b16 %v265
    %v930 = vunpack.c.l.b16 %v266
    %v931 = vunpack.c.h.b16 %v266
    %v932 = vunpack.c.l.b16 %v267
    %v933 = vunpack.c.h.b16 %v267
    %v934 = vunpack.c.l.b16 %v268
    %v935 = vunpack.c.h.b16 %v268
    %v936 = vunpack.c.l.b16 %v269
    %v937 = vunpack.c.h.b16 %v269
    %v938 = vunpack.c.l.b16 %v270
    %v939 = vunpack.c.h.b16 %v270
    %v940 = vunpack.c.l.b16 %v271
    %v941 = vunpack.c.h.b16 %v271
    %v942 = vunpack.c.l.b16 %v272
    %v943 = vunpack.c.h.b16 %v272
    %v944 = vunpack.c.l.b16 %v273
    %v945 = vunpack.c.h.b16 %v273
    %v946 = vunpack.c.l.b16 %v274
    %v947 = vunpack.c.h.b16 %v274
    %v948 = vunpack.c.l.b16 %v275
    %v949 = vunpack.c.h.b16 %v275
    %v950 = vunpack.c.l.b16 %v276
    %v951 = vunpack.c.h.b16 %v276
    %v952 = vunpack.c.l.b16 %v277
    %v953 = vunpack.c.h.b16 %v277
    %v954 = vunpack.c.l.b16 %v278
    %v955 = vunpack.c.h.b16 %v278
    %v956 = vunpack.c.l.b16 %v279
    %v957 = vunpack.c.h.b16 %v279
    %v958 = vunpack.c.l.b16 %v280
    %v959 = vunpack.c.h.b16 %v280
    %v960 = vunpack.c.l.b16 %v281
    %v961 = vunpack.c.h.b16 %v281
    %v962 = vunpack.c.l.b16 %v282
    %v963 = vunpack.c.h.b16 %v282
    %v964 = vunpack.c.l.b16 %v283
    %v965 = vunpack.c.h.b16 %v283
    %v966 = vunpack.c.l.b16 %v284
    %v967 = vunpack.c.h.b16 %v284
    %v968 = vunpack.c.l.b16 %v285
    %v969 = vunpack.c.h.b16 %v285
    %v970 = vunpack.c.l.b16 %v286
    %v971 = vunpack.c.h.b16 %v286
    %v972 = vunpack.c.l.b16 %v287
    %v973 = vunpack.c.h.b16 %v287
    %v974 = vunpack.c.l.b16 %v288
    %v975 = vunpack.c.h.b16 %v288
    %v976 = vunpack.c.l.b16 %v289
    %v977 = vunpack.c.h.b16 %v289
    %v978 = vunpack.c.l.b16 %v290
    %v979 = vunpack.c.h.b16 %v290
    %v980 = vunpack.c.l.b16 %v291
    %v981 = vunpack.c.h.b16 %v291
    %v982 = vunpack.c.l.b16 %v292
    %v983 = vunpack.c.h.b16 %v292
    %v984 = vunpack.c.l.b16 %v293
    %v985 = vunpack.c.h.b16 %v293
    %v986 = vunpack.c.l.b16 %v294
    %v987 = vunpack.c.h.b16 %v294
    %v988 = vunpack.c.l.b16 %v295
    %v989 = vunpack.c.h.b16 %v295
    %v990 = vunpack.c.l.b16 %v296
    %v991 = vunpack.c.h.b16 %v296
    %v992 = vunpack.c.l.b16 %v297
    %v993 = vunpack.c.h.b16 %v297
    %v994 = vunpack.c.l.b16 %v298
    %v995 = vunpack.c.h.b16 %v298
    %v996 = vunpack.c.l.b16 %v299
    %v997 = vunpack.c.h.b16 %v299
    %v998 = vunpack.c.l.b16 %v300
    %v999 = vunpack.c.h.b16 %v300
    %v1000 = vunpack.c.l.b16 %v301
    %v1001 = vunpack.c.h.b16 %v301
    %v1002 = vunpack.c.l.b16 %v302
    %v1003 = vunpack.c.h.b16 %v302
    %v1004 = vunpack.c.l.b16 %v303
    %v1005 = vunpack.c.h.b16 %v303
    %v1006 = vunpack.c.l.b16 %v304
    %v1007 = vunpack.c.h.b16 %v304
    %v1008 = vunpack.c.l.b16 %v305
    %v1009 = vunpack.c.h.b16 %v305
    %v1010 = vunpack.c.l.b16 %v306
    %v1011 = vunpack.c.h.b16 %v306
    %v1012 = vunpack.c.l.b16 %v307
    %v1013 = vunpack.c.h.b16 %v307
    %v1014 = vunpack.c.l.b16 %v308
    %v1015 = vunpack.c.h.b16 %v308
    %v1016 = vunpack.c.l.b16 %v309
    %v1017 = vunpack.c.h.b16 %v309
    %v1018 = vunpack.c.l.b16 %v310
    %v1019 = vunpack.c.h.b16 %v310
    %v1020 = vunpack.c.l.b16 %v311
    %v1021 = vunpack.c.h.b16 %v311
    %v1022 = vunpack.c.l.b16 %v312
    %v1023 = vunpack.c.h.b16 %v312
    %v1024 = vunpack.c.l.b16 %v313
    %v1025 = vunpack.c.h.b16 %v313
    %v1026 = vunpack.c.l.b16 %v314
    %v1027 = vunpack.c.h.b16 %v314
    %v1028 = vunpack.c.l.b16 %v315
    %v1029 = vunpack.c.h.b16 %v315
    %v1030 = vunpack.c.l.b16 %v316
    %v1031 = vunpack.c.h.b16 %v316
    %v1032 = vunpack.c.l.b16 %v317
    %v1033 = vunpack.c.h.b16 %v317
    %v1034 = vunpack.c.l.b16 %v318
    %v1035 = vunpack.c.h.b16 %v318
    %v1036 = vunpack.c.l.b16 %v319
    %v1037 = vunpack.c.h.b16 %v319
    %v1038 = vunpack.c.l.b16 %v320
    %v1039 = vunpack.c.h.b16 %v320
    %v1040 = vunpack.c.l.b16 %v321
    %v1041 = vunpack.c.h.b16 %v321
    %v1042 = vunpack.c.l.b16 %v322
    %v1043 = vunpack.c.h.b16 %v322
    %v1044 = vunpack.c.l.b16 %v323
    %v1045 = vunpack.c.h.b16 %v323
    %v1046 = vunpack.c.l.b16 %v324
    %v1047 = vunpack.c.h.b16 %v324
    %v1048 = vunpack.c.l.b16 %v325
    %v1049 = vunpack.c.h.b16 %v325
    %v1050 = vunpack.c.l.b16 %v326
    %v1051 = vunpack.c.h.b16 %v326
    %v1052 = vunpack.c.l.b16 %v327
    %v1053 = vunpack.c.h.b16 %v327
    %v1054 = vunpack.c.l.b16 %v328
    %v1055 = vunpack.c.h.b16 %v328
    %v1056 = vunpack.c.l.b16 %v329
    %v1057 = vunpack.c.h.b16 %v329
    %v1058 = vunpack.c.l.b16 %v330
    %v1059 = vunpack.c.h.b16 %v330
    %v1060 = vunpack.c.l.b16 %v331
    %v1061 = vunpack.c.h.b16 %v331
    %v1062 = vunpack.c.l.b16 %v332
    %v1063 = vunpack.c.h.b16 %v332
    %v1064 = vunpack.c.l.b16 %v333
    %v1065 = vunpack.c.h.b16 %v333
    %v1066 = vunpack.c.l.b16 %v334
    %v1067 = vunpack.c.h.b16 %v334
    %v1068 = vunpack.c.l.b16 %v335
    %v1069 = vunpack.c.h.b16 %v335
    %v1070 = vunpack.c.l.b16 %v336
    %v1071 = vunpack.c.h.b16 %v336
    %v1072 = vunpack.c.l.b16 %v337
    %v1073 = vunpack.c.h.b16 %v337
    %v1074 = vunpack.c.l.b16 %v338
    %v1075 = vunpack.c.h.b16 %v338
    %v1076 = vunpack.c.l.b16 %v339
    %v1077 = vunpack.c.h.b16 %v339
    %v1078 = vunpack.c.l.b16 %v340
    %v1079 = vunpack.c.h.b16 %v340
    %v1080 = vunpack.c.l.b16 %v341
    %v1081 = vunpack.c.h.b16 %v341
    %v1082 = vunpack.c.l.b16 %v342
    %v1083 = vunpack.c.h.b16 %v342
    %v1084 = vunpack.c.l.b16 %v343
    %v1085 = vunpack.c.h.b16 %v343
    %v1086 = vunpack.c.l.b16 %v344
    %v1087 = vunpack.c.h.b16 %v344
    %v1088 = vunpack.c.l.b16 %v345
    %v1089 = vunpack.c.h.b16 %v345
    %v1090 = vunpack.c.l.b16 %v346
    %v1091 = vunpack.c.h.b16 %v346
    %v1092 = vunpack.c.l.b16 %v347
    %v1093 = vunpack.c.h.b16 %v347
    %v1094 = vunpack.c.l.b16 %v348
    %v1095 = vunpack.c.h.b16 %v348
    %v1096 = vunpack.c.l.b16 %v349
    %v1097 = vunpack.c.h.b16 %v349
    %v1098 = vunpack.c.l.b16 %v350
    %v1099 = vunpack.c.h.b16 %v350
    %v1100 = vunpack.c.l.b16 %v351
    %v1101 = vunpack.c.h.b16 %v351
    %v1102 = vunpack.c.l.b16 %v352
    %v1103 = vunpack.c.h.b16 %v352
    %v1104 = vunpack.c.l.b16 %v353
    %v1105 = vunpack.c.h.b16 %v353
    %v1106 = vunpack.c.l.b16 %v354
    %v1107 = vunpack.c.h.b16 %v354
    %v1108 = vunpack.c.l.b16 %v355
    %v1109 = vunpack.c.h.b16 %v355
    %v1110 = vunpack.c.l.b16 %v356
    %v1111 = vunpack.c.h.b16 %v356
    %v1112 = vunpack.c.l.b16 %v357
    %v1113 = vunpack.c.h.b16 %v357
    %v1114 = vunpack.c.l.b16 %v358
    %v1115 = vunpack.c.h.b16 %v358
    %v1116 = vunpack.c.l.b16 %v359
    %v1117 = vunpack.c.h.b16 %v359
    %v1118 = vunpack.c.l.b16 %v360
    %v1119 = vunpack.c.h.b16 %v360
    %v1120 = vunpack.c.l.b16 %v361
    %v1121 = vunpack.c.h.b16 %v361
    %v1122 = vunpack.c.l.b16 %v362
    %v1123 = vunpack.c.h.b16 %v362
    %v1124 = vunpack.c.l.b16 %v363
    %v1125 = vunpack.c.h.b16 %v363
    %v1126 = vunpack.c.l.b16 %v364
    %v1127 = vunpack.c.h.b16 %v364
    %v1128 = vunpack.c.l.b16 %v365
    %v1129 = vunpack.c.h.b16 %v365
    %v1130 = vunpack.c.l.b16 %v366
    %v1131 = vunpack.c.h.b16 %v366
    %v1132 = vunpack.c.l.b16 %v367
    %v1133 = vunpack.c.h.b16 %v367
    %v1134 = vunpack.c.l.b16 %v368
    %v1135 = vunpack.c.h.b16 %v368
    %v1136 = vunpack.c.l.b16 %v369
    %v1137 = vunpack.c.h.b16 %v369
    %v1138 = vpack.c.b16 %v630, %v626
    %v1139 = vpack.c.b16 %v631, %v627
    %v1140 = vpack.c.b16 %v632, %v628
    %v1141 = vpack.c.b16 %v633, %v629
    %v1142 = vpack.c.b16 %v638, %v634
    %v1143 = vpack.c.b16 %v639, %v635
    %v1144 = vpack.c.b16 %v640, %v636
    %v1145 = vpack.c.b16 %v641, %v637
    %v1146 = vpack.c.b16 %v646, %v642
    %v1147 = vpack.c.b16 %v647, %v643
    %v1148 = vpack.c.b16 %v648, %v644
    %v1149 = vpack.c.b16 %v649, %v645
    %v1150 = vpack.c.b16 %v654, %v650
    %v1151 = vpack.c.b16 %v655, %v651
    %v1152 = vpack.c.b16 %v656, %v652
    %v1153 = vpack.c.b16 %v657, %v653
    %v1154 = vpack.c.b16 %v662, %v658
    %v1155 = vpack.c.b16 %v663, %v659
    %v1156 = vpack.c.b16 %v664, %v660
    %v1157 = vpack.c.b16 %v665, %v661
    %v1158 = vpack.c.b16 %v670, %v666
    %v1159 = vpack.c.b16 %v671, %v667
    %v1160 = vpack.c.b16 %v672, %v668
    %v1161 = vpack.c.b16 %v673, %v669
    %v1162 = vpack.c.b16 %v678, %v674
    %v1163 = vpack.c.b16 %v679, %v675
    %v1164 = vpack.c.b16 %v680, %v676
    %v1165 = vpack.c.b16 %v681, %v677
    %v1166 = vpack.c.b16 %v686, %v682
    %v1167 = vpack.c.b16 %v687, %v683
    %v1168 = vpack.c.b16 %v688, %v684
    %v1169 = vpack.c.b16 %v689, %v685
    %v1170 = vpack.c.b16 %v694, %v690
    %v1171 = vpack.c.b16 %v695, %v691
    %v1172 = vpack.c.b16 %v696, %v692
    %v1173 = vpack.c.b16 %v697, %v693
    %v1174 = vpack.c.b16 %v702, %v698
    %v1175 = vpack.c.b16 %v703, %v699
    %v1176 = vpack.c.b16 %v704, %v700
    %v1177 = vpack.c.b16 %v705, %v701
    %v1178 = vpack.c.b16 %v710, %v706
    %v1179 = vpack.c.b16 %v711, %v707
    %v1180 = vpack.c.b16 %v712, %v708
    %v1181 = vpack.c.b16 %v713, %v709
    %v1182 = vpack.c.b16 %v718, %v714
    %v1183 = vpack.c.b16 %v719, %v715
    %v1184 = vpack.c.b16 %v720, %v716
    %v1185 = vpack.c.b16 %v721, %v717
    %v1186 = vpack.c.b16 %v726, %v722
    %v1187 = vpack.c.b16 %v727, %v723
    %v1188 = vpack.c.b16 %v728, %v724
    %v1189 = vpack.c.b16 %v729, %v725
    %v1190 = vpack.c.b16 %v734, %v730
    %v1191 = vpack.c.b16 %v735, %v731
    %v1192 = vpack.c.b16 %v736, %v732
    %v1193 = vpack.c.b16 %v737, %v733
    %v1194 = vpack.c.b16 %v742, %v738
    %v1195 = vpack.c.b16 %v743, %v739
    %v1196 = vpack.c.b16 %v744, %v740
    %v1197 = vpack.c.b16 %v745, %v741
    %v1198 = vpack.c.b16 %v750, %v746
    %v1199 = vpack.c.b16 %v751, %v747
    %v1200 = vpack.c.b16 %v752, %v748
    %v1201 = vpack.c.b16 %v753, %v749
    %v1202 = vpack.c.b16 %v758, %v754
    %v1203 = vpack.c.b16 %v759, %v755
    %v1204 = vpack.c.b16 %v760, %v756
    %v1205 = vpack.c.b16 %v761, %v757
    %v1206 = vpack.c.b16 %v766, %v762
    %v1207 = vpack.c.b16 %v767, %v763
    %v1208 = vpack.c.b16 %v768, %v764
    %v1209 = vpack.c.b16 %v769, %v765
    %v1210 = vpack.c.b16 %v774, %v770
    %v1211 = vpack.c.b16 %v775, %v771
    %v1212 = vpack.c.b16 %v776, %v772
    %v1213 = vpack.c.b16 %v777, %v773
    %v1214 = vpack.c.b16 %v782, %v778
    %v1215 = vpack.c.b16 %v783, %v779
    %v1216 = vpack.c.b16 %v784, %v780
    %v1217 = vpack.c.b16 %v785, %v781
    %v1218 = vpack.c.b16 %v790, %v786
    %v1219 = vpack.c.b16 %v791, %v787
    %v1220 = vpack.c.b16 %v792, %v788
    %v1221 = vpack.c.b16 %v793, %v789
    %v1222 = vpack.c.b16 %v798, %v794
    %v1223 = vpack.c.b16 %v799, %v795
    %v1224 = vpack.c.b16 %v800, %v796
    %v1225 = vpack.c.b16 %v801, %v797
    %v1226 = vpack.c.b16 %v806, %v802
    %v1227 = vpack.c.b16 %v807, %v803
    %v1228 = vpack.c.b16 %v808, %v804
    %v1229 = vpack.c.b16 %v809, %v805
    %v1230 = vpack.c.b16 %v814, %v810
    %v1231 = vpack.c.b16 %v815, %v811
    %v1232 = vpack.c.b16 %v816, %v812
    %v1233 = vpack.c.b16 %v817, %v813
    %v1234 = vpack.c.b16 %v822, %v818
    %v1235 = vpack.c.b16 %v823, %v819
    %v1236 = vpack.c.b16 %v824, %v820
    %v1237 = vpack.c.b16 %v825, %v821
    %v1238 = vpack.c.b16 %v830, %v826
    %v1239 = vpack.c.b16 %v831, %v827
    %v1240 = vpack.c.b16 %v832, %v828
    %v1241 = vpack.c.b16 %v833, %v829
    %v1242 = vpack.c.b16 %v838, %v834
    %v1243 = vpack.c.b16 %v839, %v835
    %v1244 = vpack.c.b16 %v840, %v836
    %v1245 = vpack.c.b16 %v841, %v837
    %v1246 = vpack.c.b16 %v846, %v842
    %v1247 = vpack.c.b16 %v847, %v843
    %v1248 = vpack.c.b16 %v848, %v844
    %v1249 = vpack.c.b16 %v849, %v845
    %v1250 = vpack.c.b16 %v854, %v850
    %v1251 = vpack.c.b16 %v855, %v851
    %v1252 = vpack.c.b16 %v856, %v852
    %v1253 = vpack.c.b16 %v857, %v853
    %v1254 = vpack.c.b16 %v862, %v858
    %v1255 = vpack.c.b16 %v863, %v859
    %v1256 = vpack.c.b16 %v864, %v860
    %v1257 = vpack.c.b16 %v865, %v861
    %v1258 = vpack.c.b16 %v870, %v866
    %v1259 = vpack.c.b16 %v871, %v867
    %v1260 = vpack.c.b16 %v872, %v868
    %v1261 = vpack.c.b16 %v873, %v869
    %v1262 = vpack.c.b16 %v878, %v874
    %v1263 = vpack.c.b16 %v879, %v875
    %v1264 = vpack.c.b16 %v880, %v876
    %v1265 = vpack.c.b16 %v881, %v877
    %v1266 = vpack.c.b16 %v886, %v882
    %v1267 = vpack.c.b16 %v887, %v883
    %v1268 = vpack.c.b16 %v888, %v884
    %v1269 = vpack.c.b16 %v889, %v885
    %v1270 = vpack.c.b16 %v894, %v890
    %v1271 = vpack.c.b16 %v895, %v891
    %v1272 = vpack.c.b16 %v896, %v892
    %v1273 = vpack.c.b16 %v897, %v893
    %v1274 = vpack.c.b16 %v902, %v898
    %v1275 = vpack.c.b16 %v903, %v899
    %v1276 = vpack.c.b16 %v904, %v900
    %v1277 = vpack.c.b16 %v905, %v901
    %v1278 = vpack.c.b16 %v910, %v906
    %v1279 = vpack.c.b16 %v911, %v907
    %v1280 = vpack.c.b16 %v912, %v908
    %v1281 = vpack.c.b16 %v913, %v909
    %v1282 = vpack.c.b16 %v918, %v914
    %v1283 = vpack.c.b16 %v919, %v915
    %v1284 = vpack.c.b16 %v920, %v916
    %v1285 = vpack.c.b16 %v921, %v917
    %v1286 = vpack.c.b16 %v926, %v922
    %v1287 = vpack.c.b16 %v927, %v923
    %v1288 = vpack.c.b16 %v928, %v924
    %v1289 = vpack.c.b16 %v929, %v925
    %v1290 = vpack.c.b16 %v934, %v930
    %v1291 = vpack.c.b16 %v935, %v931
    %v1292 = vpack.c.b16 %v936, %v932
    %v1293 = vpack.c.b16 %v937, %v933
    %v1294 = vpack.c.b16 %v942, %v938
    %v1295 = vpack.c.b16 %v943, %v939
    %v1296 = vpack.c.b16 %v944, %v940
    %v1297 = vpack.c.b16 %v945, %v941
    %v1298 = vpack.c.b16 %v950, %v946
    %v1299 = vpack.c.b16 %v951, %v947
    %v1300 = vpack.c.b16 %v952, %v948
    %v1301 = vpack.c.b16 %v953, %v949
    %v1302 = vpack.c.b16 %v958, %v954
    %v1303 = vpack.c.b16 %v959, %v955
    %v1304 = vpack.c.b16 %v960, %v956
    %v1305 = vpack.c.b16 %v961, %v957
    %v1306 = vpack.c.b16 %v966, %v962
    %v1307 = vpack.c.b16 %v967, %v963
    %v1308 = vpack.c.b16 %v968, %v964
    %v1309 = vpack.c.b16 %v969, %v965
    %v1310 = vpack.c.b16 %v974, %v970
    %v1311 = vpack.c.b16 %v975, %v971
    %v1312 = vpack.c.b16 %v976, %v972
    %v1313 = vpack.c.b16 %v977, %v973
    %v1314 = vpack.c.b16 %v982, %v978
    %v1315 = vpack.c.b16 %v983, %v979
    %v1316 = vpack.c.b16 %v984, %v980
    %v1317 = vpack.c.b16 %v985, %v981
    %v1318 = vpack.c.b16 %v990, %v986
    %v1319 = vpack.c.b16 %v991, %v987
    %v1320 = vpack.c.b16 %v992, %v988
    %v1321 = vpack.c.b16 %v993, %v989
    %v1322 = vpack.c.b16 %v998, %v994
    %v1323 = vpack.c.b16 %v999, %v995
    %v1324 = vpack.c.b16 %v1000, %v996
    %v1325 = vpack.c.b16 %v1001, %v997
    %v1326 = vpack.c.b16 %v1006, %v1002
    %v1327 = vpack.c.b16 %v1007, %v1003
    %v1328 = vpack.c.b16 %v1008, %v1004
    %v1329 = vpack.c.b16 %v1009, %v1005
    %v1330 = vpack.c.b16 %v1014, %v1010
    %v1331 = vpack.c.b16 %v1015, %v1011
    %v1332 = vpack.c.b16 %v1016, %v1012
    %v1333 = vpack.c.b16 %v1017, %v1013
    %v1334 = vpack.c.b16 %v1022, %v1018
    %v1335 = vpack.c.b16 %v1023, %v1019
    %v1336 = vpack.c.b16 %v1024, %v1020
    %v1337 = vpack.c.b16 %v1025, %v1021
    %v1338 = vpack.c.b16 %v1030, %v1026
    %v1339 = vpack.c.b16 %v1031, %v1027
    %v1340 = vpack.c.b16 %v1032, %v1028
    %v1341 = vpack.c.b16 %v1033, %v1029
    %v1342 = vpack.c.b16 %v1038, %v1034
    %v1343 = vpack.c.b16 %v1039, %v1035
    %v1344 = vpack.c.b16 %v1040, %v1036
    %v1345 = vpack.c.b16 %v1041, %v1037
    %v1346 = vpack.c.b16 %v1046, %v1042
    %v1347 = vpack.c.b16 %v1047, %v1043
    %v1348 = vpack.c.b16 %v1048, %v1044
    %v1349 = vpack.c.b16 %v1049, %v1045
    %v1350 = vpack.c.b16 %v1054, %v1050
    %v1351 = vpack.c.b16 %v1055, %v1051
    %v1352 = vpack.c.b16 %v1056, %v1052
    %v1353 = vpack.c.b16 %v1057, %v1053
    %v1354 = vpack.c.b16 %v1062, %v1058
    %v1355 = vpack.c.b16 %v1063, %v1059
    %v1356 = vpack.c.b16 %v1064, %v1060
    %v1357 = vpack.c.b16 %v1065, %v1061
    %v1358 = vpack.c.b16 %v1070, %v1066
    %v1359 = vpack.c.b16 %v1071, %v1067
    %v1360 = vpack.c.b16 %v1072, %v1068
    %v1361 = vpack.c.b16 %v1073, %v1069
    %v1362 = vpack.c.b16 %v1078, %v1074
    %v1363 = vpack.c.b16 %v1079, %v1075
    %v1364 = vpack.c.b16 %v1080, %v1076
    %v1365 = vpack.c.b16 %v1081, %v1077
    %v1366 = vpack.c.b16 %v1086, %v1082
    %v1367 = vpack.c.b16 %v1087, %v1083
    %v1368 = vpack.c.b16 %v1088, %v1084
    %v1369 = vpack.c.b16 %v1089, %v1085
    %v1370 = vpack.c.b16 %v1094, %v1090
    %v1371 = vpack.c.b16 %v1095, %v1091
    %v1372 = vpack.c.b16 %v1096, %v1092
    %v1373 = vpack.c.b16 %v1097, %v1093
    %v1374 = vpack.c.b16 %v1102, %v1098
    %v1375 = vpack.c.b16 %v1103, %v1099
    %v1376 = vpack.c.b16 %v1104, %v1100
    %v1377 = vpack.c.b16 %v1105, %v1101
    %v1378 = vpack.c.b16 %v1110, %v1106
    %v1379 = vpack.c.b16 %v1111, %v1107
    %v1380 = vpack.c.b16 %v1112, %v1108
    %v1381 = vpack.c.b16 %v1113, %v1109
    %v1382 = vpack.c.b16 %v1118, %v1114
    %v1383 = vpack.c.b16 %v1119, %v1115
    %v1384 = vpack.c.b16 %v1120, %v1116
    %v1385 = vpack.c.b16 %v1121, %v1117
    %v1386 = vpack.c.b16 %v1126, %v1122
    %v1387 = vpack.c.b16 %v1127, %v1123
    %v1388 = vpack.c.b16 %v1128, %v1124
    %v1389 = vpack.c.b16 %v1129, %v1125
    %v1390 = vpack.c.b16 %v1134, %v1130
    %v1391 = vpack.c.b16 %v1135, %v1131
    %v1392 = vpack.c.b16 %v1136, %v1132
    %v1393 = vpack.c.b16 %v1137, %v1133
    %1650 = vmatprep.subr.bf16.mxu0 %v1167
    %1651 = vmatpush1.bf16.msra.mxu0 %v1166
    %1652 = vmatprep.subr.bf16.mxu0 %v1163
    %1653 = vmatpush1.bf16.msra.mxu0 %v1162
    %1654 = vmatprep.subr.bf16.mxu0 %v1159
    %1655 = vmatpush1.bf16.msra.mxu0 %v1158
    %1656 = vmatprep.subr.bf16.mxu0 %v1155
    %1657 = vmatpush1.bf16.msra.mxu0 %v1154
    %1658 = vmatprep.subr.bf16.mxu0 %v1151
    %1659 = vmatpush1.bf16.msra.mxu0 %v1150
    %1660 = vmatprep.subr.bf16.mxu0 %v1147
    %1661 = vmatpush1.bf16.msra.mxu0 %v1146
    %1662 = vmatprep.subr.bf16.mxu0 %v1143
    %1663 = vmatpush1.bf16.msra.mxu0 %v1142
    %1664 = vmatprep.subr.bf16.mxu0 %v1139
    %1665 = vmatpush1.bf16.msra.mxu0 %v1138
    %1666 = vmatprep.subr.bf16.mxu0 %v1199
    %1667 = vmatpush2.bf16.msra.mxu0 %v1198
    %1668 = vmatprep.subr.bf16.mxu0 %v1195
    %1669 = vmatpush2.bf16.msra.mxu0 %v1194
    %1670 = vmatprep.subr.bf16.mxu0 %v1191
    %1671 = vmatpush2.bf16.msra.mxu0 %v1190
    %1672 = vmatprep.subr.bf16.mxu0 %v1187
    %1673 = vmatpush2.bf16.msra.mxu0 %v1186
    %1674 = vmatprep.subr.bf16.mxu0 %v1183
    %1675 = vmatpush2.bf16.msra.mxu0 %v1182
    %1676 = vmatprep.subr.bf16.mxu0 %v1179
    %1677 = vmatpush2.bf16.msra.mxu0 %v1178
    %1678 = vmatprep.subr.bf16.mxu0 %v1175
    %1679 = vmatpush2.bf16.msra.mxu0 %v1174
    %1680 = vmatprep.subr.bf16.mxu0 %v1171
    %1681 = vmatpush2.bf16.msra.mxu0 %v1170
    %1682 = vmatprep.mubr.bf16.mxu0 %v99
    %1683 = vmatmul.mubr.bf16.gmra.mxu0 %v98
    %v1684 = vpop.f32.mrf.mxu0
    %v1685 = vadd.f32 0.0, %v1684
    %v1686 = vpop.f32.mrf.mxu0
    %v1687 = vadd.f32 0.0, %v1686
    %v1688 = vpop.f32.mrf.mxu0
    %v1689 = vadd.f32 0.0, %v1688
    %v1690 = vpop.f32.mrf.mxu0
    %v1691 = vadd.f32 0.0, %v1690
    %1692 = vdwg.mxu0
    %1693 = vmatprep.subr.bf16.mxu0 %v1231
    %1694 = vmatpush1.bf16.msra.mxu0 %v1230
    %1695 = vmatprep.subr.bf16.mxu0 %v1227
    %1696 = vmatpush1.bf16.msra.mxu0 %v1226
    %1697 = vmatprep.subr.bf16.mxu0 %v1223
    %1698 = vmatpush1.bf16.msra.mxu0 %v1222
    %1699 = vmatprep.subr.bf16.mxu0 %v1219
    %1700 = vmatpush1.bf16.msra.mxu0 %v1218
    %1701 = vmatprep.subr.bf16.mxu0 %v1215
    %1702 = vmatpush1.bf16.msra.mxu0 %v1214
    %1703 = vmatprep.subr.bf16.mxu0 %v1211
    %1704 = vmatpush1.bf16.msra.mxu0 %v1210
    %1705 = vmatprep.subr.bf16.mxu0 %v1207
    %1706 = vmatpush1.bf16.msra.mxu0 %v1206
    %1707 = vmatprep.subr.bf16.mxu0 %v1203
    %1708 = vmatpush1.bf16.msra.mxu0 %v1202
    %1709 = vmatprep.subr.bf16.mxu0 %v1263
    %1710 = vmatpush2.bf16.msra.mxu0 %v1262
    %1711 = vmatprep.subr.bf16.mxu0 %v1259
    %1712 = vmatpush2.bf16.msra.mxu0 %v1258
    %1713 = vmatprep.subr.bf16.mxu0 %v1255
    %1714 = vmatpush2.bf16.msra.mxu0 %v1254
    %1715 = vmatprep.subr.bf16.mxu0 %v1251
    %1716 = vmatpush2.bf16.msra.mxu0 %v1250
    %1717 = vmatprep.subr.bf16.mxu0 %v1247
    %1718 = vmatpush2.bf16.msra.mxu0 %v1246
    %1719 = vmatprep.subr.bf16.mxu0 %v1243
    %1720 = vmatpush2.bf16.msra.mxu0 %v1242
    %1721 = vmatprep.subr.bf16.mxu0 %v1239
    %1722 = vmatpush2.bf16.msra.mxu0 %v1238
    %1723 = vmatprep.subr.bf16.mxu0 %v1235
    %1724 = vmatpush2.bf16.msra.mxu0 %v1234
    %1725 = vmatprep.mubr.bf16.mxu0 %v101
    %1726 = vmatmul.mubr.bf16.gmra.mxu0 %v100
    %v1727 = vpop.f32.mrf.mxu0
    %v1728 = vadd.f32 %v1685, %v1727
    %v1729 = vpop.f32.mrf.mxu0
    %v1730 = vadd.f32 %v1687, %v1729
    %v1731 = vpop.f32.mrf.mxu0
    %v1732 = vadd.f32 %v1689, %v1731
    %v1733 = vpop.f32.mrf.mxu0
    %v1734 = vadd.f32 %v1691, %v1733
    %1735 = vdwg.mxu0
    %1736 = vmatprep.subr.bf16.mxu0 %v1295
    %1737 = vmatpush1.bf16.msra.mxu0 %v1294
    %1738 = vmatprep.subr.bf16.mxu0 %v1291
    %1739 = vmatpush1.bf16.msra.mxu0 %v1290
    %1740 = vmatprep.subr.bf16.mxu0 %v1287
    %1741 = vmatpush1.bf16.msra.mxu0 %v1286
    %1742 = vmatprep.subr.bf16.mxu0 %v1283
    %1743 = vmatpush1.bf16.msra.mxu0 %v1282
    %1744 = vmatprep.subr.bf16.mxu0 %v1279
    %1745 = vmatpush1.bf16.msra.mxu0 %v1278
    %1746 = vmatprep.subr.bf16.mxu0 %v1275
    %1747 = vmatpush1.bf16.msra.mxu0 %v1274
    %1748 = vmatprep.subr.bf16.mxu0 %v1271
    %1749 = vmatpush1.bf16.msra.mxu0 %v1270
    %1750 = vmatprep.subr.bf16.mxu0 %v1267
    %1751 = vmatpush1.bf16.msra.mxu0 %v1266
    %1752 = vmatprep.subr.bf16.mxu0 %v1327
    %1753 = vmatpush2.bf16.msra.mxu0 %v1326
    %1754 = vmatprep.subr.bf16.mxu0 %v1323
    %1755 = vmatpush2.bf16.msra.mxu0 %v1322
    %1756 = vmatprep.subr.bf16.mxu0 %v1319
    %1757 = vmatpush2.bf16.msra.mxu0 %v1318
    %1758 = vmatprep.subr.bf16.mxu0 %v1315
    %1759 = vmatpush2.bf16.msra.mxu0 %v1314
    %1760 = vmatprep.subr.bf16.mxu0 %v1311
    %1761 = vmatpush2.bf16.msra.mxu0 %v1310
    %1762 = vmatprep.subr.bf16.mxu0 %v1307
    %1763 = vmatpush2.bf16.msra.mxu0 %v1306
    %1764 = vmatprep.subr.bf16.mxu0 %v1303
    %1765 = vmatpush2.bf16.msra.mxu0 %v1302
    %1766 = vmatprep.subr.bf16.mxu0 %v1299
    %1767 = vmatpush2.bf16.msra.mxu0 %v1298
    %1768 = vmatprep.mubr.bf16.mxu0 %v103
    %1769 = vmatmul.mubr.bf16.gmra.mxu0 %v102
    %v1770 = vpop.f32.mrf.mxu0
    %v1771 = vadd.f32 %v1728, %v1770
    %v1772 = vpop.f32.mrf.mxu0
    %v1773 = vadd.f32 %v1730, %v1772
    %v1774 = vpop.f32.mrf.mxu0
    %v1775 = vadd.f32 %v1732, %v1774
    %v1776 = vpop.f32.mrf.mxu0
    %v1777 = vadd.f32 %v1734, %v1776
    %1778 = vdwg.mxu0
    %1779 = vmatprep.subr.bf16.mxu0 %v1359
    %1780 = vmatpush1.bf16.msra.mxu0 %v1358
    %1781 = vmatprep.subr.bf16.mxu0 %v1355
    %1782 = vmatpush1.bf16.msra.mxu0 %v1354
    %1783 = vmatprep.subr.bf16.mxu0 %v1351
    %1784 = vmatpush1.bf16.msra.mxu0 %v1350
    %1785 = vmatprep.subr.bf16.mxu0 %v1347
    %1786 = vmatpush1.bf16.msra.mxu0 %v1346
    %1787 = vmatprep.subr.bf16.mxu0 %v1343
    %1788 = vmatpush1.bf16.msra.mxu0 %v1342
    %1789 = vmatprep.subr.bf16.mxu0 %v1339
    %1790 = vmatpush1.bf16.msra.mxu0 %v1338
    %1791 = vmatprep.subr.bf16.mxu0 %v1335
    %1792 = vmatpush1.bf16.msra.mxu0 %v1334
    %1793 = vmatprep.subr.bf16.mxu0 %v1331
    %1794 = vmatpush1.bf16.msra.mxu0 %v1330
    %1795 = vmatprep.subr.bf16.mxu0 %v1391
    %1796 = vmatpush2.bf16.msra.mxu0 %v1390
    %1797 = vmatprep.subr.bf16.mxu0 %v1387
    %1798 = vmatpush2.bf16.msra.mxu0 %v1386
    %1799 = vmatprep.subr.bf16.mxu0 %v1383
    %1800 = vmatpush2.bf16.msra.mxu0 %v1382
    %1801 = vmatprep.subr.bf16.mxu0 %v1379
    %1802 = vmatpush2.bf16.msra.mxu0 %v1378
    %1803 = vmatprep.subr.bf16.mxu0 %v1375
    %1804 = vmatpush2.bf16.msra.mxu0 %v1374
    %1805 = vmatprep.subr.bf16.mxu0 %v1371
    %1806 = vmatpush2.bf16.msra.mxu0 %v1370
    %1807 = vmatprep.subr.bf16.mxu0 %v1367
    %1808 = vmatpush2.bf16.msra.mxu0 %v1366
    %1809 = vmatprep.subr.bf16.mxu0 %v1363
    %1810 = vmatpush2.bf16.msra.mxu0 %v1362
    %1811 = vmatprep.mubr.bf16.mxu0 %v105
    %1812 = vmatmul.mubr.bf16.gmra.mxu0 %v104
    %v1813 = vpop.f32.mrf.mxu0
    %v1814 = vadd.f32 %v1771, %v1813
    %v1815 = vpop.f32.mrf.mxu0
    %v1816 = vadd.f32 %v1773, %v1815
    %v1817 = vpop.f32.mrf.mxu0
    %v1818 = vadd.f32 %v1775, %v1817
    %v1819 = vpop.f32.mrf.mxu0
    %v1820 = vadd.f32 %v1777, %v1819
    %1821 = vdwg.mxu0
    %1822 = vmatprep.subr.bf16.mxu0 %v1169
    %1823 = vmatpush1.bf16.msra.mxu0 %v1168
    %1824 = vmatprep.subr.bf16.mxu0 %v1165
    %1825 = vmatpush1.bf16.msra.mxu0 %v1164
    %1826 = vmatprep.subr.bf16.mxu0 %v1161
    %1827 = vmatpush1.bf16.msra.mxu0 %v1160
    %1828 = vmatprep.subr.bf16.mxu0 %v1157
    %1829 = vmatpush1.bf16.msra.mxu0 %v1156
    %1830 = vmatprep.subr.bf16.mxu0 %v1153
    %1831 = vmatpush1.bf16.msra.mxu0 %v1152
    %1832 = vmatprep.subr.bf16.mxu0 %v1149
    %1833 = vmatpush1.bf16.msra.mxu0 %v1148
    %1834 = vmatprep.subr.bf16.mxu0 %v1145
    %1835 = vmatpush1.bf16.msra.mxu0 %v1144
    %1836 = vmatprep.subr.bf16.mxu0 %v1141
    %1837 = vmatpush1.bf16.msra.mxu0 %v1140
    %1838 = vmatprep.subr.bf16.mxu0 %v1201
    %1839 = vmatpush2.bf16.msra.mxu0 %v1200
    %1840 = vmatprep.subr.bf16.mxu0 %v1197
    %1841 = vmatpush2.bf16.msra.mxu0 %v1196
    %1842 = vmatprep.subr.bf16.mxu0 %v1193
    %1843 = vmatpush2.bf16.msra.mxu0 %v1192
    %1844 = vmatprep.subr.bf16.mxu0 %v1189
    %1845 = vmatpush2.bf16.msra.mxu0 %v1188
    %1846 = vmatprep.subr.bf16.mxu0 %v1185
    %1847 = vmatpush2.bf16.msra.mxu0 %v1184
    %1848 = vmatprep.subr.bf16.mxu0 %v1181
    %1849 = vmatpush2.bf16.msra.mxu0 %v1180
    %1850 = vmatprep.subr.bf16.mxu0 %v1177
    %1851 = vmatpush2.bf16.msra.mxu0 %v1176
    %1852 = vmatprep.subr.bf16.mxu0 %v1173
    %1853 = vmatpush2.bf16.msra.mxu0 %v1172
    %1854 = vmatprep.mubr.bf16.mxu0 %v99
    %1855 = vmatmul.mubr.bf16.gmra.mxu0 %v98
    %v1856 = vpop.f32.mrf.mxu0
    %v1857 = vadd.f32 0.0, %v1856
    %v1858 = vpop.f32.mrf.mxu0
    %v1859 = vadd.f32 0.0, %v1858
    %v1860 = vpop.f32.mrf.mxu0
    %v1861 = vadd.f32 0.0, %v1860
    %v1862 = vpop.f32.mrf.mxu0
    %v1863 = vadd.f32 0.0, %v1862
    %1864 = vdwg.mxu0
    %1865 = vmatprep.subr.bf16.mxu0 %v1233
    %1866 = vmatpush1.bf16.msra.mxu0 %v1232
    %1867 = vmatprep.subr.bf16.mxu0 %v1229
    %1868 = vmatpush1.bf16.msra.mxu0 %v1228
    %1869 = vmatprep.subr.bf16.mxu0 %v1225
    %1870 = vmatpush1.bf16.msra.mxu0 %v1224
    %1871 = vmatprep.subr.bf16.mxu0 %v1221
    %1872 = vmatpush1.bf16.msra.mxu0 %v1220
    %1873 = vmatprep.subr.bf16.mxu0 %v1217
    %1874 = vmatpush1.bf16.msra.mxu0 %v1216
    %1875 = vmatprep.subr.bf16.mxu0 %v1213
    %1876 = vmatpush1.bf16.msra.mxu0 %v1212
    %1877 = vmatprep.subr.bf16.mxu0 %v1209
    %1878 = vmatpush1.bf16.msra.mxu0 %v1208
    %1879 = vmatprep.subr.bf16.mxu0 %v1205
    %1880 = vmatpush1.bf16.msra.mxu0 %v1204
    %1881 = vmatprep.subr.bf16.mxu0 %v1265
    %1882 = vmatpush2.bf16.msra.mxu0 %v1264
    %1883 = vmatprep.subr.bf16.mxu0 %v1261
    %1884 = vmatpush2.bf16.msra.mxu0 %v1260
    %1885 = vmatprep.subr.bf16.mxu0 %v1257
    %1886 = vmatpush2.bf16.msra.mxu0 %v1256
    %1887 = vmatprep.subr.bf16.mxu0 %v1253
    %1888 = vmatpush2.bf16.msra.mxu0 %v1252
    %1889 = vmatprep.subr.bf16.mxu0 %v1249
    %1890 = vmatpush2.bf16.msra.mxu0 %v1248
    %1891 = vmatprep.subr.bf16.mxu0 %v1245
    %1892 = vmatpush2.bf16.msra.mxu0 %v1244
    %1893 = vmatprep.subr.bf16.mxu0 %v1241
    %1894 = vmatpush2.bf16.msra.mxu0 %v1240
    %1895 = vmatprep.subr.bf16.mxu0 %v1237
    %1896 = vmatpush2.bf16.msra.mxu0 %v1236
    %1897 = vmatprep.mubr.bf16.mxu0 %v101
    %1898 = vmatmul.mubr.bf16.gmra.mxu0 %v100
    %v1899 = vpop.f32.mrf.mxu0
    %v1900 = vadd.f32 %v1857, %v1899
    %v1901 = vpop.f32.mrf.mxu0
    %v1902 = vadd.f32 %v1859, %v1901
    %v1903 = vpop.f32.mrf.mxu0
    %v1904 = vadd.f32 %v1861, %v1903
    %v1905 = vpop.f32.mrf.mxu0
    %v1906 = vadd.f32 %v1863, %v1905
    %1907 = vdwg.mxu0
    %1908 = vmatprep.subr.bf16.mxu0 %v1297
    %1909 = vmatpush1.bf16.msra.mxu0 %v1296
    %1910 = vmatprep.subr.bf16.mxu0 %v1293
    %1911 = vmatpush1.bf16.msra.mxu0 %v1292
    %1912 = vmatprep.subr.bf16.mxu0 %v1289
    %1913 = vmatpush1.bf16.msra.mxu0 %v1288
    %1914 = vmatprep.subr.bf16.mxu0 %v1285
    %1915 = vmatpush1.bf16.msra.mxu0 %v1284
    %1916 = vmatprep.subr.bf16.mxu0 %v1281
    %1917 = vmatpush1.bf16.msra.mxu0 %v1280
    %1918 = vmatprep.subr.bf16.mxu0 %v1277
    %1919 = vmatpush1.bf16.msra.mxu0 %v1276
    %1920 = vmatprep.subr.bf16.mxu0 %v1273
    %1921 = vmatpush1.bf16.msra.mxu0 %v1272
    %1922 = vmatprep.subr.bf16.mxu0 %v1269
    %1923 = vmatpush1.bf16.msra.mxu0 %v1268
    %1924 = vmatprep.subr.bf16.mxu0 %v1329
    %1925 = vmatpush2.bf16.msra.mxu0 %v1328
    %1926 = vmatprep.subr.bf16.mxu0 %v1325
    %1927 = vmatpush2.bf16.msra.mxu0 %v1324
    %1928 = vmatprep.subr.bf16.mxu0 %v1321
    %1929 = vmatpush2.bf16.msra.mxu0 %v1320
    %1930 = vmatprep.subr.bf16.mxu0 %v1317
    %1931 = vmatpush2.bf16.msra.mxu0 %v1316
    %1932 = vmatprep.subr.bf16.mxu0 %v1313
    %1933 = vmatpush2.bf16.msra.mxu0 %v1312
    %1934 = vmatprep.subr.bf16.mxu0 %v1309
    %1935 = vmatpush2.bf16.msra.mxu0 %v1308
    %1936 = vmatprep.subr.bf16.mxu0 %v1305
    %1937 = vmatpush2.bf16.msra.mxu0 %v1304
    %1938 = vmatprep.subr.bf16.mxu0 %v1301
    %1939 = vmatpush2.bf16.msra.mxu0 %v1300
    %1940 = vmatprep.mubr.bf16.mxu0 %v103
    %1941 = vmatmul.mubr.bf16.gmra.mxu0 %v102
    %v1942 = vpop.f32.mrf.mxu0
    %v1943 = vadd.f32 %v1900, %v1942
    %v1944 = vpop.f32.mrf.mxu0
    %v1945 = vadd.f32 %v1902, %v1944
    %v1946 = vpop.f32.mrf.mxu0
    %v1947 = vadd.f32 %v1904, %v1946
    %v1948 = vpop.f32.mrf.mxu0
    %v1949 = vadd.f32 %v1906, %v1948
    %1950 = vdwg.mxu0
    %1951 = vmatprep.subr.bf16.mxu0 %v1361
    %1952 = vmatpush1.bf16.msra.mxu0 %v1360
    %1953 = vmatprep.subr.bf16.mxu0 %v1357
    %1954 = vmatpush1.bf16.msra.mxu0 %v1356
    %1955 = vmatprep.subr.bf16.mxu0 %v1353
    %1956 = vmatpush1.bf16.msra.mxu0 %v1352
    %1957 = vmatprep.subr.bf16.mxu0 %v1349
    %1958 = vmatpush1.bf16.msra.mxu0 %v1348
    %1959 = vmatprep.subr.bf16.mxu0 %v1345
    %1960 = vmatpush1.bf16.msra.mxu0 %v1344
    %1961 = vmatprep.subr.bf16.mxu0 %v1341
    %1962 = vmatpush1.bf16.msra.mxu0 %v1340
    %1963 = vmatprep.subr.bf16.mxu0 %v1337
    %1964 = vmatpush1.bf16.msra.mxu0 %v1336
    %1965 = vmatprep.subr.bf16.mxu0 %v1333
    %1966 = vmatpush1.bf16.msra.mxu0 %v1332
    %1967 = vmatprep.subr.bf16.mxu0 %v1393
    %1968 = vmatpush2.bf16.msra.mxu0 %v1392
    %1969 = vmatprep.subr.bf16.mxu0 %v1389
    %1970 = vmatpush2.bf16.msra.mxu0 %v1388
    %1971 = vmatprep.subr.bf16.mxu0 %v1385
    %1972 = vmatpush2.bf16.msra.mxu0 %v1384
    %1973 = vmatprep.subr.bf16.mxu0 %v1381
    %1974 = vmatpush2.bf16.msra.mxu0 %v1380
    %1975 = vmatprep.subr.bf16.mxu0 %v1377
    %1976 = vmatpush2.bf16.msra.mxu0 %v1376
    %1977 = vmatprep.subr.bf16.mxu0 %v1373
    %1978 = vmatpush2.bf16.msra.mxu0 %v1372
    %1979 = vmatprep.subr.bf16.mxu0 %v1369
    %1980 = vmatpush2.bf16.msra.mxu0 %v1368
    %1981 = vmatprep.subr.bf16.mxu0 %v1365
    %1982 = vmatpush2.bf16.msra.mxu0 %v1364
    %1983 = vmatprep.mubr.bf16.mxu0 %v105
    %1984 = vmatmul.mubr.bf16.gmra.mxu0 %v104
    %v1985 = vpop.f32.mrf.mxu0
    %v1986 = vadd.f32 %v1943, %v1985
    %v1987 = vpop.f32.mrf.mxu0
    %v1988 = vadd.f32 %v1945, %v1987
    %v1989 = vpop.f32.mrf.mxu0
    %v1990 = vadd.f32 %v1947, %v1989
    %v1991 = vpop.f32.mrf.mxu0
    %v1992 = vadd.f32 %v1949, %v1991
    %1993 = vdwg.mxu0
    %v1994 = vadd.f32 %v106, %v1814
    %v1995 = vadd.f32 %v107, %v1816
    %v1996 = vadd.f32 %v108, %v1986
    %v1997 = vadd.f32 %v109, %v1988
    %v1998 = vadd.f32 %v110, %v1818
    %v1999 = vadd.f32 %v111, %v1820
    %v2000 = vadd.f32 %v112, %v1990
    %v2001 = vadd.f32 %v113, %v1992
    %2002 = vst [vmem:[#allocation2] sm:$0xff] %v1994
    %2003 = vst [vmem:[#allocation2 + $0x8] sm:$0xff] %v1995
    %2004 = vst [vmem:[#allocation2 + $0x10] sm:$0xff] %v1996
    %2005 = vst [vmem:[#allocation2 + $0x18] sm:$0xff] %v1997
    %2006 = vst [vmem:[#allocation2 + $0x20] sm:$0xff] %v1998
    %2007 = vst [vmem:[#allocation2 + $0x28] sm:$0xff] %v1999
    %2008 = vst [vmem:[#allocation2 + $0x30] sm:$0xff] %v2000
    %2009 = vst [vmem:[#allocation2 + $0x38] sm:$0xff] %v2001
    // Predicated region
    $region46: #{tpu_custom_call.1} parent=1 // pred_check
      %p2010 = pneg %p70
    $region47: #{tpu_custom_call.1} parent=1 // pred_check_branch
      %2012 = sbr.rel (%p2010) target = $region49
    $region48: #{tpu_custom_call.1} parent=1 // pred_region
      %v2013 = vld [vmem:[#allocation2] sm:$0xff]
      %v2014 = vld [vmem:[#allocation2 + $0x8] sm:$0xff]
      %v2015 = vld [vmem:[#allocation2 + $0x10] sm:$0xff]
      %v2016 = vld [vmem:[#allocation2 + $0x18] sm:$0xff]
      %v2017 = vld [vmem:[#allocation2 + $0x20] sm:$0xff]
      %v2018 = vld [vmem:[#allocation2 + $0x28] sm:$0xff]
      %v2019 = vld [vmem:[#allocation2 + $0x30] sm:$0xff]
      %v2020 = vld [vmem:[#allocation2 + $0x38] sm:$0xff]
      %v2021 = vld [vmem:[%s2] sm:$0xf]
      %v2023 = vlaneseq
      %v2024 = vshrl.u32 %v2023, 7
      %v2025 = vsub.s32 0, %v2024
      %v2026 = vrot.slane %v2021, %v2025
      %v2027 = vlaneseq
      %v2028 = vshrl.u32 %v2027, 7
      %v2029 = vsub.s32 1, %v2028
      %v2030 = vrot.slane %v2021, %v2029
      %v2031 = vlaneseq
      %v2032 = vshrl.u32 %v2031, 7
      %v2033 = vsub.s32 2, %v2032
      %v2034 = vrot.slane %v2021, %v2033
      %v2035 = vlaneseq
      %v2036 = vshrl.u32 %v2035, 7
      %v2037 = vsub.s32 3, %v2036
      %v2038 = vrot.slane %v2021, %v2037
      %v2043 = vadd.f32 %v2013, %v2026
      %v2044 = vadd.f32 %v2014, %v2030
      %v2045 = vadd.f32 %v2015, %v2034
      %v2046 = vadd.f32 %v2016, %v2038
      %v2047 = vadd.f32 %v2017, %v2026
      %v2048 = vadd.f32 %v2018, %v2030
      %v2049 = vadd.f32 %v2019, %v2034
      %v2050 = vadd.f32 %v2020, %v2038
      %v2051 = vmul.f32 %v2043, 0.2
      %v2052 = vmul.f32 %v2044, 0.2
      %v2053 = vmul.f32 %v2045, 0.2
      %v2054 = vmul.f32 %v2046, 0.2
      %v2055 = vmul.f32 %v2047, 0.2
      %v2056 = vmul.f32 %v2048, 0.2
      %v2057 = vmul.f32 %v2049, 0.2
      %v2058 = vmul.f32 %v2050, 0.2
      %v2059 = vmax.f32 %v2043, %v2051
      %v2060 = vmax.f32 %v2044, %v2052
      %v2061 = vmax.f32 %v2045, %v2053
      %v2062 = vmax.f32 %v2046, %v2054
      %v2063 = vmax.f32 %v2047, %v2055
      %v2064 = vmax.f32 %v2048, %v2056
      %v2065 = vmax.f32 %v2049, %v2057
      %v2066 = vmax.f32 %v2050, %v2058
      %v2067 = vpack.c.bf16 %v2063, %v2059
      %v2068 = vpack.c.bf16 %v2064, %v2060
      %v2069 = vpack.c.bf16 %v2065, %v2061
      %v2070 = vpack.c.bf16 %v2066, %v2062
      %v2071 = vld [vmem:[#allocation9] sm:$0xff]
      %v2072 = vld [vmem:[#allocation9 + $0x8] sm:$0xff]
      %v2073 = vld [vmem:[#allocation9 + $0x10] sm:$0xff]
      %v2074 = vld [vmem:[#allocation9 + $0x18] sm:$0xff]
      %v2075 = vld [vmem:[#allocation9 + $0x20] sm:$0xff]
      %v2076 = vld [vmem:[#allocation9 + $0x28] sm:$0xff]
      %v2077 = vld [vmem:[#allocation9 + $0x30] sm:$0xff]
      %v2078 = vld [vmem:[#allocation9 + $0x38] sm:$0xff]
      %v2079 = vld [vmem:[#allocation9 + $0x40] sm:$0xff]
      %v2080 = vld [vmem:[#allocation9 + $0x48] sm:$0xff]
      %v2081 = vld [vmem:[#allocation9 + $0x50] sm:$0xff]
      %v2082 = vld [vmem:[#allocation9 + $0x58] sm:$0xff]
      %v2083 = vld [vmem:[#allocation9 + $0x60] sm:$0xff]
      %v2084 = vld [vmem:[#allocation9 + $0x68] sm:$0xff]
      %v2085 = vld [vmem:[#allocation9 + $0x70] sm:$0xff]
      %v2086 = vld [vmem:[#allocation9 + $0x78] sm:$0xff]
      %v2087 = vld [vmem:[#allocation9 + $0x80] sm:$0xff]
      %v2088 = vld [vmem:[#allocation9 + $0x88] sm:$0xff]
      %v2089 = vld [vmem:[#allocation9 + $0x90] sm:$0xff]
      %v2090 = vld [vmem:[#allocation9 + $0x98] sm:$0xff]
      %v2091 = vld [vmem:[#allocation9 + $0xa0] sm:$0xff]
      %v2092 = vld [vmem:[#allocation9 + $0xa8] sm:$0xff]
      %v2093 = vld [vmem:[#allocation9 + $0xb0] sm:$0xff]
      %v2094 = vld [vmem:[#allocation9 + $0xb8] sm:$0xff]
      %v2095 = vld [vmem:[#allocation9 + $0xc0] sm:$0xff]
      %v2096 = vld [vmem:[#allocation9 + $0xc8] sm:$0xff]
      %v2097 = vld [vmem:[#allocation9 + $0xd0] sm:$0xff]
      %v2098 = vld [vmem:[#allocation9 + $0xd8] sm:$0xff]
      %v2099 = vld [vmem:[#allocation9 + $0xe0] sm:$0xff]
      %v2100 = vld [vmem:[#allocation9 + $0xe8] sm:$0xff]
      %v2101 = vld [vmem:[#allocation9 + $0xf0] sm:$0xff]
      %v2102 = vld [vmem:[#allocation9 + $0xf8] sm:$0xff]
      %v2103 = vld [vmem:[#allocation9 + $0x100] sm:$0xff]
      %v2104 = vld [vmem:[#allocation9 + $0x108] sm:$0xff]
      %v2105 = vld [vmem:[#allocation9 + $0x110] sm:$0xff]
      %v2106 = vld [vmem:[#allocation9 + $0x118] sm:$0xff]
      %v2107 = vld [vmem:[#allocation9 + $0x120] sm:$0xff]
      %v2108 = vld [vmem:[#allocation9 + $0x128] sm:$0xff]
      %v2109 = vld [vmem:[#allocation9 + $0x130] sm:$0xff]
      %v2110 = vld [vmem:[#allocation9 + $0x138] sm:$0xff]
      %v2111 = vld [vmem:[#allocation9 + $0x140] sm:$0xff]
      %v2112 = vld [vmem:[#allocation9 + $0x148] sm:$0xff]
      %v2113 = vld [vmem:[#allocation9 + $0x150] sm:$0xff]
      %v2114 = vld [vmem:[#allocation9 + $0x158] sm:$0xff]
      %v2115 = vld [vmem:[#allocation9 + $0x160] sm:$0xff]
      %v2116 = vld [vmem:[#allocation9 + $0x168] sm:$0xff]
      %v2117 = vld [vmem:[#allocation9 + $0x170] sm:$0xff]
      %v2118 = vld [vmem:[#allocation9 + $0x178] sm:$0xff]
      %v2119 = vld [vmem:[#allocation9 + $0x180] sm:$0xff]
      %v2120 = vld [vmem:[#allocation9 + $0x188] sm:$0xff]
      %v2121 = vld [vmem:[#allocation9 + $0x190] sm:$0xff]
      %v2122 = vld [vmem:[#allocation9 + $0x198] sm:$0xff]
      %v2123 = vld [vmem:[#allocation9 + $0x1a0] sm:$0xff]
      %v2124 = vld [vmem:[#allocation9 + $0x1a8] sm:$0xff]
      %v2125 = vld [vmem:[#allocation9 + $0x1b0] sm:$0xff]
      %v2126 = vld [vmem:[#allocation9 + $0x1b8] sm:$0xff]
      %v2127 = vld [vmem:[#allocation9 + $0x1c0] sm:$0xff]
      %v2128 = vld [vmem:[#allocation9 + $0x1c8] sm:$0xff]
      %v2129 = vld [vmem:[#allocation9 + $0x1d0] sm:$0xff]
      %v2130 = vld [vmem:[#allocation9 + $0x1d8] sm:$0xff]
      %v2131 = vld [vmem:[#allocation9 + $0x1e0] sm:$0xff]
      %v2132 = vld [vmem:[#allocation9 + $0x1e8] sm:$0xff]
      %v2133 = vld [vmem:[#allocation9 + $0x1f0] sm:$0xff]
      %v2134 = vld [vmem:[#allocation9 + $0x1f8] sm:$0xff]
      %v2135 = vld [vmem:[%s4] sm:$0x3]
      %v2137 = vlaneseq
      %v2138 = vshrl.u32 %v2137, 7
      %v2139 = vsub.s32 0, %v2138
      %v2140 = vrot.slane %v2135, %v2139
      %v2141 = vlaneseq
      %v2142 = vshrl.u32 %v2141, 7
      %v2143 = vsub.s32 1, %v2142
      %v2144 = vrot.slane %v2135, %v2143
      %v2211 = vunpack.c.l.b16 %v2071
      %v2212 = vunpack.c.h.b16 %v2071
      %v2213 = vunpack.c.l.b16 %v2072
      %v2214 = vunpack.c.h.b16 %v2072
      %v2215 = vunpack.c.l.b16 %v2073
      %v2216 = vunpack.c.h.b16 %v2073
      %v2217 = vunpack.c.l.b16 %v2074
      %v2218 = vunpack.c.h.b16 %v2074
      %v2219 = vunpack.c.l.b16 %v2075
      %v2220 = vunpack.c.h.b16 %v2075
      %v2221 = vunpack.c.l.b16 %v2076
      %v2222 = vunpack.c.h.b16 %v2076
      %v2223 = vunpack.c.l.b16 %v2077
      %v2224 = vunpack.c.h.b16 %v2077
      %v2225 = vunpack.c.l.b16 %v2078
      %v2226 = vunpack.c.h.b16 %v2078
      %v2227 = vunpack.c.l.b16 %v2079
      %v2228 = vunpack.c.h.b16 %v2079
      %v2229 = vunpack.c.l.b16 %v2080
      %v2230 = vunpack.c.h.b16 %v2080
      %v2231 = vunpack.c.l.b16 %v2081
      %v2232 = vunpack.c.h.b16 %v2081
      %v2233 = vunpack.c.l.b16 %v2082
      %v2234 = vunpack.c.h.b16 %v2082
      %v2235 = vunpack.c.l.b16 %v2083
      %v2236 = vunpack.c.h.b16 %v2083
      %v2237 = vunpack.c.l.b16 %v2084
      %v2238 = vunpack.c.h.b16 %v2084
      %v2239 = vunpack.c.l.b16 %v2085
      %v2240 = vunpack.c.h.b16 %v2085
      %v2241 = vunpack.c.l.b16 %v2086
      %v2242 = vunpack.c.h.b16 %v2086
      %v2243 = vunpack.c.l.b16 %v2087
      %v2244 = vunpack.c.h.b16 %v2087
      %v2245 = vunpack.c.l.b16 %v2088
      %v2246 = vunpack.c.h.b16 %v2088
      %v2247 = vunpack.c.l.b16 %v2089
      %v2248 = vunpack.c.h.b16 %v2089
      %v2249 = vunpack.c.l.b16 %v2090
      %v2250 = vunpack.c.h.b16 %v2090
      %v2251 = vunpack.c.l.b16 %v2091
      %v2252 = vunpack.c.h.b16 %v2091
      %v2253 = vunpack.c.l.b16 %v2092
      %v2254 = vunpack.c.h.b16 %v2092
      %v2255 = vunpack.c.l.b16 %v2093
      %v2256 = vunpack.c.h.b16 %v2093
      %v2257 = vunpack.c.l.b16 %v2094
      %v2258 = vunpack.c.h.b16 %v2094
      %v2259 = vunpack.c.l.b16 %v2095
      %v2260 = vunpack.c.h.b16 %v2095
      %v2261 = vunpack.c.l.b16 %v2096
      %v2262 = vunpack.c.h.b16 %v2096
      %v2263 = vunpack.c.l.b16 %v2097
      %v2264 = vunpack.c.h.b16 %v2097
      %v2265 = vunpack.c.l.b16 %v2098
      %v2266 = vunpack.c.h.b16 %v2098
      %v2267 = vunpack.c.l.b16 %v2099
      %v2268 = vunpack.c.h.b16 %v2099
      %v2269 = vunpack.c.l.b16 %v2100
      %v2270 = vunpack.c.h.b16 %v2100
      %v2271 = vunpack.c.l.b16 %v2101
      %v2272 = vunpack.c.h.b16 %v2101
      %v2273 = vunpack.c.l.b16 %v2102
      %v2274 = vunpack.c.h.b16 %v2102
      %v2275 = vunpack.c.l.b16 %v2103
      %v2276 = vunpack.c.h.b16 %v2103
      %v2277 = vunpack.c.l.b16 %v2104
      %v2278 = vunpack.c.h.b16 %v2104
      %v2279 = vunpack.c.l.b16 %v2105
      %v2280 = vunpack.c.h.b16 %v2105
      %v2281 = vunpack.c.l.b16 %v2106
      %v2282 = vunpack.c.h.b16 %v2106
      %v2283 = vunpack.c.l.b16 %v2107
      %v2284 = vunpack.c.h.b16 %v2107
      %v2285 = vunpack.c.l.b16 %v2108
      %v2286 = vunpack.c.h.b16 %v2108
      %v2287 = vunpack.c.l.b16 %v2109
      %v2288 = vunpack.c.h.b16 %v2109
      %v2289 = vunpack.c.l.b16 %v2110
      %v2290 = vunpack.c.h.b16 %v2110
      %v2291 = vunpack.c.l.b16 %v2111
      %v2292 = vunpack.c.h.b16 %v2111
      %v2293 = vunpack.c.l.b16 %v2112
      %v2294 = vunpack.c.h.b16 %v2112
      %v2295 = vunpack.c.l.b16 %v2113
      %v2296 = vunpack.c.h.b16 %v2113
      %v2297 = vunpack.c.l.b16 %v2114
      %v2298 = vunpack.c.h.b16 %v2114
      %v2299 = vunpack.c.l.b16 %v2115
      %v2300 = vunpack.c.h.b16 %v2115
      %v2301 = vunpack.c.l.b16 %v2116
      %v2302 = vunpack.c.h.b16 %v2116
      %v2303 = vunpack.c.l.b16 %v2117
      %v2304 = vunpack.c.h.b16 %v2117
      %v2305 = vunpack.c.l.b16 %v2118
      %v2306 = vunpack.c.h.b16 %v2118
      %v2307 = vunpack.c.l.b16 %v2119
      %v2308 = vunpack.c.h.b16 %v2119
      %v2309 = vunpack.c.l.b16 %v2120
      %v2310 = vunpack.c.h.b16 %v2120
      %v2311 = vunpack.c.l.b16 %v2121
      %v2312 = vunpack.c.h.b16 %v2121
      %v2313 = vunpack.c.l.b16 %v2122
      %v2314 = vunpack.c.h.b16 %v2122
      %v2315 = vunpack.c.l.b16 %v2123
      %v2316 = vunpack.c.h.b16 %v2123
      %v2317 = vunpack.c.l.b16 %v2124
      %v2318 = vunpack.c.h.b16 %v2124
      %v2319 = vunpack.c.l.b16 %v2125
      %v2320 = vunpack.c.h.b16 %v2125
      %v2321 = vunpack.c.l.b16 %v2126
      %v2322 = vunpack.c.h.b16 %v2126
      %v2323 = vunpack.c.l.b16 %v2127
      %v2324 = vunpack.c.h.b16 %v2127
      %v2325 = vunpack.c.l.b16 %v2128
      %v2326 = vunpack.c.h.b16 %v2128
      %v2327 = vunpack.c.l.b16 %v2129
      %v2328 = vunpack.c.h.b16 %v2129
      %v2329 = vunpack.c.l.b16 %v2130
      %v2330 = vunpack.c.h.b16 %v2130
      %v2331 = vunpack.c.l.b16 %v2131
      %v2332 = vunpack.c.h.b16 %v2131
      %v2333 = vunpack.c.l.b16 %v2132
      %v2334 = vunpack.c.h.b16 %v2132
      %v2335 = vunpack.c.l.b16 %v2133
      %v2336 = vunpack.c.h.b16 %v2133
      %v2337 = vunpack.c.l.b16 %v2134
      %v2338 = vunpack.c.h.b16 %v2134
      %v2339 = vpack.c.b16 %v2213, %v2211
      %v2340 = vpack.c.b16 %v2214, %v2212
      %v2341 = vpack.c.b16 %v2217, %v2215
      %v2342 = vpack.c.b16 %v2218, %v2216
      %v2343 = vpack.c.b16 %v2221, %v2219
      %v2344 = vpack.c.b16 %v2222, %v2220
      %v2345 = vpack.c.b16 %v2225, %v2223
      %v2346 = vpack.c.b16 %v2226, %v2224
      %v2347 = vpack.c.b16 %v2229, %v2227
      %v2348 = vpack.c.b16 %v2230, %v2228
      %v2349 = vpack.c.b16 %v2233, %v2231
      %v2350 = vpack.c.b16 %v2234, %v2232
      %v2351 = vpack.c.b16 %v2237, %v2235
      %v2352 = vpack.c.b16 %v2238, %v2236
      %v2353 = vpack.c.b16 %v2241, %v2239
      %v2354 = vpack.c.b16 %v2242, %v2240
      %v2355 = vpack.c.b16 %v2245, %v2243
      %v2356 = vpack.c.b16 %v2246, %v2244
      %v2357 = vpack.c.b16 %v2249, %v2247
      %v2358 = vpack.c.b16 %v2250, %v2248
      %v2359 = vpack.c.b16 %v2253, %v2251
      %v2360 = vpack.c.b16 %v2254, %v2252
      %v2361 = vpack.c.b16 %v2257, %v2255
      %v2362 = vpack.c.b16 %v2258, %v2256
      %v2363 = vpack.c.b16 %v2261, %v2259
      %v2364 = vpack.c.b16 %v2262, %v2260
      %v2365 = vpack.c.b16 %v2265, %v2263
      %v2366 = vpack.c.b16 %v2266, %v2264
      %v2367 = vpack.c.b16 %v2269, %v2267
      %v2368 = vpack.c.b16 %v2270, %v2268
      %v2369 = vpack.c.b16 %v2273, %v2271
      %v2370 = vpack.c.b16 %v2274, %v2272
      %v2371 = vpack.c.b16 %v2277, %v2275
      %v2372 = vpack.c.b16 %v2278, %v2276
      %v2373 = vpack.c.b16 %v2281, %v2279
      %v2374 = vpack.c.b16 %v2282, %v2280
      %v2375 = vpack.c.b16 %v2285, %v2283
      %v2376 = vpack.c.b16 %v2286, %v2284
      %v2377 = vpack.c.b16 %v2289, %v2287
      %v2378 = vpack.c.b16 %v2290, %v2288
      %v2379 = vpack.c.b16 %v2293, %v2291
      %v2380 = vpack.c.b16 %v2294, %v2292
      %v2381 = vpack.c.b16 %v2297, %v2295
      %v2382 = vpack.c.b16 %v2298, %v2296
      %v2383 = vpack.c.b16 %v2301, %v2299
      %v2384 = vpack.c.b16 %v2302, %v2300
      %v2385 = vpack.c.b16 %v2305, %v2303
      %v2386 = vpack.c.b16 %v2306, %v2304
      %v2387 = vpack.c.b16 %v2309, %v2307
      %v2388 = vpack.c.b16 %v2310, %v2308
      %v2389 = vpack.c.b16 %v2313, %v2311
      %v2390 = vpack.c.b16 %v2314, %v2312
      %v2391 = vpack.c.b16 %v2317, %v2315
      %v2392 = vpack.c.b16 %v2318, %v2316
      %v2393 = vpack.c.b16 %v2321, %v2319
      %v2394 = vpack.c.b16 %v2322, %v2320
      %v2395 = vpack.c.b16 %v2325, %v2323
      %v2396 = vpack.c.b16 %v2326, %v2324
      %v2397 = vpack.c.b16 %v2329, %v2327
      %v2398 = vpack.c.b16 %v2330, %v2328
      %v2399 = vpack.c.b16 %v2333, %v2331
      %v2400 = vpack.c.b16 %v2334, %v2332
      %v2401 = vpack.c.b16 %v2337, %v2335
      %v2402 = vpack.c.b16 %v2338, %v2336
      %2467 = vmatprep.subr.bf16.mxu0 %v2354
      %2468 = vmatpush1.bf16.msra.mxu0 %v2353
      %2469 = vmatprep.subr.bf16.mxu0 %v2352
      %2470 = vmatpush1.bf16.msra.mxu0 %v2351
      %2471 = vmatprep.subr.bf16.mxu0 %v2350
      %2472 = vmatpush1.bf16.msra.mxu0 %v2349
      %2473 = vmatprep.subr.bf16.mxu0 %v2348
      %2474 = vmatpush1.bf16.msra.mxu0 %v2347
      %2475 = vmatprep.subr.bf16.mxu0 %v2346
      %2476 = vmatpush1.bf16.msra.mxu0 %v2345
      %2477 = vmatprep.subr.bf16.mxu0 %v2344
      %2478 = vmatpush1.bf16.msra.mxu0 %v2343
      %2479 = vmatprep.subr.bf16.mxu0 %v2342
      %2480 = vmatpush1.bf16.msra.mxu0 %v2341
      %2481 = vmatprep.subr.bf16.mxu0 %v2340
      %2482 = vmatpush1.bf16.msra.mxu0 %v2339
      %2483 = vmatprep.subr.bf16.mxu0 %v2370
      %2484 = vmatpush2.bf16.msra.mxu0 %v2369
      %2485 = vmatprep.subr.bf16.mxu0 %v2368
      %2486 = vmatpush2.bf16.msra.mxu0 %v2367
      %2487 = vmatprep.subr.bf16.mxu0 %v2366
      %2488 = vmatpush2.bf16.msra.mxu0 %v2365
      %2489 = vmatprep.subr.bf16.mxu0 %v2364
      %2490 = vmatpush2.bf16.msra.mxu0 %v2363
      %2491 = vmatprep.subr.bf16.mxu0 %v2362
      %2492 = vmatpush2.bf16.msra.mxu0 %v2361
      %2493 = vmatprep.subr.bf16.mxu0 %v2360
      %2494 = vmatpush2.bf16.msra.mxu0 %v2359
      %2495 = vmatprep.subr.bf16.mxu0 %v2358
      %2496 = vmatpush2.bf16.msra.mxu0 %v2357
      %2497 = vmatprep.subr.bf16.mxu0 %v2356
      %2498 = vmatpush2.bf16.msra.mxu0 %v2355
      %2499 = vmatprep.mubr.bf16.mxu0 %v2068
      %2500 = vmatmul.mubr.bf16.gmra.mxu0 %v2067
      %v2501 = vpop.f32.mrf.mxu0
      %v2502 = vadd.f32 %v2140, %v2501
      %v2503 = vpop.f32.mrf.mxu0
      %v2504 = vadd.f32 %v2144, %v2503
      %v2505 = vpop.f32.mrf.mxu0
      %v2506 = vadd.f32 %v2140, %v2505
      %v2507 = vpop.f32.mrf.mxu0
      %v2508 = vadd.f32 %v2144, %v2507
      %2509 = vdwg.mxu0
      %2510 = vmatprep.subr.bf16.mxu0 %v2386
      %2511 = vmatpush1.bf16.msra.mxu0 %v2385
      %2512 = vmatprep.subr.bf16.mxu0 %v2384
      %2513 = vmatpush1.bf16.msra.mxu0 %v2383
      %2514 = vmatprep.subr.bf16.mxu0 %v2382
      %2515 = vmatpush1.bf16.msra.mxu0 %v2381
      %2516 = vmatprep.subr.bf16.mxu0 %v2380
      %2517 = vmatpush1.bf16.msra.mxu0 %v2379
      %2518 = vmatprep.subr.bf16.mxu0 %v2378
      %2519 = vmatpush1.bf16.msra.mxu0 %v2377
      %2520 = vmatprep.subr.bf16.mxu0 %v2376
      %2521 = vmatpush1.bf16.msra.mxu0 %v2375
      %2522 = vmatprep.subr.bf16.mxu0 %v2374
      %2523 = vmatpush1.bf16.msra.mxu0 %v2373
      %2524 = vmatprep.subr.bf16.mxu0 %v2372
      %2525 = vmatpush1.bf16.msra.mxu0 %v2371
      %2526 = vmatprep.subr.bf16.mxu0 %v2402
      %2527 = vmatpush2.bf16.msra.mxu0 %v2401
      %2528 = vmatprep.subr.bf16.mxu0 %v2400
      %2529 = vmatpush2.bf16.msra.mxu0 %v2399
      %2530 = vmatprep.subr.bf16.mxu0 %v2398
      %2531 = vmatpush2.bf16.msra.mxu0 %v2397
      %2532 = vmatprep.subr.bf16.mxu0 %v2396
      %2533 = vmatpush2.bf16.msra.mxu0 %v2395
      %2534 = vmatprep.subr.bf16.mxu0 %v2394
      %2535 = vmatpush2.bf16.msra.mxu0 %v2393
      %2536 = vmatprep.subr.bf16.mxu0 %v2392
      %2537 = vmatpush2.bf16.msra.mxu0 %v2391
      %2538 = vmatprep.subr.bf16.mxu0 %v2390
      %2539 = vmatpush2.bf16.msra.mxu0 %v2389
      %2540 = vmatprep.subr.bf16.mxu0 %v2388
      %2541 = vmatpush2.bf16.msra.mxu0 %v2387
      %2542 = vmatprep.mubr.bf16.mxu0 %v2070
      %2543 = vmatmul.mubr.bf16.gmra.mxu0 %v2069
      %v2544 = vpop.f32.mrf.mxu0
      %v2545 = vadd.f32 %v2502, %v2544
      %v2546 = vpop.f32.mrf.mxu0
      %v2547 = vadd.f32 %v2504, %v2546
      %v2548 = vpop.f32.mrf.mxu0
      %v2549 = vadd.f32 %v2506, %v2548
      %v2550 = vpop.f32.mrf.mxu0
      %v2551 = vadd.f32 %v2508, %v2550
      %2552 = vdwg.mxu0
      %v2553 = vmul.f32 %v2545, 0.2
      %v2554 = vmul.f32 %v2547, 0.2
      %v2555 = vmul.f32 %v2549, 0.2
      %v2556 = vmul.f32 %v2551, 0.2
      %v2557 = vmax.f32 %v2545, %v2553
      %v2558 = vmax.f32 %v2547, %v2554
      %v2559 = vmax.f32 %v2549, %v2555
      %v2560 = vmax.f32 %v2551, %v2556
      %v2561 = vld [vmem:[%s5] sm:$0x3]
      %v2562 = vld [vmem:[#allocation3] sm:$0x1]
      %2564 = vset.pattern.permute.xlu0 0
      %2565 = vperm.xlu0 %2564, %v2562
      %v2566 = vpop.permute.xlu0 %2565
      %v2568 = vlaneseq
      %v2569 = vshrl.u32 %v2568, 7
      %v2570 = vsub.s32 0, %v2569
      %v2571 = vrot.slane %v2566, %v2570
      %v2573 = vlaneseq
      %v2574 = vshrl.u32 %v2573, 7
      %v2575 = vsub.s32 0, %v2574
      %v2576 = vrot.slane %v2561, %v2575
      %v2577 = vlaneseq
      %v2578 = vshrl.u32 %v2577, 7
      %v2579 = vsub.s32 1, %v2578
      %v2580 = vrot.slane %v2561, %v2579
      %2583 = vmatprep.subr.mxu0 0.0
      %2584 = vmatpush1.xpose.msra.mxu0 0.0
      %2585 = vmatprep.subr.mxu0 0.0
      %2586 = vmatpush1.xpose.msra.mxu0 0.0
      %2587 = vmatprep.subr.mxu0 0.0
      %2588 = vmatpush1.xpose.msra.mxu0 0.0
      %2589 = vmatprep.subr.mxu0 0.0
      %2590 = vmatpush1.xpose.msra.mxu0 0.0
      %2591 = vmatprep.subr.mxu0 0.0
      %2592 = vmatpush1.xpose.msra.mxu0 0.0
      %2593 = vmatprep.subr.mxu0 0.0
      %2594 = vmatpush1.xpose.msra.mxu0 0.0
      %2595 = vmatprep.subr.mxu0 0.0
      %2596 = vmatpush1.xpose.msra.mxu0 0.0
      %2597 = vmatprep.subr.mxu0 0.0
      %2598 = vmatpush1.xpose.msra.mxu0 0.0
      %2599 = vmatprep.subr.mxu0 0.0
      %2600 = vmatpush1.xpose.msra.mxu0 0.0
      %2601 = vmatprep.subr.mxu0 0.0
      %2602 = vmatpush1.xpose.msra.mxu0 0.0
      %2603 = vmatprep.subr.mxu0 0.0
      %2604 = vmatpush1.xpose.msra.mxu0 0.0
      %2605 = vmatprep.subr.mxu0 0.0
      %2606 = vmatpush1.xpose.msra.mxu0 0.0
      %2607 = vmatprep.subr.mxu0 0.0
      %2608 = vmatpush1.xpose.msra.mxu0 0.0
      %2609 = vmatprep.subr.mxu0 0.0
      %2610 = vmatpush1.xpose.msra.mxu0 0.0
      %2611 = vmatprep.subr.mxu0 %v2560
      %2612 = vmatpush1.xpose.msra.mxu0 %v2559
      %2613 = vmatprep.subr.mxu0 %v2558
      %2614 = vmatpush1.xpose.msra.mxu0 %v2557
      %2615 = vmatprep.subr.mxu0 0.0
      %2616 = vmatpush2.xpose.msra.mxu0 0.0
      %2617 = vmatprep.subr.mxu0 0.0
      %2618 = vmatpush2.xpose.msra.mxu0 0.0
      %2619 = vmatprep.subr.mxu0 0.0
      %2620 = vmatpush2.xpose.msra.mxu0 0.0
      %2621 = vmatprep.subr.mxu0 0.0
      %2622 = vmatpush2.xpose.msra.mxu0 0.0
      %2623 = vmatprep.subr.mxu0 0.0
      %2624 = vmatpush2.xpose.msra.mxu0 0.0
      %2625 = vmatprep.subr.mxu0 0.0
      %2626 = vmatpush2.xpose.msra.mxu0 0.0
      %2627 = vmatprep.subr.mxu0 0.0
      %2628 = vmatpush2.xpose.msra.mxu0 0.0
      %2629 = vmatprep.subr.mxu0 0.0
      %2630 = vmatpush2.xpose.msra.mxu0 0.0
      %2631 = vmatprep.subr.mxu0 0.0
      %2632 = vmatpush2.xpose.msra.mxu0 0.0
      %2633 = vmatprep.subr.mxu0 0.0
      %2634 = vmatpush2.xpose.msra.mxu0 0.0
      %2635 = vmatprep.subr.mxu0 0.0
      %2636 = vmatpush2.xpose.msra.mxu0 0.0
      %2637 = vmatprep.subr.mxu0 0.0
      %2638 = vmatpush2.xpose.msra.mxu0 0.0
      %2639 = vmatprep.subr.mxu0 0.0
      %2640 = vmatpush2.xpose.msra.mxu0 0.0
      %2641 = vmatprep.subr.mxu0 0.0
      %2642 = vmatpush2.xpose.msra.mxu0 0.0
      %2643 = vmatprep.subr.mxu0 0.0
      %2644 = vmatpush2.xpose.msra.mxu0 0.0
      %2645 = vmatprep.subr.mxu0 0.0
      %2646 = vmatpush2.xpose.msra.mxu0 0.0
      %2647 = vmatprep.mubr.f32.mxu0 %v2580
      %2648 = vmatmul.mubr.f32.gmra.mxu0 %v2576
      %v2649 = vpop.f32.mrf.mxu0
      %v2650 = vadd.f32 %v2571, %v2649
      %v2651 = vpop.f32.mrf.mxu0
      %2652 = vdwg.mxu0
      %v2653 = vxor.u32 %v2650, 2147483648
      %v2654 = vmul.f32 %v2653, 1.442695
      %v2655 = vpow.pop %v2654
      %v2656 = vadd.f32 %v2655, 1.0
      %v2657 = vrcp.pop %v2656
      %v2658 = vmul.f32 1.0, %v2657
      %vm2659 = vcmask 122880
      %2660 = vst.msk [vmem:[#allocation10] sm:$0x1] %vm2659, %v2658
    $region49: #{tpu_custom_call.1} parent=1 // pred_fallthru
      _
    // Predicated region
    $region50: #{tpu_custom_call.1} parent=1 // pred_check
      _
    $region51: #{tpu_custom_call.1} parent=1 // pred_check_branch
      %2662 = sbr.rel (0) target = $region53
    $region52: #{tpu_custom_call.1} parent=1 // pred_region
      %s2664 = ssub.s32 16, 16
      %2665 = vsyncadd [#allocation6], %s2664
      %s2667 = sshll.u32 [#allocation10], 4
      %s2668 = int_to_ptr.vmem [resolvable:$true] %s2667
      %2670 = dma.vmem_to_hbm [thread:$0]  %s2668, 16, %s7, [#allocation6]
    $region53: #{tpu_custom_call.1} parent=1 // pred_fallthru
      _
    // Predicated region
    $region54: #{tpu_custom_call.1} parent=1 // pred_check
      _
    $region55: #{tpu_custom_call.1} parent=1 // pred_check_branch
      %2672 = sbr.rel (0) target = $region57
    $region56: #{tpu_custom_call.1} parent=1 // pred_region
      %2673 = dma.done [#allocation6], 16
    $region57: #{tpu_custom_call.1} parent=1 // pred_fallthru
      _
    %2674 = vsyncpa [#allocation5], 1
    %2675 = vsyncpa [#allocation8], 1
    %2676 = vsyncpa [#allocation6], 1

</llo_original>
